<compile_context>
chip_gen: v5e
topology: v5e:2x2
jax: 0.10.0
libtpu: 0.0.40
codegen_flags: <defaults>
</compile_context>

<pallas_src>
import functools

import jax
import jax.numpy as jnp
from jax.experimental import pallas as pl
from jax.experimental.pallas import tpu as pltpu


# ---------------------------------------------------------------------------
# Kernel
# ---------------------------------------------------------------------------
def _zero_halo(xp_ref):
    """Zero only the 1-pixel halo of a padded activation buffer.

    The interior is fully overwritten every grid step, so only the border must
    be cleared.  It is cleared every step (not just at program_id == 0) so the
    kernel is correct when the batch grid axis is sharded across TensorCores
    (megacore "parallel"): a core may never execute grid index 0.  The halo is
    ~2*(h+w)*C elements per image -- negligible vs. the old full-buffer zeros.
    """
    nb, hp, wp, c = xp_ref.shape
    row = jnp.zeros((nb, 1, wp, c), dtype=xp_ref.dtype)
    col = jnp.zeros((nb, hp, 1, c), dtype=xp_ref.dtype)
    xp_ref[:, 0:1, :, :] = row
    xp_ref[:, hp - 1:hp, :, :] = row
    xp_ref[:, :, 0:1, :] = col
    xp_ref[:, :, wp - 1:wp, :] = col


def _pool2x2(y, nb, h, w, c):
    """2x2 max-pool: H-pool first (untiled dim -> cheap vreg max), then the
    sublane-pair W-pool on the already halved tensor."""
    y = y.reshape(nb, h // 2, 2, w, c).max(axis=2)
    y = y.reshape(nb, h // 2, w // 2, 2, c).max(axis=3)
    return y                                             # (nb, h//2, w//2, c)


def _conv_block(xp_ref, w_ref, b_ref):
    """conv3x3 (padding via zero halo) + [Dropout=id] + folded-BN bias + ReLU
    + MaxPool2d(2).

    No im2col materialization: nine accumulated per-tap dots read the shifted
    windows directly (bf16 MXU operands, f32 accumulation / f32 epilogue,
    which is v5e-safe)."""
    nb, hp, wp, cin = xp_ref.shape
    h, w = hp - 2, wp - 2
    cout = w_ref.shape[2]
    acc = None
    for dy in range(3):
        for dx in range(3):
            window = xp_ref[:, dy:dy + h, dx:dx + w, :].reshape(nb * h * w, cin)
            part = jnp.dot(window.astype(jnp.bfloat16), w_ref[dy * 3 + dx],
                           preferred_element_type=jnp.float32)
            acc = part if acc is None else acc + part
    y = jnp.maximum(acc + b_ref[...], 0.0)               # f32 epilogue
    return _pool2x2(y.reshape(nb, h, w, cout), nb, h, w, cout)


def _convnet_kernel(col1_ref, w1_ref, b1_ref, w2_ref, b2_ref, w3_ref, b3_ref,
                    w4_ref, b4_ref, o_ref, xp2, xp3, xp4):
    """Whole 4-block encoder for one batch chunk; activations stay in VMEM.

    col1_ref : (NB, H*W, K1)  bf16  pre-built block-1 im2col patches (K1=32)
    w1_ref   : (K1, C1)       bf16  block-1 weight (BN scale folded, K padded)
    wK_ref   : (9, Cin, Cout) bf16  tap-indexed weights (BN scale folded)
    bK_ref   : (1, Cout)      f32   folded conv-bias + BN shift
    o_ref    : (NB, H/16, W/16, C4)
    xpK      : (NB, h+2, w+2, C)    halo-padded activation scratch (f32)
    """
    nb, hw, k1 = col1_ref.shape
    c1 = w1_ref.shape[1]
    h2i, w2i = xp2.shape[1] - 2, xp2.shape[2] - 2        # H/2, W/2
    h0, w0 = 2 * h2i, 2 * w2i                            # H,   W

    # ---- block 1: single (NB*H*W, 32) x (32, C1) MXU matmul ---------------
    acc = jnp.dot(col1_ref[...].reshape(nb * hw, k1), w1_ref[...],
                  preferred_element_type=jnp.float32)
    y = jnp.maximum(acc + b1_ref[...], 0.0)
    y = _pool2x2(y.reshape(nb, h0, w0, c1), nb, h0, w0, c1)
    _zero_halo(xp2)
    xp2[:, 1:h2i + 1, 1:w2i + 1, :] = y.astype(xp2.dtype)

    # ---- blocks 2-4: nine accumulated tap-dots each ------------------------
    y = _conv_block(xp2, w2_ref, b2_ref)                 # (nb, H/4,  W/4,  C2)
    h3i, w3i = xp3.shape[1] - 2, xp3.shape[2] - 2
    _zero_halo(xp3)
    xp3[:, 1:h3i + 1, 1:w3i + 1, :] = y.astype(xp3.dtype)

    y = _conv_block(xp3, w3_ref, b3_ref)                 # (nb, H/8,  W/8,  C3)
    h4i, w4i = xp4.shape[1] - 2, xp4.shape[2] - 2
    _zero_halo(xp4)
    xp4[:, 1:h4i + 1, 1:w4i + 1, :] = y.astype(xp4.dtype)

    y = _conv_block(xp4, w4_ref, b4_ref)                 # (nb, H/16, W/16, C4)
    o_ref[...] = y.astype(o_ref.dtype)


# ---------------------------------------------------------------------------
# Parameter folding (done once at model-load time)
# ---------------------------------------------------------------------------
def fold_convnet_params(params):
    """Fold conv bias + BatchNorm running stats (eps=1e-5) into bf16 conv
    weights and f32 biases, in the layouts the kernel consumes."""
    eps = 1e-5
    folded = []
    for (w, conv_b, gamma, beta, run_mean, run_var) in params:
        scale = gamma / jnp.sqrt(run_var + eps)                      # (Cout,)
        w_f = (w * scale).astype(jnp.bfloat16)                       # (3,3,Cin,Cout)
        bias = ((conv_b - run_mean) * scale + beta).reshape(1, -1).astype(jnp.float32)
        folded.append((w_f, bias))
    (w1, b1), (w2, b2), (w3, b3), (w4, b4) = folded

    # Block 1: im2col weight (9*Cin, Cout), K padded to a multiple of 8.
    k1 = 9 * w1.shape[2]
    k1p = -(-k1 // 8) * 8
    w1m = jnp.pad(w1.reshape(k1, w1.shape[3]), ((0, k1p - k1), (0, 0)))

    # Blocks 2-4: tap-indexed (9, Cin, Cout) for the 9 per-tap dots.
    def taps(w):
        return w.reshape(9, w.shape[2], w.shape[3])

    return (w1m, b1, taps(w2), b2, taps(w3), b3, taps(w4), b4)


# ---------------------------------------------------------------------------
# NB / VMEM sizing (per generation)
# ---------------------------------------------------------------------------
_LANE = 128


def _rup(x, m):
    return -(-x // m) * m


def _per_image_vmem_bytes(H, W, chid):
    """Rough per-image VMEM footprint (lane/sublane padded) used to size NB."""
    b = 0
    b += (H * W) * _rup(32, _LANE) * 2 * 2               # block-1 patches (bf16, dbl-buf)
    b += int(2.5 * (H * W) * _rup(chid, _LANE) * 4)      # block-1 f32 temporaries
    for k in (2, 4, 8):                                  # xp2..4 + ~1x block temporaries
        b += 2 * (H // k + 2) * _rup(W // k + 2, 8) * _rup(chid, _LANE) * 4
    b += (H // 16) * _rup(W // 16, 8) * _rup(chid, _LANE) * 4 * 2   # out block (dbl-buf)
    return b


def _pick_batch_block(N, H, W, chid, requested):
    """Derive NB + vmem_limit from the generation's VMEM capacity (v5e/v6e:
    128 MiB, v7x: 64 MiB per TensorCore) so block-4's matmul M stays large
    while the working set fits comfortably."""
    try:
        vmem_cap = int(pltpu.get_tpu_info().vmem_capacity_bytes)
    except Exception:
        vmem_cap = 64 * 1024 * 1024                      # conservative (v7x per-TC)
    per_image = _per_image_vmem_bytes(H, W, chid)
    fixed = 2 * 1024 * 1024                              # folded weights + slack
    if requested is None:
        budget = max(per_image, int(0.40 * vmem_cap) - fixed)
        nb = max(1, min(N, budget // per_image, 128))
        while N % nb:                                    # largest divisor of N <= cap
            nb -= 1
    else:
        nb = int(requested)
        if N % nb:
            raise ValueError("batch_block must divide the batch size")
    vmem_limit = min(int(0.70 * vmem_cap), 110 * 1024 * 1024)
    vmem_limit = max(vmem_limit, fixed + nb * per_image)
    return nb, int(vmem_limit)


# ---------------------------------------------------------------------------
# Forward wrapper (jitted)
# ---------------------------------------------------------------------------
@functools.partial(jax.jit, static_argnames=("batch_block",))
def convnet_forward(x_nchw, folded_params, batch_block=None):
    """Convnet.forward (eval mode): encoder + flatten.  x: (N, C, H, W)."""
    w1, b1, w2, b2, w3, b3, w4, b4 = folded_params
    x = jnp.transpose(x_nchw, (0, 2, 3, 1)).astype(jnp.float32)      # NCHW -> NHWC
    N, H, W, C0 = x.shape
    assert H % 16 == 0 and W % 16 == 0, "4 MaxPool2d(2) stages need H, W % 16 == 0"
    K1, C1 = w1.shape
    C2, C3, C4 = w2.shape[2], w3.shape[2], w4.shape[2]
    assert 9 * C0 <= K1, "folded block-1 weight does not match input channels"
    Hf, Wf = H // 16, W // 16

    # Block-1 im2col built here (cheap, jit-fused XLA data movement): a raw
    # 3-channel input lane-pads 3 -> 128 inside the kernel (~42x VMEM blowup);
    # as (N, H*W, 32) bf16 patches block 1 becomes one dense MXU matmul.
    xpad = jnp.pad(x, ((0, 0), (1, 1), (1, 1), (0, 0)))
    pat = jnp.concatenate(
        [xpad[:, dy:dy + H, dx:dx + W, :] for dy in range(3) for dx in range(3)],
        axis=-1)                                                     # (N, H, W, 9*C0)
    pat = jnp.pad(pat, ((0, 0), (0, 0), (0, 0), (0, K1 - 9 * C0)))
    pat = pat.reshape(N, H * W, K1).astype(jnp.bfloat16)

    NB, vmem_limit = _pick_batch_block(N, H, W, max(C1, C2, C3, C4), batch_block)

    flops = 2 * N * (H * W * K1 * C1
                     + (H // 2) * (W // 2) * 9 * C1 * C2
                     + (H // 4) * (W // 4) * 9 * C2 * C3
                     + (H // 8) * (W // 8) * 9 * C3 * C4)
    bytes_accessed = (pat.size * 2
                      + (w1.size + w2.size + w3.size + w4.size) * 2
                      + (b1.size + b2.size + b3.size + b4.size) * 4
                      + N * Hf * Wf * C4 * 4)

    out = pl.pallas_call(
        _convnet_kernel,
        out_shape=jax.ShapeDtypeStruct((N, Hf, Wf, C4), jnp.float32),
        grid_spec=pltpu.PrefetchScalarGridSpec(
            num_scalar_prefetch=0,
            grid=(N // NB,),
            in_specs=[
                pl.BlockSpec((NB, H * W, K1), lambda n: (n, 0, 0)),
                pl.BlockSpec(w1.shape, lambda n: (0, 0)),
                pl.BlockSpec(b1.shape, lambda n: (0, 0)),
                pl.BlockSpec(w2.shape, lambda n: (0, 0, 0)),
                pl.BlockSpec(b2.shape, lambda n: (0, 0)),
                pl.BlockSpec(w3.shape, lambda n: (0, 0, 0)),
                pl.BlockSpec(b3.shape, lambda n: (0, 0)),
                pl.BlockSpec(w4.shape, lambda n: (0, 0, 0)),
                pl.BlockSpec(b4.shape, lambda n: (0, 0)),
            ],
            out_specs=pl.BlockSpec((NB, Hf, Wf, C4), lambda n: (n, 0, 0, 0)),
            scratch_shapes=[
                pltpu.VMEM((NB, H // 2 + 2, W // 2 + 2, C1), jnp.float32),
                pltpu.VMEM((NB, H // 4 + 2, W // 4 + 2, C2), jnp.float32),
                pltpu.VMEM((NB, H // 8 + 2, W // 8 + 2, C3), jnp.float32),
            ],
        ),
        compiler_params=pltpu.CompilerParams(
            dimension_semantics=("parallel",),
            vmem_limit_bytes=vmem_limit,
        ),
        cost_estimate=pl.CostEstimate(flops=flops, transcendentals=0,
                                      bytes_accessed=bytes_accessed),
    )(pat, w1, b1, w2, b2, w3, b3, w4, b4)

    if Hf == 1 and Wf == 1:
        # 1x1 spatial: NHWC flatten == torch's NCHW x.view(N, -1).
        return out.reshape(N, C4)
    # General spatial size: keep torch's channel-major flatten ordering.
    return jnp.transpose(out, (0, 3, 1, 2)).reshape(N, -1)


# ---------------------------------------------------------------------------
# Parameter init (mirrors the PyTorch module's shapes/init) and XLA reference
# ---------------------------------------------------------------------------
def init_convnet_params(key, x_dim=3, hid_dim=64, z_dim=64):
    dims = [(x_dim, hid_dim), (hid_dim, hid_dim), (hid_dim, hid_dim), (hid_dim, z_dim)]
    params = []
    for (cin, cout) in dims:
        key, kw, kb, kg = jax.random.split(key, 4)
        fan_in = cin * 3 * 3
        bound = 1.0 / jnp.sqrt(fan_in)
        w = jax.random.uniform(kw, (3, 3, cin, cout), jnp.float32, -bound, bound)  # HWIO
        conv_b = jax.random.uniform(kb, (cout,), jnp.float32, -bound, bound)
        gamma = jax.random.uniform(kg, (cout,), jnp.float32, 0.0, 1.0)  # nn.init.uniform_
        beta = jnp.zeros((cout,), jnp.float32)
        run_mean = jnp.zeros((cout,), jnp.float32)
        run_var = jnp.ones((cout,), jnp.float32)
        params.append((w, conv_b, gamma, beta, run_mean, run_var))
    return params


def _convnet_reference(x_nchw, params):
    """Pure-JAX (XLA) reference of the eval-mode forward, for tolerance check."""
    x = jnp.transpose(x_nchw, (0, 2, 3, 1)).astype(jnp.float32)
    eps = 1e-5
    for (w, conv_b, gamma, beta, run_mean, run_var) in params:
        y = jax.lax.conv_general_dilated(
            x, w, window_strides=(1, 1), padding="SAME",
            dimension_numbers=("NHWC", "HWIO", "NHWC"))
        y = y + conv_b
        scale = gamma / jnp.sqrt(run_var + eps)
        y = (y - run_mean) * scale + beta
        y = jnp.maximum(y, 0.0)
        n, h, ww, c = y.shape
        y = y.reshape(n, h // 2, 2, ww // 2, 2, c).max(axis=(2, 4))
        x = y
    x = jnp.transpose(x, (0, 3, 1, 2))
    return x.reshape(x.shape[0], -1)


if __name__ == "__main__":
    key = jax.random.PRNGKey(0)
    kparams, kx = jax.random.split(key)
    params = init_convnet_params(kparams, x_dim=3, hid_dim=64, z_dim=64)

    # Small deterministic input (NCHW, like PyTorch): batch=2, channels=3, 16x16.
    x = jax.random.normal(kx, (2, 3, 16, 16), dtype=jnp.float32)

    folded = fold_convnet_params(params)       # fold/cast once at model-load time
    out = convnet_forward(x, folded)
    out = jax.block_until_ready(out)
    assert out.shape == (2, 64), out.shape     # 4 maxpools: 16 -> 1 spatial, 64 channels

    # Loose-tolerance correctness check vs. XLA reference (bf16 MXU operands).
    ref = jax.block_until_ready(_convnet_reference(x, params))
    max_err = float(jnp.max(jnp.abs(out - ref)))
    assert max_err < 1e-1, f"max abs error vs reference: {max_err}"

    print("KERNEL_OK")
</pallas_src>

<mosaic_0001>
module attributes {stable_mosaic.version = 11 : i64} {
  func.func @_convnet_kernel(%arg0: i32, %arg1: memref<2x256x32xbf16, #tpu.memory_space<vmem>>, %arg2: memref<32x64xbf16, #tpu.memory_space<vmem>>, %arg3: memref<1x64xf32, #tpu.memory_space<vmem>>, %arg4: memref<9x64x64xbf16, #tpu.memory_space<vmem>>, %arg5: memref<1x64xf32, #tpu.memory_space<vmem>>, %arg6: memref<9x64x64xbf16, #tpu.memory_space<vmem>>, %arg7: memref<1x64xf32, #tpu.memory_space<vmem>>, %arg8: memref<9x64x64xbf16, #tpu.memory_space<vmem>>, %arg9: memref<1x64xf32, #tpu.memory_space<vmem>>, %arg10: memref<2x1x1x64xf32, #tpu.memory_space<vmem>>, %arg11: memref<2x10x10x64xf32, #tpu.memory_space<vmem>>, %arg12: memref<2x6x6x64xf32, #tpu.memory_space<vmem>>, %arg13: memref<2x4x4x64xf32, #tpu.memory_space<vmem>>) attributes {dimension_semantics = [#tpu.dimension_semantics<parallel>], iteration_bounds = array<i64: 1>, scalar_prefetch = 0 : i64, scratch_operands = 3 : i64, tpu.core_type = #tpu.core_type<tc>, window_params = [{transform_indices = @transform_0, window_bounds = array<i64: 2, 256, 32>}, {pipeline_mode = #tpu.pipeline_mode<synchronous>, transform_indices = @transform_1, window_bounds = array<i64: 32, 64>}, {pipeline_mode = #tpu.pipeline_mode<synchronous>, transform_indices = @transform_2, window_bounds = array<i64: 1, 64>}, {pipeline_mode = #tpu.pipeline_mode<synchronous>, transform_indices = @transform_3, window_bounds = array<i64: 9, 64, 64>}, {pipeline_mode = #tpu.pipeline_mode<synchronous>, transform_indices = @transform_4, window_bounds = array<i64: 1, 64>}, {pipeline_mode = #tpu.pipeline_mode<synchronous>, transform_indices = @transform_5, window_bounds = array<i64: 9, 64, 64>}, {pipeline_mode = #tpu.pipeline_mode<synchronous>, transform_indices = @transform_6, window_bounds = array<i64: 1, 64>}, {pipeline_mode = #tpu.pipeline_mode<synchronous>, transform_indices = @transform_7, window_bounds = array<i64: 9, 64, 64>}, {pipeline_mode = #tpu.pipeline_mode<synchronous>, transform_indices = @transform_8, window_bounds = array<i64: 1, 64>}, {transform_indices = @transform_9, window_bounds = array<i64: 2, 1, 1, 64>}]} {
    %c0 = arith.constant 0 : index
    %c0_0 = arith.constant 0 : index
    %c0_1 = arith.constant 0 : index
    %0 = vector.load %arg1[%c0, %c0_0, %c0_1] : memref<2x256x32xbf16, #tpu.memory_space<vmem>>, vector<2x256x32xbf16>
    %1 = vector.shape_cast %0 : vector<2x256x32xbf16> to vector<512x32xbf16>
    %c0_2 = arith.constant 0 : index
    %c0_3 = arith.constant 0 : index
    %2 = vector.load %arg2[%c0_2, %c0_3] : memref<32x64xbf16, #tpu.memory_space<vmem>>, vector<32x64xbf16>
    %cst = arith.constant dense<0.000000e+00> : vector<512x64xf32>
    %3 = tpu.matmul %1, %2, %cst {dimension_numbers = #tpu.dot_dimension_numbers<[1], [0], [0], [1], [0, 0, 1, 1], [], []>} : vector<512x32xbf16>, vector<32x64xbf16>, vector<512x64xf32> -> vector<512x64xf32>
    %c0_4 = arith.constant 0 : index
    %c0_5 = arith.constant 0 : index
    %4 = vector.load %arg3[%c0_4, %c0_5] : memref<1x64xf32, #tpu.memory_space<vmem>>, vector<1x64xf32>
    %5 = vector.broadcast %4 : vector<1x64xf32> to vector<512x64xf32>
    %6 = arith.addf %3, %5 : vector<512x64xf32>
    %cst_6 = arith.constant 0.000000e+00 : f32
    %7 = vector.broadcast %cst_6 : f32 to vector<512x64xf32>
    %8 = arith.maximumf %6, %7 : vector<512x64xf32>
    %9 = vector.shape_cast %8 : vector<512x64xf32> to vector<2x16x16x64xf32>
    %10 = vector.shape_cast %9 : vector<2x16x16x64xf32> to vector<2x8x2x16x64xf32>
    %cst_7 = arith.constant dense<0xFF800000> : vector<2x8x16x64xf32>
    %11 = vector.multi_reduction <maximumf>, %10, %cst_7 [2] : vector<2x8x2x16x64xf32> to vector<2x8x16x64xf32>
    %12 = vector.shape_cast %11 : vector<2x8x16x64xf32> to vector<2x8x8x2x64xf32>
    %cst_8 = arith.constant dense<0xFF800000> : vector<2x8x8x64xf32>
    %13 = vector.multi_reduction <maximumf>, %12, %cst_8 [3] : vector<2x8x8x2x64xf32> to vector<2x8x8x64xf32>
    %cst_9 = arith.constant 0.000000e+00 : f32
    %14 = vector.broadcast %cst_9 : f32 to vector<2x1x10x64xf32>
    %cst_10 = arith.constant 0.000000e+00 : f32
    %15 = vector.broadcast %cst_10 : f32 to vector<2x10x1x64xf32>
    %c0_11 = arith.constant 0 : index
    %c0_12 = arith.constant 0 : index
    %c0_13 = arith.constant 0 : index
    %c0_14 = arith.constant 0 : index
    %16 = vector.load %arg11[%c0_11, %c0_12, %c0_13, %c0_14] : memref<2x10x10x64xf32, #tpu.memory_space<vmem>>, vector<2x1x10x64xf32>
    tpu.vector_store %arg11[%c0_11, %c0_12, %c0_13, %c0_14], %14 {strides = array<i32>} : memref<2x10x10x64xf32, #tpu.memory_space<vmem>>, vector<2x1x10x64xf32>,
    %c0_15 = arith.constant 0 : index
    %c9 = arith.constant 9 : index
    %c0_16 = arith.constant 0 : index
    %c0_17 = arith.constant 0 : index
    %17 = vector.load %arg11[%c0_15, %c9, %c0_16, %c0_17] : memref<2x10x10x64xf32, #tpu.memory_space<vmem>>, vector<2x1x10x64xf32>
    tpu.vector_store %arg11[%c0_15, %c9, %c0_16, %c0_17], %14 {strides = array<i32>} : memref<2x10x10x64xf32, #tpu.memory_space<vmem>>, vector<2x1x10x64xf32>,
    %c0_18 = arith.constant 0 : index
    %c0_19 = arith.constant 0 : index
    %c0_20 = arith.constant 0 : index
    %c0_21 = arith.constant 0 : index
    %18 = vector.load %arg11[%c0_18, %c0_19, %c0_20, %c0_21] : memref<2x10x10x64xf32, #tpu.memory_space<vmem>>, vector<2x10x1x64xf32>
    tpu.vector_store %arg11[%c0_18, %c0_19, %c0_20, %c0_21], %15 {strides = array<i32>} : memref<2x10x10x64xf32, #tpu.memory_space<vmem>>, vector<2x10x1x64xf32>,
    %c0_22 = arith.constant 0 : index
    %c0_23 = arith.constant 0 : index
    %c9_24 = arith.constant 9 : index
    %c0_25 = arith.constant 0 : index
    %19 = vector.load %arg11[%c0_22, %c0_23, %c9_24, %c0_25] : memref<2x10x10x64xf32, #tpu.memory_space<vmem>>, vector<2x10x1x64xf32>
    tpu.vector_store %arg11[%c0_22, %c0_23, %c9_24, %c0_25], %15 {strides = array<i32>} : memref<2x10x10x64xf32, #tpu.memory_space<vmem>>, vector<2x10x1x64xf32>,
    %c0_26 = arith.constant 0 : index
    %c1 = arith.constant 1 : index
    %c1_27 = arith.constant 1 : index
    %c0_28 = arith.constant 0 : index
    %20 = vector.load %arg11[%c0_26, %c1, %c1_27, %c0_28] : memref<2x10x10x64xf32, #tpu.memory_space<vmem>>, vector<2x8x8x64xf32>
    tpu.vector_store %arg11[%c0_26, %c1, %c1_27, %c0_28], %13 {strides = array<i32>} : memref<2x10x10x64xf32, #tpu.memory_space<vmem>>, vector<2x8x8x64xf32>,
    %c0_29 = arith.constant 0 : index
    %c0_30 = arith.constant 0 : index
    %c0_31 = arith.constant 0 : index
    %c0_32 = arith.constant 0 : index
    %21 = vector.load %arg11[%c0_29, %c0_30, %c0_31, %c0_32] : memref<2x10x10x64xf32, #tpu.memory_space<vmem>>, vector<2x8x8x64xf32>
    %22 = vector.shape_cast %21 : vector<2x8x8x64xf32> to vector<128x64xf32>
    %23 = arith.truncf %22 : vector<128x64xf32> to vector<128x64xbf16>
    %c0_33 = arith.constant 0 : index
    %c0_34 = arith.constant 0 : index
    %c0_35 = arith.constant 0 : index
    %24 = vector.load %arg4[%c0_33, %c0_34, %c0_35] : memref<9x64x64xbf16, #tpu.memory_space<vmem>>, vector<1x64x64xbf16>
    %25 = vector.shape_cast %24 : vector<1x64x64xbf16> to vector<64x64xbf16>
    %cst_36 = arith.constant dense<0.000000e+00> : vector<128x64xf32>
    %26 = tpu.matmul %23, %25, %cst_36 {dimension_numbers = #tpu.dot_dimension_numbers<[1], [0], [0], [1], [0, 0, 1, 1], [], []>} : vector<128x64xbf16>, vector<64x64xbf16>, vector<128x64xf32> -> vector<128x64xf32>
    %c0_37 = arith.constant 0 : index
    %c0_38 = arith.constant 0 : index
    %c1_39 = arith.constant 1 : index
    %c0_40 = arith.constant 0 : index
    %27 = vector.load %arg11[%c0_37, %c0_38, %c1_39, %c0_40] : memref<2x10x10x64xf32, #tpu.memory_space<vmem>>, vector<2x8x8x64xf32>
    %28 = vector.shape_cast %27 : vector<2x8x8x64xf32> to vector<128x64xf32>
    %29 = arith.truncf %28 : vector<128x64xf32> to vector<128x64xbf16>
    %c1_41 = arith.constant 1 : index
    %c0_42 = arith.constant 0 : index
    %c0_43 = arith.constant 0 : index
    %30 = vector.load %arg4[%c1_41, %c0_42, %c0_43] : memref<9x64x64xbf16, #tpu.memory_space<vmem>>, vector<1x64x64xbf16>
    %31 = vector.shape_cast %30 : vector<1x64x64xbf16> to vector<64x64xbf16>
    %cst_44 = arith.constant dense<0.000000e+00> : vector<128x64xf32>
    %32 = tpu.matmul %29, %31, %cst_44 {dimension_numbers = #tpu.dot_dimension_numbers<[1], [0], [0], [1], [0, 0, 1, 1], [], []>} : vector<128x64xbf16>, vector<64x64xbf16>, vector<128x64xf32> -> vector<128x64xf32>
    %33 = arith.addf %26, %32 : vector<128x64xf32>
    %c0_45 = arith.constant 0 : index
    %c0_46 = arith.constant 0 : index
    %c2 = arith.constant 2 : index
    %c0_47 = arith.constant 0 : index
    %34 = vector.load %arg11[%c0_45, %c0_46, %c2, %c0_47] : memref<2x10x10x64xf32, #tpu.memory_space<vmem>>, vector<2x8x8x64xf32>
    %35 = vector.shape_cast %34 : vector<2x8x8x64xf32> to vector<128x64xf32>
    %36 = arith.truncf %35 : vector<128x64xf32> to vector<128x64xbf16>
    %c2_48 = arith.constant 2 : index
    %c0_49 = arith.constant 0 : index
    %c0_50 = arith.constant 0 : index
    %37 = vector.load %arg4[%c2_48, %c0_49, %c0_50] : memref<9x64x64xbf16, #tpu.memory_space<vmem>>, vector<1x64x64xbf16>
    %38 = vector.shape_cast %37 : vector<1x64x64xbf16> to vector<64x64xbf16>
    %cst_51 = arith.constant dense<0.000000e+00> : vector<128x64xf32>
    %39 = tpu.matmul %36, %38, %cst_51 {dimension_numbers = #tpu.dot_dimension_numbers<[1], [0], [0], [1], [0, 0, 1, 1], [], []>} : vector<128x64xbf16>, vector<64x64xbf16>, vector<128x64xf32> -> vector<128x64xf32>
    %40 = arith.addf %33, %39 : vector<128x64xf32>
    %c0_52 = arith.constant 0 : index
    %c1_53 = arith.constant 1 : index
    %c0_54 = arith.constant 0 : index
    %c0_55 = arith.constant 0 : index
    %41 = vector.load %arg11[%c0_52, %c1_53, %c0_54, %c0_55] : memref<2x10x10x64xf32, #tpu.memory_space<vmem>>, vector<2x8x8x64xf32>
    %42 = vector.shape_cast %41 : vector<2x8x8x64xf32> to vector<128x64xf32>
    %43 = arith.truncf %42 : vector<128x64xf32> to vector<128x64xbf16>
    %c3 = arith.constant 3 : index
    %c0_56 = arith.constant 0 : index
    %c0_57 = arith.constant 0 : index
    %44 = vector.load %arg4[%c3, %c0_56, %c0_57] : memref<9x64x64xbf16, #tpu.memory_space<vmem>>, vector<1x64x64xbf16>
    %45 = vector.shape_cast %44 : vector<1x64x64xbf16> to vector<64x64xbf16>
    %cst_58 = arith.constant dense<0.000000e+00> : vector<128x64xf32>
    %46 = tpu.matmul %43, %45, %cst_58 {dimension_numbers = #tpu.dot_dimension_numbers<[1], [0], [0], [1], [0, 0, 1, 1], [], []>} : vector<128x64xbf16>, vector<64x64xbf16>, vector<128x64xf32> -> vector<128x64xf32>
    %47 = arith.addf %40, %46 : vector<128x64xf32>
    %c0_59 = arith.constant 0 : index
    %c1_60 = arith.constant 1 : index
    %c1_61 = arith.constant 1 : index
    %c0_62 = arith.constant 0 : index
    %48 = vector.load %arg11[%c0_59, %c1_60, %c1_61, %c0_62] : memref<2x10x10x64xf32, #tpu.memory_space<vmem>>, vector<2x8x8x64xf32>
    %49 = vector.shape_cast %48 : vector<2x8x8x64xf32> to vector<128x64xf32>
    %50 = arith.truncf %49 : vector<128x64xf32> to vector<128x64xbf16>
    %c4 = arith.constant 4 : index
    %c0_63 = arith.constant 0 : index
    %c0_64 = arith.constant 0 : index
    %51 = vector.load %arg4[%c4, %c0_63, %c0_64] : memref<9x64x64xbf16, #tpu.memory_space<vmem>>, vector<1x64x64xbf16>
    %52 = vector.shape_cast %51 : vector<1x64x64xbf16> to vector<64x64xbf16>
    %cst_65 = arith.constant dense<0.000000e+00> : vector<128x64xf32>
    %53 = tpu.matmul %50, %52, %cst_65 {dimension_numbers = #tpu.dot_dimension_numbers<[1], [0], [0], [1], [0, 0, 1, 1], [], []>} : vector<128x64xbf16>, vector<64x64xbf16>, vector<128x64xf32> -> vector<128x64xf32>
    %54 = arith.addf %47, %53 : vector<128x64xf32>
    %c0_66 = arith.constant 0 : index
    %c1_67 = arith.constant 1 : index
    %c2_68 = arith.constant 2 : index
    %c0_69 = arith.constant 0 : index
    %55 = vector.load %arg11[%c0_66, %c1_67, %c2_68, %c0_69] : memref<2x10x10x64xf32, #tpu.memory_space<vmem>>, vector<2x8x8x64xf32>
    %56 = vector.shape_cast %55 : vector<2x8x8x64xf32> to vector<128x64xf32>
    %57 = arith.truncf %56 : vector<128x64xf32> to vector<128x64xbf16>
    %c5 = arith.constant 5 : index
    %c0_70 = arith.constant 0 : index
    %c0_71 = arith.constant 0 : index
    %58 = vector.load %arg4[%c5, %c0_70, %c0_71] : memref<9x64x64xbf16, #tpu.memory_space<vmem>>, vector<1x64x64xbf16>
    %59 = vector.shape_cast %58 : vector<1x64x64xbf16> to vector<64x64xbf16>
    %cst_72 = arith.constant dense<0.000000e+00> : vector<128x64xf32>
    %60 = tpu.matmul %57, %59, %cst_72 {dimension_numbers = #tpu.dot_dimension_numbers<[1], [0], [0], [1], [0, 0, 1, 1], [], []>} : vector<128x64xbf16>, vector<64x64xbf16>, vector<128x64xf32> -> vector<128x64xf32>
    %61 = arith.addf %54, %60 : vector<128x64xf32>
    %c0_73 = arith.constant 0 : index
    %c2_74 = arith.constant 2 : index
    %c0_75 = arith.constant 0 : index
    %c0_76 = arith.constant 0 : index
    %62 = vector.load %arg11[%c0_73, %c2_74, %c0_75, %c0_76] : memref<2x10x10x64xf32, #tpu.memory_space<vmem>>, vector<2x8x8x64xf32>
    %63 = vector.shape_cast %62 : vector<2x8x8x64xf32> to vector<128x64xf32>
    %64 = arith.truncf %63 : vector<128x64xf32> to vector<128x64xbf16>
    %c6 = arith.constant 6 : index
    %c0_77 = arith.constant 0 : index
    %c0_78 = arith.constant 0 : index
    %65 = vector.load %arg4[%c6, %c0_77, %c0_78] : memref<9x64x64xbf16, #tpu.memory_space<vmem>>, vector<1x64x64xbf16>
    %66 = vector.shape_cast %65 : vector<1x64x64xbf16> to vector<64x64xbf16>
    %cst_79 = arith.constant dense<0.000000e+00> : vector<128x64xf32>
    %67 = tpu.matmul %64, %66, %cst_79 {dimension_numbers = #tpu.dot_dimension_numbers<[1], [0], [0], [1], [0, 0, 1, 1], [], []>} : vector<128x64xbf16>, vector<64x64xbf16>, vector<128x64xf32> -> vector<128x64xf32>
    %68 = arith.addf %61, %67 : vector<128x64xf32>
    %c0_80 = arith.constant 0 : index
    %c2_81 = arith.constant 2 : index
    %c1_82 = arith.constant 1 : index
    %c0_83 = arith.constant 0 : index
    %69 = vector.load %arg11[%c0_80, %c2_81, %c1_82, %c0_83] : memref<2x10x10x64xf32, #tpu.memory_space<vmem>>, vector<2x8x8x64xf32>
    %70 = vector.shape_cast %69 : vector<2x8x8x64xf32> to vector<128x64xf32>
    %71 = arith.truncf %70 : vector<128x64xf32> to vector<128x64xbf16>
    %c7 = arith.constant 7 : index
    %c0_84 = arith.constant 0 : index
    %c0_85 = arith.constant 0 : index
    %72 = vector.load %arg4[%c7, %c0_84, %c0_85] : memref<9x64x64xbf16, #tpu.memory_space<vmem>>, vector<1x64x64xbf16>
    %73 = vector.shape_cast %72 : vector<1x64x64xbf16> to vector<64x64xbf16>
    %cst_86 = arith.constant dense<0.000000e+00> : vector<128x64xf32>
    %74 = tpu.matmul %71, %73, %cst_86 {dimension_numbers = #tpu.dot_dimension_numbers<[1], [0], [0], [1], [0, 0, 1, 1], [], []>} : vector<128x64xbf16>, vector<64x64xbf16>, vector<128x64xf32> -> vector<128x64xf32>
    %75 = arith.addf %68, %74 : vector<128x64xf32>
    %c0_87 = arith.constant 0 : index
    %c2_88 = arith.constant 2 : index
    %c2_89 = arith.constant 2 : index
    %c0_90 = arith.constant 0 : index
    %76 = vector.load %arg11[%c0_87, %c2_88, %c2_89, %c0_90] : memref<2x10x10x64xf32, #tpu.memory_space<vmem>>, vector<2x8x8x64xf32>
    %77 = vector.shape_cast %76 : vector<2x8x8x64xf32> to vector<128x64xf32>
    %78 = arith.truncf %77 : vector<128x64xf32> to vector<128x64xbf16>
    %c8 = arith.constant 8 : index
    %c0_91 = arith.constant 0 : index
    %c0_92 = arith.constant 0 : index
    %79 = vector.load %arg4[%c8, %c0_91, %c0_92] : memref<9x64x64xbf16, #tpu.memory_space<vmem>>, vector<1x64x64xbf16>
    %80 = vector.shape_cast %79 : vector<1x64x64xbf16> to vector<64x64xbf16>
    %cst_93 = arith.constant dense<0.000000e+00> : vector<128x64xf32>
    %81 = tpu.matmul %78, %80, %cst_93 {dimension_numbers = #tpu.dot_dimension_numbers<[1], [0], [0], [1], [0, 0, 1, 1], [], []>} : vector<128x64xbf16>, vector<64x64xbf16>, vector<128x64xf32> -> vector<128x64xf32>
    %82 = arith.addf %75, %81 : vector<128x64xf32>
    %c0_94 = arith.constant 0 : index
    %c0_95 = arith.constant 0 : index
    %83 = vector.load %arg5[%c0_94, %c0_95] : memref<1x64xf32, #tpu.memory_space<vmem>>, vector<1x64xf32>
    %84 = vector.broadcast %83 : vector<1x64xf32> to vector<128x64xf32>
    %85 = arith.addf %82, %84 : vector<128x64xf32>
    %cst_96 = arith.constant 0.000000e+00 : f32
    %86 = vector.broadcast %cst_96 : f32 to vector<128x64xf32>
    %87 = arith.maximumf %85, %86 : vector<128x64xf32>
    %88 = vector.shape_cast %87 : vector<128x64xf32> to vector<2x8x8x64xf32>
    %89 = vector.shape_cast %88 : vector<2x8x8x64xf32> to vector<2x4x2x8x64xf32>
    %cst_97 = arith.constant dense<0xFF800000> : vector<2x4x8x64xf32>
    %90 = vector.multi_reduction <maximumf>, %89, %cst_97 [2] : vector<2x4x2x8x64xf32> to vector<2x4x8x64xf32>
    %91 = vector.shape_cast %90 : vector<2x4x8x64xf32> to vector<2x4x4x2x64xf32>
    %cst_98 = arith.constant dense<0xFF800000> : vector<2x4x4x64xf32>
    %92 = vector.multi_reduction <maximumf>, %91, %cst_98 [3] : vector<2x4x4x2x64xf32> to vector<2x4x4x64xf32>
    %cst_99 = arith.constant 0.000000e+00 : f32
    %93 = vector.broadcast %cst_99 : f32 to vector<2x1x6x64xf32>
    %cst_100 = arith.constant 0.000000e+00 : f32
    %94 = vector.broadcast %cst_100 : f32 to vector<2x6x1x64xf32>
    %c0_101 = arith.constant 0 : index
    %c0_102 = arith.constant 0 : index
    %c0_103 = arith.constant 0 : index
    %c0_104 = arith.constant 0 : index
    %95 = vector.load %arg12[%c0_101, %c0_102, %c0_103, %c0_104] : memref<2x6x6x64xf32, #tpu.memory_space<vmem>>, vector<2x1x6x64xf32>
    tpu.vector_store %arg12[%c0_101, %c0_102, %c0_103, %c0_104], %93 {strides = array<i32>} : memref<2x6x6x64xf32, #tpu.memory_space<vmem>>, vector<2x1x6x64xf32>,
    %c0_105 = arith.constant 0 : index
    %c5_106 = arith.constant 5 : index
    %c0_107 = arith.constant 0 : index
    %c0_108 = arith.constant 0 : index
    %96 = vector.load %arg12[%c0_105, %c5_106, %c0_107, %c0_108] : memref<2x6x6x64xf32, #tpu.memory_space<vmem>>, vector<2x1x6x64xf32>
    tpu.vector_store %arg12[%c0_105, %c5_106, %c0_107, %c0_108], %93 {strides = array<i32>} : memref<2x6x6x64xf32, #tpu.memory_space<vmem>>, vector<2x1x6x64xf32>,
    %c0_109 = arith.constant 0 : index
    %c0_110 = arith.constant 0 : index
    %c0_111 = arith.constant 0 : index
    %c0_112 = arith.constant 0 : index
    %97 = vector.load %arg12[%c0_109, %c0_110, %c0_111, %c0_112] : memref<2x6x6x64xf32, #tpu.memory_space<vmem>>, vector<2x6x1x64xf32>
    tpu.vector_store %arg12[%c0_109, %c0_110, %c0_111, %c0_112], %94 {strides = array<i32>} : memref<2x6x6x64xf32, #tpu.memory_space<vmem>>, vector<2x6x1x64xf32>,
    %c0_113 = arith.constant 0 : index
    %c0_114 = arith.constant 0 : index
    %c5_115 = arith.constant 5 : index
    %c0_116 = arith.constant 0 : index
    %98 = vector.load %arg12[%c0_113, %c0_114, %c5_115, %c0_116] : memref<2x6x6x64xf32, #tpu.memory_space<vmem>>, vector<2x6x1x64xf32>
    tpu.vector_store %arg12[%c0_113, %c0_114, %c5_115, %c0_116], %94 {strides = array<i32>} : memref<2x6x6x64xf32, #tpu.memory_space<vmem>>, vector<2x6x1x64xf32>,
    %c0_117 = arith.constant 0 : index
    %c1_118 = arith.constant 1 : index
    %c1_119 = arith.constant 1 : index
    %c0_120 = arith.constant 0 : index
    %99 = vector.load %arg12[%c0_117, %c1_118, %c1_119, %c0_120] : memref<2x6x6x64xf32, #tpu.memory_space<vmem>>, vector<2x4x4x64xf32>
    tpu.vector_store %arg12[%c0_117, %c1_118, %c1_119, %c0_120], %92 {strides = array<i32>} : memref<2x6x6x64xf32, #tpu.memory_space<vmem>>, vector<2x4x4x64xf32>,
    %c0_121 = arith.constant 0 : index
    %c0_122 = arith.constant 0 : index
    %c0_123 = arith.constant 0 : index
    %c0_124 = arith.constant 0 : index
    %100 = vector.load %arg12[%c0_121, %c0_122, %c0_123, %c0_124] : memref<2x6x6x64xf32, #tpu.memory_space<vmem>>, vector<2x4x4x64xf32>
    %101 = vector.shape_cast %100 : vector<2x4x4x64xf32> to vector<32x64xf32>
    %102 = arith.truncf %101 : vector<32x64xf32> to vector<32x64xbf16>
    %c0_125 = arith.constant 0 : index
    %c0_126 = arith.constant 0 : index
    %c0_127 = arith.constant 0 : index
    %103 = vector.load %arg6[%c0_125, %c0_126, %c0_127] : memref<9x64x64xbf16, #tpu.memory_space<vmem>>, vector<1x64x64xbf16>
    %104 = vector.shape_cast %103 : vector<1x64x64xbf16> to vector<64x64xbf16>
    %cst_128 = arith.constant dense<0.000000e+00> : vector<32x64xf32>
    %105 = tpu.matmul %102, %104, %cst_128 {dimension_numbers = #tpu.dot_dimension_numbers<[1], [0], [0], [1], [0, 0, 1, 1], [], []>} : vector<32x64xbf16>, vector<64x64xbf16>, vector<32x64xf32> -> vector<32x64xf32>
    %c0_129 = arith.constant 0 : index
    %c0_130 = arith.constant 0 : index
    %c1_131 = arith.constant 1 : index
    %c0_132 = arith.constant 0 : index
    %106 = vector.load %arg12[%c0_129, %c0_130, %c1_131, %c0_132] : memref<2x6x6x64xf32, #tpu.memory_space<vmem>>, vector<2x4x4x64xf32>
    %107 = vector.shape_cast %106 : vector<2x4x4x64xf32> to vector<32x64xf32>
    %108 = arith.truncf %107 : vector<32x64xf32> to vector<32x64xbf16>
    %c1_133 = arith.constant 1 : index
    %c0_134 = arith.constant 0 : index
    %c0_135 = arith.constant 0 : index
    %109 = vector.load %arg6[%c1_133, %c0_134, %c0_135] : memref<9x64x64xbf16, #tpu.memory_space<vmem>>, vector<1x64x64xbf16>
    %110 = vector.shape_cast %109 : vector<1x64x64xbf16> to vector<64x64xbf16>
    %cst_136 = arith.constant dense<0.000000e+00> : vector<32x64xf32>
    %111 = tpu.matmul %108, %110, %cst_136 {dimension_numbers = #tpu.dot_dimension_numbers<[1], [0], [0], [1], [0, 0, 1, 1], [], []>} : vector<32x64xbf16>, vector<64x64xbf16>, vector<32x64xf32> -> vector<32x64xf32>
    %112 = arith.addf %105, %111 : vector<32x64xf32>
    %c0_137 = arith.constant 0 : index
    %c0_138 = arith.constant 0 : index
    %c2_139 = arith.constant 2 : index
    %c0_140 = arith.constant 0 : index
    %113 = vector.load %arg12[%c0_137, %c0_138, %c2_139, %c0_140] : memref<2x6x6x64xf32, #tpu.memory_space<vmem>>, vector<2x4x4x64xf32>
    %114 = vector.shape_cast %113 : vector<2x4x4x64xf32> to vector<32x64xf32>
    %115 = arith.truncf %114 : vector<32x64xf32> to vector<32x64xbf16>
    %c2_141 = arith.constant 2 : index
    %c0_142 = arith.constant 0 : index
    %c0_143 = arith.constant 0 : index
    %116 = vector.load %arg6[%c2_141, %c0_142, %c0_143] : memref<9x64x64xbf16, #tpu.memory_space<vmem>>, vector<1x64x64xbf16>
    %117 = vector.shape_cast %116 : vector<1x64x64xbf16> to vector<64x64xbf16>
    %cst_144 = arith.constant dense<0.000000e+00> : vector<32x64xf32>
    %118 = tpu.matmul %115, %117, %cst_144 {dimension_numbers = #tpu.dot_dimension_numbers<[1], [0], [0], [1], [0, 0, 1, 1], [], []>} : vector<32x64xbf16>, vector<64x64xbf16>, vector<32x64xf32> -> vector<32x64xf32>
    %119 = arith.addf %112, %118 : vector<32x64xf32>
    %c0_145 = arith.constant 0 : index
    %c1_146 = arith.constant 1 : index
    %c0_147 = arith.constant 0 : index
    %c0_148 = arith.constant 0 : index
    %120 = vector.load %arg12[%c0_145, %c1_146, %c0_147, %c0_148] : memref<2x6x6x64xf32, #tpu.memory_space<vmem>>, vector<2x4x4x64xf32>
    %121 = vector.shape_cast %120 : vector<2x4x4x64xf32> to vector<32x64xf32>
    %122 = arith.truncf %121 : vector<32x64xf32> to vector<32x64xbf16>
    %c3_149 = arith.constant 3 : index
    %c0_150 = arith.constant 0 : index
    %c0_151 = arith.constant 0 : index
    %123 = vector.load %arg6[%c3_149, %c0_150, %c0_151] : memref<9x64x64xbf16, #tpu.memory_space<vmem>>, vector<1x64x64xbf16>
    %124 = vector.shape_cast %123 : vector<1x64x64xbf16> to vector<64x64xbf16>
    %cst_152 = arith.constant dense<0.000000e+00> : vector<32x64xf32>
    %125 = tpu.matmul %122, %124, %cst_152 {dimension_numbers = #tpu.dot_dimension_numbers<[1], [0], [0], [1], [0, 0, 1, 1], [], []>} : vector<32x64xbf16>, vector<64x64xbf16>, vector<32x64xf32> -> vector<32x64xf32>
    %126 = arith.addf %119, %125 : vector<32x64xf32>
    %c0_153 = arith.constant 0 : index
    %c1_154 = arith.constant 1 : index
    %c1_155 = arith.constant 1 : index
    %c0_156 = arith.constant 0 : index
    %127 = vector.load %arg12[%c0_153, %c1_154, %c1_155, %c0_156] : memref<2x6x6x64xf32, #tpu.memory_space<vmem>>, vector<2x4x4x64xf32>
    %128 = vector.shape_cast %127 : vector<2x4x4x64xf32> to vector<32x64xf32>
    %129 = arith.truncf %128 : vector<32x64xf32> to vector<32x64xbf16>
    %c4_157 = arith.constant 4 : index
    %c0_158 = arith.constant 0 : index
    %c0_159 = arith.constant 0 : index
    %130 = vector.load %arg6[%c4_157, %c0_158, %c0_159] : memref<9x64x64xbf16, #tpu.memory_space<vmem>>, vector<1x64x64xbf16>
    %131 = vector.shape_cast %130 : vector<1x64x64xbf16> to vector<64x64xbf16>
    %cst_160 = arith.constant dense<0.000000e+00> : vector<32x64xf32>
    %132 = tpu.matmul %129, %131, %cst_160 {dimension_numbers = #tpu.dot_dimension_numbers<[1], [0], [0], [1], [0, 0, 1, 1], [], []>} : vector<32x64xbf16>, vector<64x64xbf16>, vector<32x64xf32> -> vector<32x64xf32>
    %133 = arith.addf %126, %132 : vector<32x64xf32>
    %c0_161 = arith.constant 0 : index
    %c1_162 = arith.constant 1 : index
    %c2_163 = arith.constant 2 : index
    %c0_164 = arith.constant 0 : index
    %134 = vector.load %arg12[%c0_161, %c1_162, %c2_163, %c0_164] : memref<2x6x6x64xf32, #tpu.memory_space<vmem>>, vector<2x4x4x64xf32>
    %135 = vector.shape_cast %134 : vector<2x4x4x64xf32> to vector<32x64xf32>
    %136 = arith.truncf %135 : vector<32x64xf32> to vector<32x64xbf16>
    %c5_165 = arith.constant 5 : index
    %c0_166 = arith.constant 0 : index
    %c0_167 = arith.constant 0 : index
    %137 = vector.load %arg6[%c5_165, %c0_166, %c0_167] : memref<9x64x64xbf16, #tpu.memory_space<vmem>>, vector<1x64x64xbf16>
    %138 = vector.shape_cast %137 : vector<1x64x64xbf16> to vector<64x64xbf16>
    %cst_168 = arith.constant dense<0.000000e+00> : vector<32x64xf32>
    %139 = tpu.matmul %136, %138, %cst_168 {dimension_numbers = #tpu.dot_dimension_numbers<[1], [0], [0], [1], [0, 0, 1, 1], [], []>} : vector<32x64xbf16>, vector<64x64xbf16>, vector<32x64xf32> -> vector<32x64xf32>
    %140 = arith.addf %133, %139 : vector<32x64xf32>
    %c0_169 = arith.constant 0 : index
    %c2_170 = arith.constant 2 : index
    %c0_171 = arith.constant 0 : index
    %c0_172 = arith.constant 0 : index
    %141 = vector.load %arg12[%c0_169, %c2_170, %c0_171, %c0_172] : memref<2x6x6x64xf32, #tpu.memory_space<vmem>>, vector<2x4x4x64xf32>
    %142 = vector.shape_cast %141 : vector<2x4x4x64xf32> to vector<32x64xf32>
    %143 = arith.truncf %142 : vector<32x64xf32> to vector<32x64xbf16>
    %c6_173 = arith.constant 6 : index
    %c0_174 = arith.constant 0 : index
    %c0_175 = arith.constant 0 : index
    %144 = vector.load %arg6[%c6_173, %c0_174, %c0_175] : memref<9x64x64xbf16, #tpu.memory_space<vmem>>, vector<1x64x64xbf16>
    %145 = vector.shape_cast %144 : vector<1x64x64xbf16> to vector<64x64xbf16>
    %cst_176 = arith.constant dense<0.000000e+00> : vector<32x64xf32>
    %146 = tpu.matmul %143, %145, %cst_176 {dimension_numbers = #tpu.dot_dimension_numbers<[1], [0], [0], [1], [0, 0, 1, 1], [], []>} : vector<32x64xbf16>, vector<64x64xbf16>, vector<32x64xf32> -> vector<32x64xf32>
    %147 = arith.addf %140, %146 : vector<32x64xf32>
    %c0_177 = arith.constant 0 : index
    %c2_178 = arith.constant 2 : index
    %c1_179 = arith.constant 1 : index
    %c0_180 = arith.constant 0 : index
    %148 = vector.load %arg12[%c0_177, %c2_178, %c1_179, %c0_180] : memref<2x6x6x64xf32, #tpu.memory_space<vmem>>, vector<2x4x4x64xf32>
    %149 = vector.shape_cast %148 : vector<2x4x4x64xf32> to vector<32x64xf32>
    %150 = arith.truncf %149 : vector<32x64xf32> to vector<32x64xbf16>
    %c7_181 = arith.constant 7 : index
    %c0_182 = arith.constant 0 : index
    %c0_183 = arith.constant 0 : index
    %151 = vector.load %arg6[%c7_181, %c0_182, %c0_183] : memref<9x64x64xbf16, #tpu.memory_space<vmem>>, vector<1x64x64xbf16>
    %152 = vector.shape_cast %151 : vector<1x64x64xbf16> to vector<64x64xbf16>
    %cst_184 = arith.constant dense<0.000000e+00> : vector<32x64xf32>
    %153 = tpu.matmul %150, %152, %cst_184 {dimension_numbers = #tpu.dot_dimension_numbers<[1], [0], [0], [1], [0, 0, 1, 1], [], []>} : vector<32x64xbf16>, vector<64x64xbf16>, vector<32x64xf32> -> vector<32x64xf32>
    %154 = arith.addf %147, %153 : vector<32x64xf32>
    %c0_185 = arith.constant 0 : index
    %c2_186 = arith.constant 2 : index
    %c2_187 = arith.constant 2 : index
    %c0_188 = arith.constant 0 : index
    %155 = vector.load %arg12[%c0_185, %c2_186, %c2_187, %c0_188] : memref<2x6x6x64xf32, #tpu.memory_space<vmem>>, vector<2x4x4x64xf32>
    %156 = vector.shape_cast %155 : vector<2x4x4x64xf32> to vector<32x64xf32>
    %157 = arith.truncf %156 : vector<32x64xf32> to vector<32x64xbf16>
    %c8_189 = arith.constant 8 : index
    %c0_190 = arith.constant 0 : index
    %c0_191 = arith.constant 0 : index
    %158 = vector.load %arg6[%c8_189, %c0_190, %c0_191] : memref<9x64x64xbf16, #tpu.memory_space<vmem>>, vector<1x64x64xbf16>
    %159 = vector.shape_cast %158 : vector<1x64x64xbf16> to vector<64x64xbf16>
    %cst_192 = arith.constant dense<0.000000e+00> : vector<32x64xf32>
    %160 = tpu.matmul %157, %159, %cst_192 {dimension_numbers = #tpu.dot_dimension_numbers<[1], [0], [0], [1], [0, 0, 1, 1], [], []>} : vector<32x64xbf16>, vector<64x64xbf16>, vector<32x64xf32> -> vector<32x64xf32>
    %161 = arith.addf %154, %160 : vector<32x64xf32>
    %c0_193 = arith.constant 0 : index
    %c0_194 = arith.constant 0 : index
    %162 = vector.load %arg7[%c0_193, %c0_194] : memref<1x64xf32, #tpu.memory_space<vmem>>, vector<1x64xf32>
    %163 = vector.broadcast %162 : vector<1x64xf32> to vector<32x64xf32>
    %164 = arith.addf %161, %163 : vector<32x64xf32>
    %cst_195 = arith.constant 0.000000e+00 : f32
    %165 = vector.broadcast %cst_195 : f32 to vector<32x64xf32>
    %166 = arith.maximumf %164, %165 : vector<32x64xf32>
    %167 = vector.shape_cast %166 : vector<32x64xf32> to vector<2x4x4x64xf32>
    %168 = vector.shape_cast %167 : vector<2x4x4x64xf32> to vector<2x2x2x4x64xf32>
    %cst_196 = arith.constant dense<0xFF800000> : vector<2x2x4x64xf32>
    %169 = vector.multi_reduction <maximumf>, %168, %cst_196 [2] : vector<2x2x2x4x64xf32> to vector<2x2x4x64xf32>
    %170 = vector.shape_cast %169 : vector<2x2x4x64xf32> to vector<2x2x2x2x64xf32>
    %cst_197 = arith.constant dense<0xFF800000> : vector<2x2x2x64xf32>
    %171 = vector.multi_reduction <maximumf>, %170, %cst_197 [3] : vector<2x2x2x2x64xf32> to vector<2x2x2x64xf32>
    %cst_198 = arith.constant 0.000000e+00 : f32
    %172 = vector.broadcast %cst_198 : f32 to vector<2x1x4x64xf32>
    %cst_199 = arith.constant 0.000000e+00 : f32
    %173 = vector.broadcast %cst_199 : f32 to vector<2x4x1x64xf32>
    %c0_200 = arith.constant 0 : index
    %c0_201 = arith.constant 0 : index
    %c0_202 = arith.constant 0 : index
    %c0_203 = arith.constant 0 : index
    %174 = vector.load %arg13[%c0_200, %c0_201, %c0_202, %c0_203] : memref<2x4x4x64xf32, #tpu.memory_space<vmem>>, vector<2x1x4x64xf32>
    tpu.vector_store %arg13[%c0_200, %c0_201, %c0_202, %c0_203], %172 {strides = array<i32>} : memref<2x4x4x64xf32, #tpu.memory_space<vmem>>, vector<2x1x4x64xf32>,
    %c0_204 = arith.constant 0 : index
    %c3_205 = arith.constant 3 : index
    %c0_206 = arith.constant 0 : index
    %c0_207 = arith.constant 0 : index
    %175 = vector.load %arg13[%c0_204, %c3_205, %c0_206, %c0_207] : memref<2x4x4x64xf32, #tpu.memory_space<vmem>>, vector<2x1x4x64xf32>
    tpu.vector_store %arg13[%c0_204, %c3_205, %c0_206, %c0_207], %172 {strides = array<i32>} : memref<2x4x4x64xf32, #tpu.memory_space<vmem>>, vector<2x1x4x64xf32>,
    %c0_208 = arith.constant 0 : index
    %c0_209 = arith.constant 0 : index
    %c0_210 = arith.constant 0 : index
    %c0_211 = arith.constant 0 : index
    %176 = vector.load %arg13[%c0_208, %c0_209, %c0_210, %c0_211] : memref<2x4x4x64xf32, #tpu.memory_space<vmem>>, vector<2x4x1x64xf32>
    tpu.vector_store %arg13[%c0_208, %c0_209, %c0_210, %c0_211], %173 {strides = array<i32>} : memref<2x4x4x64xf32, #tpu.memory_space<vmem>>, vector<2x4x1x64xf32>,
    %c0_212 = arith.constant 0 : index
    %c0_213 = arith.constant 0 : index
    %c3_214 = arith.constant 3 : index
    %c0_215 = arith.constant 0 : index
    %177 = vector.load %arg13[%c0_212, %c0_213, %c3_214, %c0_215] : memref<2x4x4x64xf32, #tpu.memory_space<vmem>>, vector<2x4x1x64xf32>
    tpu.vector_store %arg13[%c0_212, %c0_213, %c3_214, %c0_215], %173 {strides = array<i32>} : memref<2x4x4x64xf32, #tpu.memory_space<vmem>>, vector<2x4x1x64xf32>,
    %c0_216 = arith.constant 0 : index
    %c1_217 = arith.constant 1 : index
    %c1_218 = arith.constant 1 : index
    %c0_219 = arith.constant 0 : index
    %178 = vector.load %arg13[%c0_216, %c1_217, %c1_218, %c0_219] : memref<2x4x4x64xf32, #tpu.memory_space<vmem>>, vector<2x2x2x64xf32>
    tpu.vector_store %arg13[%c0_216, %c1_217, %c1_218, %c0_219], %171 {strides = array<i32>} : memref<2x4x4x64xf32, #tpu.memory_space<vmem>>, vector<2x2x2x64xf32>,
    %c0_220 = arith.constant 0 : index
    %c0_221 = arith.constant 0 : index
    %c0_222 = arith.constant 0 : index
    %c0_223 = arith.constant 0 : index
    %179 = vector.load %arg13[%c0_220, %c0_221, %c0_222, %c0_223] : memref<2x4x4x64xf32, #tpu.memory_space<vmem>>, vector<2x2x2x64xf32>
    %180 = vector.shape_cast %179 : vector<2x2x2x64xf32> to vector<8x64xf32>
    %181 = arith.truncf %180 : vector<8x64xf32> to vector<8x64xbf16>
    %c0_224 = arith.constant 0 : index
    %c0_225 = arith.constant 0 : index
    %c0_226 = arith.constant 0 : index
    %182 = vector.load %arg8[%c0_224, %c0_225, %c0_226] : memref<9x64x64xbf16, #tpu.memory_space<vmem>>, vector<1x64x64xbf16>
    %183 = vector.shape_cast %182 : vector<1x64x64xbf16> to vector<64x64xbf16>
    %cst_227 = arith.constant dense<0.000000e+00> : vector<8x64xf32>
    %184 = tpu.matmul %181, %183, %cst_227 {dimension_numbers = #tpu.dot_dimension_numbers<[1], [0], [0], [1], [0, 0, 1, 1], [], []>} : vector<8x64xbf16>, vector<64x64xbf16>, vector<8x64xf32> -> vector<8x64xf32>
    %c0_228 = arith.constant 0 : index
    %c0_229 = arith.constant 0 : index
    %c1_230 = arith.constant 1 : index
    %c0_231 = arith.constant 0 : index
    %185 = vector.load %arg13[%c0_228, %c0_229, %c1_230, %c0_231] : memref<2x4x4x64xf32, #tpu.memory_space<vmem>>, vector<2x2x2x64xf32>
    %186 = vector.shape_cast %185 : vector<2x2x2x64xf32> to vector<8x64xf32>
    %187 = arith.truncf %186 : vector<8x64xf32> to vector<8x64xbf16>
    %c1_232 = arith.constant 1 : index
    %c0_233 = arith.constant 0 : index
    %c0_234 = arith.constant 0 : index
    %188 = vector.load %arg8[%c1_232, %c0_233, %c0_234] : memref<9x64x64xbf16, #tpu.memory_space<vmem>>, vector<1x64x64xbf16>
    %189 = vector.shape_cast %188 : vector<1x64x64xbf16> to vector<64x64xbf16>
    %cst_235 = arith.constant dense<0.000000e+00> : vector<8x64xf32>
    %190 = tpu.matmul %187, %189, %cst_235 {dimension_numbers = #tpu.dot_dimension_numbers<[1], [0], [0], [1], [0, 0, 1, 1], [], []>} : vector<8x64xbf16>, vector<64x64xbf16>, vector<8x64xf32> -> vector<8x64xf32>
    %191 = arith.addf %184, %190 : vector<8x64xf32>
    %c0_236 = arith.constant 0 : index
    %c0_237 = arith.constant 0 : index
    %c2_238 = arith.constant 2 : index
    %c0_239 = arith.constant 0 : index
    %192 = vector.load %arg13[%c0_236, %c0_237, %c2_238, %c0_239] : memref<2x4x4x64xf32, #tpu.memory_space<vmem>>, vector<2x2x2x64xf32>
    %193 = vector.shape_cast %192 : vector<2x2x2x64xf32> to vector<8x64xf32>
    %194 = arith.truncf %193 : vector<8x64xf32> to vector<8x64xbf16>
    %c2_240 = arith.constant 2 : index
    %c0_241 = arith.constant 0 : index
    %c0_242 = arith.constant 0 : index
    %195 = vector.load %arg8[%c2_240, %c0_241, %c0_242] : memref<9x64x64xbf16, #tpu.memory_space<vmem>>, vector<1x64x64xbf16>
    %196 = vector.shape_cast %195 : vector<1x64x64xbf16> to vector<64x64xbf16>
    %cst_243 = arith.constant dense<0.000000e+00> : vector<8x64xf32>
    %197 = tpu.matmul %194, %196, %cst_243 {dimension_numbers = #tpu.dot_dimension_numbers<[1], [0], [0], [1], [0, 0, 1, 1], [], []>} : vector<8x64xbf16>, vector<64x64xbf16>, vector<8x64xf32> -> vector<8x64xf32>
    %198 = arith.addf %191, %197 : vector<8x64xf32>
    %c0_244 = arith.constant 0 : index
    %c1_245 = arith.constant 1 : index
    %c0_246 = arith.constant 0 : index
    %c0_247 = arith.constant 0 : index
    %199 = vector.load %arg13[%c0_244, %c1_245, %c0_246, %c0_247] : memref<2x4x4x64xf32, #tpu.memory_space<vmem>>, vector<2x2x2x64xf32>
    %200 = vector.shape_cast %199 : vector<2x2x2x64xf32> to vector<8x64xf32>
    %201 = arith.truncf %200 : vector<8x64xf32> to vector<8x64xbf16>
    %c3_248 = arith.constant 3 : index
    %c0_249 = arith.constant 0 : index
    %c0_250 = arith.constant 0 : index
    %202 = vector.load %arg8[%c3_248, %c0_249, %c0_250] : memref<9x64x64xbf16, #tpu.memory_space<vmem>>, vector<1x64x64xbf16>
    %203 = vector.shape_cast %202 : vector<1x64x64xbf16> to vector<64x64xbf16>
    %cst_251 = arith.constant dense<0.000000e+00> : vector<8x64xf32>
    %204 = tpu.matmul %201, %203, %cst_251 {dimension_numbers = #tpu.dot_dimension_numbers<[1], [0], [0], [1], [0, 0, 1, 1], [], []>} : vector<8x64xbf16>, vector<64x64xbf16>, vector<8x64xf32> -> vector<8x64xf32>
    %205 = arith.addf %198, %204 : vector<8x64xf32>
    %c0_252 = arith.constant 0 : index
    %c1_253 = arith.constant 1 : index
    %c1_254 = arith.constant 1 : index
    %c0_255 = arith.constant 0 : index
    %206 = vector.load %arg13[%c0_252, %c1_253, %c1_254, %c0_255] : memref<2x4x4x64xf32, #tpu.memory_space<vmem>>, vector<2x2x2x64xf32>
    %207 = vector.shape_cast %206 : vector<2x2x2x64xf32> to vector<8x64xf32>
    %208 = arith.truncf %207 : vector<8x64xf32> to vector<8x64xbf16>
    %c4_256 = arith.constant 4 : index
    %c0_257 = arith.constant 0 : index
    %c0_258 = arith.constant 0 : index
    %209 = vector.load %arg8[%c4_256, %c0_257, %c0_258] : memref<9x64x64xbf16, #tpu.memory_space<vmem>>, vector<1x64x64xbf16>
    %210 = vector.shape_cast %209 : vector<1x64x64xbf16> to vector<64x64xbf16>
    %cst_259 = arith.constant dense<0.000000e+00> : vector<8x64xf32>
    %211 = tpu.matmul %208, %210, %cst_259 {dimension_numbers = #tpu.dot_dimension_numbers<[1], [0], [0], [1], [0, 0, 1, 1], [], []>} : vector<8x64xbf16>, vector<64x64xbf16>, vector<8x64xf32> -> vector<8x64xf32>
    %212 = arith.addf %205, %211 : vector<8x64xf32>
    %c0_260 = arith.constant 0 : index
    %c1_261 = arith.constant 1 : index
    %c2_262 = arith.constant 2 : index
    %c0_263 = arith.constant 0 : index
    %213 = vector.load %arg13[%c0_260, %c1_261, %c2_262, %c0_263] : memref<2x4x4x64xf32, #tpu.memory_space<vmem>>, vector<2x2x2x64xf32>
    %214 = vector.shape_cast %213 : vector<2x2x2x64xf32> to vector<8x64xf32>
    %215 = arith.truncf %214 : vector<8x64xf32> to vector<8x64xbf16>
    %c5_264 = arith.constant 5 : index
    %c0_265 = arith.constant 0 : index
    %c0_266 = arith.constant 0 : index
    %216 = vector.load %arg8[%c5_264, %c0_265, %c0_266] : memref<9x64x64xbf16, #tpu.memory_space<vmem>>, vector<1x64x64xbf16>
    %217 = vector.shape_cast %216 : vector<1x64x64xbf16> to vector<64x64xbf16>
    %cst_267 = arith.constant dense<0.000000e+00> : vector<8x64xf32>
    %218 = tpu.matmul %215, %217, %cst_267 {dimension_numbers = #tpu.dot_dimension_numbers<[1], [0], [0], [1], [0, 0, 1, 1], [], []>} : vector<8x64xbf16>, vector<64x64xbf16>, vector<8x64xf32> -> vector<8x64xf32>
    %219 = arith.addf %212, %218 : vector<8x64xf32>
    %c0_268 = arith.constant 0 : index
    %c2_269 = arith.constant 2 : index
    %c0_270 = arith.constant 0 : index
    %c0_271 = arith.constant 0 : index
    %220 = vector.load %arg13[%c0_268, %c2_269, %c0_270, %c0_271] : memref<2x4x4x64xf32, #tpu.memory_space<vmem>>, vector<2x2x2x64xf32>
    %221 = vector.shape_cast %220 : vector<2x2x2x64xf32> to vector<8x64xf32>
    %222 = arith.truncf %221 : vector<8x64xf32> to vector<8x64xbf16>
    %c6_272 = arith.constant 6 : index
    %c0_273 = arith.constant 0 : index
    %c0_274 = arith.constant 0 : index
    %223 = vector.load %arg8[%c6_272, %c0_273, %c0_274] : memref<9x64x64xbf16, #tpu.memory_space<vmem>>, vector<1x64x64xbf16>
    %224 = vector.shape_cast %223 : vector<1x64x64xbf16> to vector<64x64xbf16>
    %cst_275 = arith.constant dense<0.000000e+00> : vector<8x64xf32>
    %225 = tpu.matmul %222, %224, %cst_275 {dimension_numbers = #tpu.dot_dimension_numbers<[1], [0], [0], [1], [0, 0, 1, 1], [], []>} : vector<8x64xbf16>, vector<64x64xbf16>, vector<8x64xf32> -> vector<8x64xf32>
    %226 = arith.addf %219, %225 : vector<8x64xf32>
    %c0_276 = arith.constant 0 : index
    %c2_277 = arith.constant 2 : index
    %c1_278 = arith.constant 1 : index
    %c0_279 = arith.constant 0 : index
    %227 = vector.load %arg13[%c0_276, %c2_277, %c1_278, %c0_279] : memref<2x4x4x64xf32, #tpu.memory_space<vmem>>, vector<2x2x2x64xf32>
    %228 = vector.shape_cast %227 : vector<2x2x2x64xf32> to vector<8x64xf32>
    %229 = arith.truncf %228 : vector<8x64xf32> to vector<8x64xbf16>
    %c7_280 = arith.constant 7 : index
    %c0_281 = arith.constant 0 : index
    %c0_282 = arith.constant 0 : index
    %230 = vector.load %arg8[%c7_280, %c0_281, %c0_282] : memref<9x64x64xbf16, #tpu.memory_space<vmem>>, vector<1x64x64xbf16>
    %231 = vector.shape_cast %230 : vector<1x64x64xbf16> to vector<64x64xbf16>
    %cst_283 = arith.constant dense<0.000000e+00> : vector<8x64xf32>
    %232 = tpu.matmul %229, %231, %cst_283 {dimension_numbers = #tpu.dot_dimension_numbers<[1], [0], [0], [1], [0, 0, 1, 1], [], []>} : vector<8x64xbf16>, vector<64x64xbf16>, vector<8x64xf32> -> vector<8x64xf32>
    %233 = arith.addf %226, %232 : vector<8x64xf32>
    %c0_284 = arith.constant 0 : index
    %c2_285 = arith.constant 2 : index
    %c2_286 = arith.constant 2 : index
    %c0_287 = arith.constant 0 : index
    %234 = vector.load %arg13[%c0_284, %c2_285, %c2_286, %c0_287] : memref<2x4x4x64xf32, #tpu.memory_space<vmem>>, vector<2x2x2x64xf32>
    %235 = vector.shape_cast %234 : vector<2x2x2x64xf32> to vector<8x64xf32>
    %236 = arith.truncf %235 : vector<8x64xf32> to vector<8x64xbf16>
    %c8_288 = arith.constant 8 : index
    %c0_289 = arith.constant 0 : index
    %c0_290 = arith.constant 0 : index
    %237 = vector.load %arg8[%c8_288, %c0_289, %c0_290] : memref<9x64x64xbf16, #tpu.memory_space<vmem>>, vector<1x64x64xbf16>
    %238 = vector.shape_cast %237 : vector<1x64x64xbf16> to vector<64x64xbf16>
    %cst_291 = arith.constant dense<0.000000e+00> : vector<8x64xf32>
    %239 = tpu.matmul %236, %238, %cst_291 {dimension_numbers = #tpu.dot_dimension_numbers<[1], [0], [0], [1], [0, 0, 1, 1], [], []>} : vector<8x64xbf16>, vector<64x64xbf16>, vector<8x64xf32> -> vector<8x64xf32>
    %240 = arith.addf %233, %239 : vector<8x64xf32>
    %c0_292 = arith.constant 0 : index
    %c0_293 = arith.constant 0 : index
    %241 = vector.load %arg9[%c0_292, %c0_293] : memref<1x64xf32, #tpu.memory_space<vmem>>, vector<1x64xf32>
    %242 = vector.broadcast %241 : vector<1x64xf32> to vector<8x64xf32>
    %243 = arith.addf %240, %242 : vector<8x64xf32>
    %cst_294 = arith.constant 0.000000e+00 : f32
    %244 = vector.broadcast %cst_294 : f32 to vector<8x64xf32>
    %245 = arith.maximumf %243, %244 : vector<8x64xf32>
    %246 = vector.shape_cast %245 : vector<8x64xf32> to vector<2x2x2x64xf32>
    %247 = vector.shape_cast %246 : vector<2x2x2x64xf32> to vector<2x1x2x2x64xf32>
    %cst_295 = arith.constant dense<0xFF800000> : vector<2x1x2x64xf32>
    %248 = vector.multi_reduction <maximumf>, %247, %cst_295 [2] : vector<2x1x2x2x64xf32> to vector<2x1x2x64xf32>
    %249 = vector.shape_cast %248 : vector<2x1x2x64xf32> to vector<2x1x1x2x64xf32>
    %cst_296 = arith.constant dense<0xFF800000> : vector<2x1x1x64xf32>
    %250 = vector.multi_reduction <maximumf>, %249, %cst_296 [3] : vector<2x1x1x2x64xf32> to vector<2x1x1x64xf32>
    %c0_297 = arith.constant 0 : index
    %c0_298 = arith.constant 0 : index
    %c0_299 = arith.constant 0 : index
    %c0_300 = arith.constant 0 : index
    %251 = vector.load %arg10[%c0_297, %c0_298, %c0_299, %c0_300] : memref<2x1x1x64xf32, #tpu.memory_space<vmem>>, vector<2x1x1x64xf32>
    tpu.vector_store %arg10[%c0_297, %c0_298, %c0_299, %c0_300], %250 {strides = array<i32>} : memref<2x1x1x64xf32, #tpu.memory_space<vmem>>, vector<2x1x1x64xf32>,
    return
  }
  func.func @transform_0(%arg0: i32) -> (i32, i32, i32) {
    %c0_i32 = arith.constant 0 : i32
    %c0_i32_0 = arith.constant 0 : i32
    %c0_i32_1 = arith.constant 0 : i32
    return %arg0, %c0_i32, %c0_i32_0 : i32, i32, i32
  }
  func.func @transform_1(%arg0: i32) -> (i32, i32) {
    %c0_i32 = arith.constant 0 : i32
    %c0_i32_0 = arith.constant 0 : i32
    %c0_i32_1 = arith.constant 0 : i32
    return %c0_i32, %c0_i32_0 : i32, i32
  }
  func.func @transform_2(%arg0: i32) -> (i32, i32) {
    %c0_i32 = arith.constant 0 : i32
    %c0_i32_0 = arith.constant 0 : i32
    %c0_i32_1 = arith.constant 0 : i32
    return %c0_i32, %c0_i32_0 : i32, i32
  }
  func.func @transform_3(%arg0: i32) -> (i32, i32, i32) {
    %c0_i32 = arith.constant 0 : i32
    %c0_i32_0 = arith.constant 0 : i32
    %c0_i32_1 = arith.constant 0 : i32
    %c0_i32_2 = arith.constant 0 : i32
    return %c0_i32, %c0_i32_0, %c0_i32_1 : i32, i32, i32
  }
  func.func @transform_4(%arg0: i32) -> (i32, i32) {
    %c0_i32 = arith.constant 0 : i32
    %c0_i32_0 = arith.constant 0 : i32
    %c0_i32_1 = arith.constant 0 : i32
    return %c0_i32, %c0_i32_0 : i32, i32
  }
  func.func @transform_5(%arg0: i32) -> (i32, i32, i32) {
    %c0_i32 = arith.constant 0 : i32
    %c0_i32_0 = arith.constant 0 : i32
    %c0_i32_1 = arith.constant 0 : i32
    %c0_i32_2 = arith.constant 0 : i32
    return %c0_i32, %c0_i32_0, %c0_i32_1 : i32, i32, i32
  }
  func.func @transform_6(%arg0: i32) -> (i32, i32) {
    %c0_i32 = arith.constant 0 : i32
    %c0_i32_0 = arith.constant 0 : i32
    %c0_i32_1 = arith.constant 0 : i32
    return %c0_i32, %c0_i32_0 : i32, i32
  }
  func.func @transform_7(%arg0: i32) -> (i32, i32, i32) {
    %c0_i32 = arith.constant 0 : i32
    %c0_i32_0 = arith.constant 0 : i32
    %c0_i32_1 = arith.constant 0 : i32
    %c0_i32_2 = arith.constant 0 : i32
    return %c0_i32, %c0_i32_0, %c0_i32_1 : i32, i32, i32
  }
  func.func @transform_8(%arg0: i32) -> (i32, i32) {
    %c0_i32 = arith.constant 0 : i32
    %c0_i32_0 = arith.constant 0 : i32
    %c0_i32_1 = arith.constant 0 : i32
    return %c0_i32, %c0_i32_0 : i32, i32
  }
  func.func @transform_9(%arg0: i32) -> (i32, i32, i32, i32) {
    %c0_i32 = arith.constant 0 : i32
    %c0_i32_0 = arith.constant 0 : i32
    %c0_i32_1 = arith.constant 0 : i32
    %c0_i32_2 = arith.constant 0 : i32
    return %arg0, %c0_i32, %c0_i32_0, %c0_i32_1 : i32, i32, i32, i32
  }
}

</mosaic_0001>

<llo_original>
// kernel: convnet_forward.1
$region0: #{convnet_forward.1}
  #allocation0 [shape = 'u32[]', space=smem, size = 0x4, offset = 0x4, fixed_abs, tag = 'smem constant byte address 0x4 - core index']
  #allocation1 [shape = 'u32[72,128]{1,0:T(1,128)}', space=vmem, size = 0x9000, scoped, tag = 'internal scratch']
  #allocation2 [shape = 'f32[2,10,10,64]{3,2,1,0:T(8,128)}', space=vmem, size = 0x28000, scoped, tag = 'scratch operand']
  #allocation3 [shape = 'f32[2,6,6,64]{3,2,1,0:T(8,128)}', space=vmem, size = 0xc000, scoped, tag = 'scratch operand']
  #allocation4 [shape = 'f32[2,4,4,64]{3,2,1,0:T(4,128)}', space=vmem, size = 0x4000, scoped, tag = 'scratch operand']
  %s0 = inlined_call_operand.vmem [shape: bf16[2,256,32], index: 0, kind: input, shape index: {}]
  %s1 = inlined_call_operand.vmem [shape: bf16[32,64], index: 1, kind: input, shape index: {}]
  %s2 = inlined_call_operand.vmem [shape: f32[1,64], index: 2, kind: input, shape index: {}]
  %s3 = inlined_call_operand.vmem [shape: bf16[9,64,64], index: 3, kind: input, shape index: {}]
  %s4 = inlined_call_operand.vmem [shape: f32[1,64], index: 4, kind: input, shape index: {}]
  %s5 = inlined_call_operand.vmem [shape: bf16[9,64,64], index: 5, kind: input, shape index: {}]
  %s6 = inlined_call_operand.vmem [shape: f32[1,64], index: 6, kind: input, shape index: {}]
  %s7 = inlined_call_operand.vmem [shape: bf16[9,64,64], index: 7, kind: input, shape index: {}]
  %s8 = inlined_call_operand.vmem [shape: f32[1,64], index: 8, kind: input, shape index: {}]
  %s9 = inlined_call_operand.hbm [shape: f32[2,1,1,64], index: 9, kind: output, shape index: {}]
  %s10 = sld [smem:[#allocation0]]
  $region46: #{convnet_forward.1} parent=0
    _
  %s12 = ssub.s32 1, %s10
  %s13 = scalar_select 0, %s12, %s10
  $region1: #{convnet_forward.1} parent=0
    #allocation5 [shape = 'u8[1024]{0}', space=vmem, size = 0x400, scoped, tag = 'output window, operand 0, single buffered']
    #allocation6 [shape = 's32[1]{0}', space=sflag, size = 0x4, scoped, tag = 'scoped memory for convnet_forward.1']
    %14 = vsyncpa [#allocation6], 0
    // Predicated region
    $region2: #{convnet_forward.1} parent=1 // pred_check
      _
    $region3: #{convnet_forward.1} parent=1 // pred_check_branch
      %16 = sbr.rel (0) target = $region5
    $region4: #{convnet_forward.1} parent=1 // pred_region
      _
    $region5: #{convnet_forward.1} parent=1 // pred_fallthru
      _
    // Predicated region
    $region6: #{convnet_forward.1} parent=1 // pred_check
      _
    $region7: #{convnet_forward.1} parent=1 // pred_check_branch
      %18 = sbr.rel (0) target = $region9
    $region8: #{convnet_forward.1} parent=1 // pred_region
      _
    $region9: #{convnet_forward.1} parent=1 // pred_fallthru
      _
    // Predicated region
    $region10: #{convnet_forward.1} parent=1 // pred_check
      _
    $region11: #{convnet_forward.1} parent=1 // pred_check_branch
      %20 = sbr.rel (0) target = $region13
    $region12: #{convnet_forward.1} parent=1 // pred_region
      _
    $region13: #{convnet_forward.1} parent=1 // pred_fallthru
      _
    // Predicated region
    $region14: #{convnet_forward.1} parent=1 // pred_check
      _
    $region15: #{convnet_forward.1} parent=1 // pred_check_branch
      %22 = sbr.rel (0) target = $region17
    $region16: #{convnet_forward.1} parent=1 // pred_region
      _
    $region17: #{convnet_forward.1} parent=1 // pred_fallthru
      _
    // Predicated region
    $region18: #{convnet_forward.1} parent=1 // pred_check
      _
    $region19: #{convnet_forward.1} parent=1 // pred_check_branch
      %24 = sbr.rel (0) target = $region21
    $region20: #{convnet_forward.1} parent=1 // pred_region
      _
    $region21: #{convnet_forward.1} parent=1 // pred_fallthru
      _
    // Predicated region
    $region22: #{convnet_forward.1} parent=1 // pred_check
      _
    $region23: #{convnet_forward.1} parent=1 // pred_check_branch
      %26 = sbr.rel (0) target = $region25
    $region24: #{convnet_forward.1} parent=1 // pred_region
      _
    $region25: #{convnet_forward.1} parent=1 // pred_fallthru
      _
    // Predicated region
    $region26: #{convnet_forward.1} parent=1 // pred_check
      _
    $region27: #{convnet_forward.1} parent=1 // pred_check_branch
      %28 = sbr.rel (0) target = $region29
    $region28: #{convnet_forward.1} parent=1 // pred_region
      _
    $region29: #{convnet_forward.1} parent=1 // pred_fallthru
      _
    // Predicated region
    $region30: #{convnet_forward.1} parent=1 // pred_check
      _
    $region31: #{convnet_forward.1} parent=1 // pred_check_branch
      %30 = sbr.rel (0) target = $region33
    $region32: #{convnet_forward.1} parent=1 // pred_region
      _
    $region33: #{convnet_forward.1} parent=1 // pred_fallthru
      _
    // Predicated region
    $region34: #{convnet_forward.1} parent=1 // pred_check
      _
    $region35: #{convnet_forward.1} parent=1 // pred_check_branch
      %32 = sbr.rel (0) target = $region37
    $region36: #{convnet_forward.1} parent=1 // pred_region
      _
    $region37: #{convnet_forward.1} parent=1 // pred_fallthru
      _
    %v34 = vld [vmem:[%s0] sm:$0xf]
    %v35 = vld [vmem:[%s0 + $0x4] sm:$0xf]
    %v36 = vld [vmem:[%s0 + $0x8] sm:$0xf]
    %v37 = vld [vmem:[%s0 + $0xc] sm:$0xf]
    %v38 = vld [vmem:[%s0 + $0x10] sm:$0xf]
    %v39 = vld [vmem:[%s0 + $0x14] sm:$0xf]
    %v40 = vld [vmem:[%s0 + $0x18] sm:$0xf]
    %v41 = vld [vmem:[%s0 + $0x1c] sm:$0xf]
    %v42 = vld [vmem:[%s0 + $0x20] sm:$0xf]
    %v43 = vld [vmem:[%s0 + $0x24] sm:$0xf]
    %v44 = vld [vmem:[%s0 + $0x28] sm:$0xf]
    %v45 = vld [vmem:[%s0 + $0x2c] sm:$0xf]
    %v46 = vld [vmem:[%s0 + $0x30] sm:$0xf]
    %v47 = vld [vmem:[%s0 + $0x34] sm:$0xf]
    %v48 = vld [vmem:[%s0 + $0x38] sm:$0xf]
    %v49 = vld [vmem:[%s0 + $0x3c] sm:$0xf]
    %v50 = vld [vmem:[%s0 + $0x40] sm:$0xf]
    %v51 = vld [vmem:[%s0 + $0x44] sm:$0xf]
    %v52 = vld [vmem:[%s0 + $0x48] sm:$0xf]
    %v53 = vld [vmem:[%s0 + $0x4c] sm:$0xf]
    %v54 = vld [vmem:[%s0 + $0x50] sm:$0xf]
    %v55 = vld [vmem:[%s0 + $0x54] sm:$0xf]
    %v56 = vld [vmem:[%s0 + $0x58] sm:$0xf]
    %v57 = vld [vmem:[%s0 + $0x5c] sm:$0xf]
    %v58 = vld [vmem:[%s0 + $0x60] sm:$0xf]
    %v59 = vld [vmem:[%s0 + $0x64] sm:$0xf]
    %v60 = vld [vmem:[%s0 + $0x68] sm:$0xf]
    %v61 = vld [vmem:[%s0 + $0x6c] sm:$0xf]
    %v62 = vld [vmem:[%s0 + $0x70] sm:$0xf]
    %v63 = vld [vmem:[%s0 + $0x74] sm:$0xf]
    %v64 = vld [vmem:[%s0 + $0x78] sm:$0xf]
    %v65 = vld [vmem:[%s0 + $0x7c] sm:$0xf]
    %v66 = vld [vmem:[%s0 + $0x80] sm:$0xf]
    %v67 = vld [vmem:[%s0 + $0x84] sm:$0xf]
    %v68 = vld [vmem:[%s0 + $0x88] sm:$0xf]
    %v69 = vld [vmem:[%s0 + $0x8c] sm:$0xf]
    %v70 = vld [vmem:[%s0 + $0x90] sm:$0xf]
    %v71 = vld [vmem:[%s0 + $0x94] sm:$0xf]
    %v72 = vld [vmem:[%s0 + $0x98] sm:$0xf]
    %v73 = vld [vmem:[%s0 + $0x9c] sm:$0xf]
    %v74 = vld [vmem:[%s0 + $0xa0] sm:$0xf]
    %v75 = vld [vmem:[%s0 + $0xa4] sm:$0xf]
    %v76 = vld [vmem:[%s0 + $0xa8] sm:$0xf]
    %v77 = vld [vmem:[%s0 + $0xac] sm:$0xf]
    %v78 = vld [vmem:[%s0 + $0xb0] sm:$0xf]
    %v79 = vld [vmem:[%s0 + $0xb4] sm:$0xf]
    %v80 = vld [vmem:[%s0 + $0xb8] sm:$0xf]
    %v81 = vld [vmem:[%s0 + $0xbc] sm:$0xf]
    %v82 = vld [vmem:[%s0 + $0xc0] sm:$0xf]
    %v83 = vld [vmem:[%s0 + $0xc4] sm:$0xf]
    %v84 = vld [vmem:[%s0 + $0xc8] sm:$0xf]
    %v85 = vld [vmem:[%s0 + $0xcc] sm:$0xf]
    %v86 = vld [vmem:[%s0 + $0xd0] sm:$0xf]
    %v87 = vld [vmem:[%s0 + $0xd4] sm:$0xf]
    %v88 = vld [vmem:[%s0 + $0xd8] sm:$0xf]
    %v89 = vld [vmem:[%s0 + $0xdc] sm:$0xf]
    %v90 = vld [vmem:[%s0 + $0xe0] sm:$0xf]
    %v91 = vld [vmem:[%s0 + $0xe4] sm:$0xf]
    %v92 = vld [vmem:[%s0 + $0xe8] sm:$0xf]
    %v93 = vld [vmem:[%s0 + $0xec] sm:$0xf]
    %v94 = vld [vmem:[%s0 + $0xf0] sm:$0xf]
    %v95 = vld [vmem:[%s0 + $0xf4] sm:$0xf]
    %v96 = vld [vmem:[%s0 + $0xf8] sm:$0xf]
    %v97 = vld [vmem:[%s0 + $0xfc] sm:$0xf]
    %v98 = vld [vmem:[%s1] sm:$0xf]
    %v99 = vld [vmem:[%s1 + $0x4] sm:$0xf]
    %v100 = vld [vmem:[%s1 + $0x8] sm:$0xf]
    %v101 = vld [vmem:[%s1 + $0xc] sm:$0xf]
    %v102 = vld [vmem:[%s2] sm:$0x1]
    %v104 = vperm.slane %v102, 0
    %v170 = vunpack.c.l.b16 %v34
    %v171 = vunpack.c.l.b16 %v35
    %v172 = vunpack.c.l.b16 %v36
    %v173 = vunpack.c.l.b16 %v37
    %v174 = vunpack.c.l.b16 %v38
    %v175 = vunpack.c.l.b16 %v39
    %v176 = vunpack.c.l.b16 %v40
    %v177 = vunpack.c.l.b16 %v41
    %v178 = vunpack.c.l.b16 %v42
    %v179 = vunpack.c.l.b16 %v43
    %v180 = vunpack.c.l.b16 %v44
    %v181 = vunpack.c.l.b16 %v45
    %v182 = vunpack.c.l.b16 %v46
    %v183 = vunpack.c.l.b16 %v47
    %v184 = vunpack.c.l.b16 %v48
    %v185 = vunpack.c.l.b16 %v49
    %v186 = vunpack.c.l.b16 %v50
    %v187 = vunpack.c.l.b16 %v51
    %v188 = vunpack.c.l.b16 %v52
    %v189 = vunpack.c.l.b16 %v53
    %v190 = vunpack.c.l.b16 %v54
    %v191 = vunpack.c.l.b16 %v55
    %v192 = vunpack.c.l.b16 %v56
    %v193 = vunpack.c.l.b16 %v57
    %v194 = vunpack.c.l.b16 %v58
    %v195 = vunpack.c.l.b16 %v59
    %v196 = vunpack.c.l.b16 %v60
    %v197 = vunpack.c.l.b16 %v61
    %v198 = vunpack.c.l.b16 %v62
    %v199 = vunpack.c.l.b16 %v63
    %v200 = vunpack.c.l.b16 %v64
    %v201 = vunpack.c.l.b16 %v65
    %v202 = vunpack.c.l.b16 %v66
    %v203 = vunpack.c.l.b16 %v67
    %v204 = vunpack.c.l.b16 %v68
    %v205 = vunpack.c.l.b16 %v69
    %v206 = vunpack.c.l.b16 %v70
    %v207 = vunpack.c.l.b16 %v71
    %v208 = vunpack.c.l.b16 %v72
    %v209 = vunpack.c.l.b16 %v73
    %v210 = vunpack.c.l.b16 %v74
    %v211 = vunpack.c.l.b16 %v75
    %v212 = vunpack.c.l.b16 %v76
    %v213 = vunpack.c.l.b16 %v77
    %v214 = vunpack.c.l.b16 %v78
    %v215 = vunpack.c.l.b16 %v79
    %v216 = vunpack.c.l.b16 %v80
    %v217 = vunpack.c.l.b16 %v81
    %v218 = vunpack.c.l.b16 %v82
    %v219 = vunpack.c.l.b16 %v83
    %v220 = vunpack.c.l.b16 %v84
    %v221 = vunpack.c.l.b16 %v85
    %v222 = vunpack.c.l.b16 %v86
    %v223 = vunpack.c.l.b16 %v87
    %v224 = vunpack.c.l.b16 %v88
    %v225 = vunpack.c.l.b16 %v89
    %v226 = vunpack.c.l.b16 %v90
    %v227 = vunpack.c.l.b16 %v91
    %v228 = vunpack.c.l.b16 %v92
    %v229 = vunpack.c.l.b16 %v93
    %v230 = vunpack.c.l.b16 %v94
    %v231 = vunpack.c.l.b16 %v95
    %v232 = vunpack.c.l.b16 %v96
    %v233 = vunpack.c.l.b16 %v97
    %v234 = vpack.c.b16 %v171, %v170
    %v235 = vpack.c.b16 %v173, %v172
    %v236 = vpack.c.b16 %v175, %v174
    %v237 = vpack.c.b16 %v177, %v176
    %v238 = vpack.c.b16 %v179, %v178
    %v239 = vpack.c.b16 %v181, %v180
    %v240 = vpack.c.b16 %v183, %v182
    %v241 = vpack.c.b16 %v185, %v184
    %v242 = vpack.c.b16 %v187, %v186
    %v243 = vpack.c.b16 %v189, %v188
    %v244 = vpack.c.b16 %v191, %v190
    %v245 = vpack.c.b16 %v193, %v192
    %v246 = vpack.c.b16 %v195, %v194
    %v247 = vpack.c.b16 %v197, %v196
    %v248 = vpack.c.b16 %v199, %v198
    %v249 = vpack.c.b16 %v201, %v200
    %v250 = vpack.c.b16 %v203, %v202
    %v251 = vpack.c.b16 %v205, %v204
    %v252 = vpack.c.b16 %v207, %v206
    %v253 = vpack.c.b16 %v209, %v208
    %v254 = vpack.c.b16 %v211, %v210
    %v255 = vpack.c.b16 %v213, %v212
    %v256 = vpack.c.b16 %v215, %v214
    %v257 = vpack.c.b16 %v217, %v216
    %v258 = vpack.c.b16 %v219, %v218
    %v259 = vpack.c.b16 %v221, %v220
    %v260 = vpack.c.b16 %v223, %v222
    %v261 = vpack.c.b16 %v225, %v224
    %v262 = vpack.c.b16 %v227, %v226
    %v263 = vpack.c.b16 %v229, %v228
    %v264 = vpack.c.b16 %v231, %v230
    %v265 = vpack.c.b16 %v233, %v232
    %v270 = vunpack.c.l.b16 %v98
    %v271 = vunpack.c.l.b16 %v99
    %v272 = vunpack.c.l.b16 %v100
    %v273 = vunpack.c.l.b16 %v101
    %v274 = vpack.c.b16 %v271, %v270
    %v275 = vpack.c.b16 %v273, %v272
    %vm278 = vcmask 261120
    %v280 = vsel %vm278, %v234, 0
    %v283 = vsel %vm278, %v235, 0
    %v286 = vsel %vm278, %v236, 0
    %v289 = vsel %vm278, %v237, 0
    %v292 = vsel %vm278, %v238, 0
    %v295 = vsel %vm278, %v239, 0
    %v298 = vsel %vm278, %v240, 0
    %v301 = vsel %vm278, %v241, 0
    %v304 = vsel %vm278, %v242, 0
    %v307 = vsel %vm278, %v243, 0
    %v310 = vsel %vm278, %v244, 0
    %v313 = vsel %vm278, %v245, 0
    %v316 = vsel %vm278, %v246, 0
    %v319 = vsel %vm278, %v247, 0
    %v322 = vsel %vm278, %v248, 0
    %v325 = vsel %vm278, %v249, 0
    %v328 = vsel %vm278, %v250, 0
    %v331 = vsel %vm278, %v251, 0
    %v334 = vsel %vm278, %v252, 0
    %v337 = vsel %vm278, %v253, 0
    %v340 = vsel %vm278, %v254, 0
    %v343 = vsel %vm278, %v255, 0
    %v346 = vsel %vm278, %v256, 0
    %v349 = vsel %vm278, %v257, 0
    %v352 = vsel %vm278, %v258, 0
    %v355 = vsel %vm278, %v259, 0
    %v358 = vsel %vm278, %v260, 0
    %v361 = vsel %vm278, %v261, 0
    %v364 = vsel %vm278, %v262, 0
    %v367 = vsel %vm278, %v263, 0
    %v370 = vsel %vm278, %v264, 0
    %v373 = vsel %vm278, %v265, 0
    %375 = vmatpush.bf16.msra.mxu0 0
    %376 = vmatpush.bf16.msra.mxu0 0
    %377 = vmatpush.bf16.msra.mxu0 0
    %378 = vmatpush.bf16.msra.mxu0 0
    %379 = vmatpush.bf16.msra.mxu0 0
    %380 = vmatpush.bf16.msra.mxu0 0
    %381 = vmatpush.bf16.msra.mxu0 %v275
    %382 = vmatpush.bf16.msra.mxu0 %v274
    %383 = vmatmul.bf16.gmra.mxu0 %v280
    %v384 = vpop.f32.mrf.mxu0
    %v385 = vadd.f32 %v104, %v384
    %v386 = vpop.f32.mrf.mxu0
    %v387 = vadd.f32 %v104, %v386
    %388 = vmatmul.bf16.gmra.mxu0 %v283
    %v389 = vpop.f32.mrf.mxu0
    %v390 = vadd.f32 %v104, %v389
    %v391 = vpop.f32.mrf.mxu0
    %v392 = vadd.f32 %v104, %v391
    %393 = vmatmul.bf16.gmra.mxu0 %v286
    %v394 = vpop.f32.mrf.mxu0
    %v395 = vadd.f32 %v104, %v394
    %v396 = vpop.f32.mrf.mxu0
    %v397 = vadd.f32 %v104, %v396
    %398 = vmatmul.bf16.gmra.mxu0 %v289
    %v399 = vpop.f32.mrf.mxu0
    %v400 = vadd.f32 %v104, %v399
    %v401 = vpop.f32.mrf.mxu0
    %v402 = vadd.f32 %v104, %v401
    %403 = vmatmul.bf16.gmra.mxu0 %v292
    %v404 = vpop.f32.mrf.mxu0
    %v405 = vadd.f32 %v104, %v404
    %v406 = vpop.f32.mrf.mxu0
    %v407 = vadd.f32 %v104, %v406
    %408 = vmatmul.bf16.gmra.mxu0 %v295
    %v409 = vpop.f32.mrf.mxu0
    %v410 = vadd.f32 %v104, %v409
    %v411 = vpop.f32.mrf.mxu0
    %v412 = vadd.f32 %v104, %v411
    %413 = vmatmul.bf16.gmra.mxu0 %v298
    %v414 = vpop.f32.mrf.mxu0
    %v415 = vadd.f32 %v104, %v414
    %v416 = vpop.f32.mrf.mxu0
    %v417 = vadd.f32 %v104, %v416
    %418 = vmatmul.bf16.gmra.mxu0 %v301
    %v419 = vpop.f32.mrf.mxu0
    %v420 = vadd.f32 %v104, %v419
    %v421 = vpop.f32.mrf.mxu0
    %v422 = vadd.f32 %v104, %v421
    %423 = vmatmul.bf16.gmra.mxu0 %v304
    %v424 = vpop.f32.mrf.mxu0
    %v425 = vadd.f32 %v104, %v424
    %v426 = vpop.f32.mrf.mxu0
    %v427 = vadd.f32 %v104, %v426
    %428 = vmatmul.bf16.gmra.mxu0 %v307
    %v429 = vpop.f32.mrf.mxu0
    %v430 = vadd.f32 %v104, %v429
    %v431 = vpop.f32.mrf.mxu0
    %v432 = vadd.f32 %v104, %v431
    %433 = vmatmul.bf16.gmra.mxu0 %v310
    %v434 = vpop.f32.mrf.mxu0
    %v435 = vadd.f32 %v104, %v434
    %v436 = vpop.f32.mrf.mxu0
    %v437 = vadd.f32 %v104, %v436
    %438 = vmatmul.bf16.gmra.mxu0 %v313
    %v439 = vpop.f32.mrf.mxu0
    %v440 = vadd.f32 %v104, %v439
    %v441 = vpop.f32.mrf.mxu0
    %v442 = vadd.f32 %v104, %v441
    %443 = vmatmul.bf16.gmra.mxu0 %v316
    %v444 = vpop.f32.mrf.mxu0
    %v445 = vadd.f32 %v104, %v444
    %v446 = vpop.f32.mrf.mxu0
    %v447 = vadd.f32 %v104, %v446
    %448 = vmatmul.bf16.gmra.mxu0 %v319
    %v449 = vpop.f32.mrf.mxu0
    %v450 = vadd.f32 %v104, %v449
    %v451 = vpop.f32.mrf.mxu0
    %v452 = vadd.f32 %v104, %v451
    %453 = vmatmul.bf16.gmra.mxu0 %v322
    %v454 = vpop.f32.mrf.mxu0
    %v455 = vadd.f32 %v104, %v454
    %v456 = vpop.f32.mrf.mxu0
    %v457 = vadd.f32 %v104, %v456
    %458 = vmatmul.bf16.gmra.mxu0 %v325
    %v459 = vpop.f32.mrf.mxu0
    %v460 = vadd.f32 %v104, %v459
    %v461 = vpop.f32.mrf.mxu0
    %v462 = vadd.f32 %v104, %v461
    %463 = vmatmul.bf16.gmra.mxu0 %v328
    %v464 = vpop.f32.mrf.mxu0
    %v465 = vadd.f32 %v104, %v464
    %v466 = vpop.f32.mrf.mxu0
    %v467 = vadd.f32 %v104, %v466
    %468 = vmatmul.bf16.gmra.mxu0 %v331
    %v469 = vpop.f32.mrf.mxu0
    %v470 = vadd.f32 %v104, %v469
    %v471 = vpop.f32.mrf.mxu0
    %v472 = vadd.f32 %v104, %v471
    %473 = vmatmul.bf16.gmra.mxu0 %v334
    %v474 = vpop.f32.mrf.mxu0
    %v475 = vadd.f32 %v104, %v474
    %v476 = vpop.f32.mrf.mxu0
    %v477 = vadd.f32 %v104, %v476
    %478 = vmatmul.bf16.gmra.mxu0 %v337
    %v479 = vpop.f32.mrf.mxu0
    %v480 = vadd.f32 %v104, %v479
    %v481 = vpop.f32.mrf.mxu0
    %v482 = vadd.f32 %v104, %v481
    %483 = vmatmul.bf16.gmra.mxu0 %v340
    %v484 = vpop.f32.mrf.mxu0
    %v485 = vadd.f32 %v104, %v484
    %v486 = vpop.f32.mrf.mxu0
    %v487 = vadd.f32 %v104, %v486
    %488 = vmatmul.bf16.gmra.mxu0 %v343
    %v489 = vpop.f32.mrf.mxu0
    %v490 = vadd.f32 %v104, %v489
    %v491 = vpop.f32.mrf.mxu0
    %v492 = vadd.f32 %v104, %v491
    %493 = vmatmul.bf16.gmra.mxu0 %v346
    %v494 = vpop.f32.mrf.mxu0
    %v495 = vadd.f32 %v104, %v494
    %v496 = vpop.f32.mrf.mxu0
    %v497 = vadd.f32 %v104, %v496
    %498 = vmatmul.bf16.gmra.mxu0 %v349
    %v499 = vpop.f32.mrf.mxu0
    %v500 = vadd.f32 %v104, %v499
    %v501 = vpop.f32.mrf.mxu0
    %v502 = vadd.f32 %v104, %v501
    %503 = vmatmul.bf16.gmra.mxu0 %v352
    %v504 = vpop.f32.mrf.mxu0
    %v505 = vadd.f32 %v104, %v504
    %v506 = vpop.f32.mrf.mxu0
    %v507 = vadd.f32 %v104, %v506
    %508 = vmatmul.bf16.gmra.mxu0 %v355
    %v509 = vpop.f32.mrf.mxu0
    %v510 = vadd.f32 %v104, %v509
    %v511 = vpop.f32.mrf.mxu0
    %v512 = vadd.f32 %v104, %v511
    %513 = vmatmul.bf16.gmra.mxu0 %v358
    %v514 = vpop.f32.mrf.mxu0
    %v515 = vadd.f32 %v104, %v514
    %v516 = vpop.f32.mrf.mxu0
    %v517 = vadd.f32 %v104, %v516
    %518 = vmatmul.bf16.gmra.mxu0 %v361
    %v519 = vpop.f32.mrf.mxu0
    %v520 = vadd.f32 %v104, %v519
    %v521 = vpop.f32.mrf.mxu0
    %v522 = vadd.f32 %v104, %v521
    %523 = vmatmul.bf16.gmra.mxu0 %v364
    %v524 = vpop.f32.mrf.mxu0
    %v525 = vadd.f32 %v104, %v524
    %v526 = vpop.f32.mrf.mxu0
    %v527 = vadd.f32 %v104, %v526
    %528 = vmatmul.bf16.gmra.mxu0 %v367
    %v529 = vpop.f32.mrf.mxu0
    %v530 = vadd.f32 %v104, %v529
    %v531 = vpop.f32.mrf.mxu0
    %v532 = vadd.f32 %v104, %v531
    %533 = vmatmul.bf16.gmra.mxu0 %v370
    %v534 = vpop.f32.mrf.mxu0
    %v535 = vadd.f32 %v104, %v534
    %v536 = vpop.f32.mrf.mxu0
    %v537 = vadd.f32 %v104, %v536
    %538 = vmatmul.bf16.gmra.mxu0 %v373
    %v539 = vpop.f32.mrf.mxu0
    %v540 = vadd.f32 %v104, %v539
    %v541 = vpop.f32.mrf.mxu0
    %v542 = vadd.f32 %v104, %v541
    %543 = vdwg.mxu0
    %v544 = vmax.f32 %v385, 0.0
    %v545 = vmax.f32 %v387, 0.0
    %v546 = vmax.f32 %v390, 0.0
    %v547 = vmax.f32 %v392, 0.0
    %v548 = vmax.f32 %v395, 0.0
    %v549 = vmax.f32 %v397, 0.0
    %v550 = vmax.f32 %v400, 0.0
    %v551 = vmax.f32 %v402, 0.0
    %v552 = vmax.f32 %v405, 0.0
    %v553 = vmax.f32 %v407, 0.0
    %v554 = vmax.f32 %v410, 0.0
    %v555 = vmax.f32 %v412, 0.0
    %v556 = vmax.f32 %v415, 0.0
    %v557 = vmax.f32 %v417, 0.0
    %v558 = vmax.f32 %v420, 0.0
    %v559 = vmax.f32 %v422, 0.0
    %v560 = vmax.f32 %v425, 0.0
    %v561 = vmax.f32 %v427, 0.0
    %v562 = vmax.f32 %v430, 0.0
    %v563 = vmax.f32 %v432, 0.0
    %v564 = vmax.f32 %v435, 0.0
    %v565 = vmax.f32 %v437, 0.0
    %v566 = vmax.f32 %v440, 0.0
    %v567 = vmax.f32 %v442, 0.0
    %v568 = vmax.f32 %v445, 0.0
    %v569 = vmax.f32 %v447, 0.0
    %v570 = vmax.f32 %v450, 0.0
    %v571 = vmax.f32 %v452, 0.0
    %v572 = vmax.f32 %v455, 0.0
    %v573 = vmax.f32 %v457, 0.0
    %v574 = vmax.f32 %v460, 0.0
    %v575 = vmax.f32 %v462, 0.0
    %v576 = vmax.f32 %v465, 0.0
    %v577 = vmax.f32 %v467, 0.0
    %v578 = vmax.f32 %v470, 0.0
    %v579 = vmax.f32 %v472, 0.0
    %v580 = vmax.f32 %v475, 0.0
    %v581 = vmax.f32 %v477, 0.0
    %v582 = vmax.f32 %v480, 0.0
    %v583 = vmax.f32 %v482, 0.0
    %v584 = vmax.f32 %v485, 0.0
    %v585 = vmax.f32 %v487, 0.0
    %v586 = vmax.f32 %v490, 0.0
    %v587 = vmax.f32 %v492, 0.0
    %v588 = vmax.f32 %v495, 0.0
    %v589 = vmax.f32 %v497, 0.0
    %v590 = vmax.f32 %v500, 0.0
    %v591 = vmax.f32 %v502, 0.0
    %v592 = vmax.f32 %v505, 0.0
    %v593 = vmax.f32 %v507, 0.0
    %v594 = vmax.f32 %v510, 0.0
    %v595 = vmax.f32 %v512, 0.0
    %v596 = vmax.f32 %v515, 0.0
    %v597 = vmax.f32 %v517, 0.0
    %v598 = vmax.f32 %v520, 0.0
    %v599 = vmax.f32 %v522, 0.0
    %v600 = vmax.f32 %v525, 0.0
    %v601 = vmax.f32 %v527, 0.0
    %v602 = vmax.f32 %v530, 0.0
    %v603 = vmax.f32 %v532, 0.0
    %v604 = vmax.f32 %v535, 0.0
    %v605 = vmax.f32 %v537, 0.0
    %v606 = vmax.f32 %v540, 0.0
    %v607 = vmax.f32 %v542, 0.0
    %vm608 = vcmask 523264
    %v609 = vsel %vm608, %v544, -inf
    %v610 = vsel %vm608, %v546, -inf
    %v611 = vmax.f32 %v609, %v610
    %v612 = vsel %vm608, %v545, -inf
    %v613 = vsel %vm608, %v547, -inf
    %v614 = vmax.f32 %v612, %v613
    %v615 = vsel %vm608, %v548, -inf
    %v616 = vsel %vm608, %v550, -inf
    %v617 = vmax.f32 %v615, %v616
    %v618 = vsel %vm608, %v549, -inf
    %v619 = vsel %vm608, %v551, -inf
    %v620 = vmax.f32 %v618, %v619
    %v621 = vsel %vm608, %v552, -inf
    %v622 = vsel %vm608, %v554, -inf
    %v623 = vmax.f32 %v621, %v622
    %v624 = vsel %vm608, %v553, -inf
    %v625 = vsel %vm608, %v555, -inf
    %v626 = vmax.f32 %v624, %v625
    %v627 = vsel %vm608, %v556, -inf
    %v628 = vsel %vm608, %v558, -inf
    %v629 = vmax.f32 %v627, %v628
    %v630 = vsel %vm608, %v557, -inf
    %v631 = vsel %vm608, %v559, -inf
    %v632 = vmax.f32 %v630, %v631
    %v633 = vsel %vm608, %v560, -inf
    %v634 = vsel %vm608, %v562, -inf
    %v635 = vmax.f32 %v633, %v634
    %v636 = vsel %vm608, %v561, -inf
    %v637 = vsel %vm608, %v563, -inf
    %v638 = vmax.f32 %v636, %v637
    %v639 = vsel %vm608, %v564, -inf
    %v640 = vsel %vm608, %v566, -inf
    %v641 = vmax.f32 %v639, %v640
    %v642 = vsel %vm608, %v565, -inf
    %v643 = vsel %vm608, %v567, -inf
    %v644 = vmax.f32 %v642, %v643
    %v645 = vsel %vm608, %v568, -inf
    %v646 = vsel %vm608, %v570, -inf
    %v647 = vmax.f32 %v645, %v646
    %v648 = vsel %vm608, %v569, -inf
    %v649 = vsel %vm608, %v571, -inf
    %v650 = vmax.f32 %v648, %v649
    %v651 = vsel %vm608, %v572, -inf
    %v652 = vsel %vm608, %v574, -inf
    %v653 = vmax.f32 %v651, %v652
    %v654 = vsel %vm608, %v573, -inf
    %v655 = vsel %vm608, %v575, -inf
    %v656 = vmax.f32 %v654, %v655
    %v657 = vsel %vm608, %v576, -inf
    %v658 = vsel %vm608, %v578, -inf
    %v659 = vmax.f32 %v657, %v658
    %v660 = vsel %vm608, %v577, -inf
    %v661 = vsel %vm608, %v579, -inf
    %v662 = vmax.f32 %v660, %v661
    %v663 = vsel %vm608, %v580, -inf
    %v664 = vsel %vm608, %v582, -inf
    %v665 = vmax.f32 %v663, %v664
    %v666 = vsel %vm608, %v581, -inf
    %v667 = vsel %vm608, %v583, -inf
    %v668 = vmax.f32 %v666, %v667
    %v669 = vsel %vm608, %v584, -inf
    %v670 = vsel %vm608, %v586, -inf
    %v671 = vmax.f32 %v669, %v670
    %v672 = vsel %vm608, %v585, -inf
    %v673 = vsel %vm608, %v587, -inf
    %v674 = vmax.f32 %v672, %v673
    %v675 = vsel %vm608, %v588, -inf
    %v676 = vsel %vm608, %v590, -inf
    %v677 = vmax.f32 %v675, %v676
    %v678 = vsel %vm608, %v589, -inf
    %v679 = vsel %vm608, %v591, -inf
    %v680 = vmax.f32 %v678, %v679
    %v681 = vsel %vm608, %v592, -inf
    %v682 = vsel %vm608, %v594, -inf
    %v683 = vmax.f32 %v681, %v682
    %v684 = vsel %vm608, %v593, -inf
    %v685 = vsel %vm608, %v595, -inf
    %v686 = vmax.f32 %v684, %v685
    %v687 = vsel %vm608, %v596, -inf
    %v688 = vsel %vm608, %v598, -inf
    %v689 = vmax.f32 %v687, %v688
    %v690 = vsel %vm608, %v597, -inf
    %v691 = vsel %vm608, %v599, -inf
    %v692 = vmax.f32 %v690, %v691
    %v693 = vsel %vm608, %v600, -inf
    %v694 = vsel %vm608, %v602, -inf
    %v695 = vmax.f32 %v693, %v694
    %v696 = vsel %vm608, %v601, -inf
    %v697 = vsel %vm608, %v603, -inf
    %v698 = vmax.f32 %v696, %v697
    %v699 = vsel %vm608, %v604, -inf
    %v700 = vsel %vm608, %v606, -inf
    %v701 = vmax.f32 %v699, %v700
    %v702 = vsel %vm608, %v605, -inf
    %v703 = vsel %vm608, %v607, -inf
    %v704 = vmax.f32 %v702, %v703
    %v737 = vrot.slane %v611, 2
    %v738 = vrot.slane %v611, 4
    %v739 = vrot.slane %v611, 6
    %v740 = vrot.slane %v614, 2
    %v741 = vrot.slane %v614, 4
    %v742 = vrot.slane %v614, 6
    %v743 = vrot.slane %v617, 2
    %v744 = vrot.slane %v617, 4
    %v745 = vrot.slane %v617, 6
    %v746 = vrot.slane %v620, 2
    %v747 = vrot.slane %v620, 4
    %v748 = vrot.slane %v620, 6
    %v749 = vrot.slane %v623, 2
    %v750 = vrot.slane %v623, 4
    %v751 = vrot.slane %v623, 6
    %v752 = vrot.slane %v626, 2
    %v753 = vrot.slane %v626, 4
    %v754 = vrot.slane %v626, 6
    %v755 = vrot.slane %v629, 2
    %v756 = vrot.slane %v629, 4
    %v757 = vrot.slane %v629, 6
    %v758 = vrot.slane %v632, 2
    %v759 = vrot.slane %v632, 4
    %v760 = vrot.slane %v632, 6
    %v761 = vrot.slane %v635, 2
    %v762 = vrot.slane %v635, 4
    %v763 = vrot.slane %v635, 6
    %v764 = vrot.slane %v638, 2
    %v765 = vrot.slane %v638, 4
    %v766 = vrot.slane %v638, 6
    %v767 = vrot.slane %v641, 2
    %v768 = vrot.slane %v641, 4
    %v769 = vrot.slane %v641, 6
    %v770 = vrot.slane %v644, 2
    %v771 = vrot.slane %v644, 4
    %v772 = vrot.slane %v644, 6
    %v773 = vrot.slane %v647, 2
    %v774 = vrot.slane %v647, 4
    %v775 = vrot.slane %v647, 6
    %v776 = vrot.slane %v650, 2
    %v777 = vrot.slane %v650, 4
    %v778 = vrot.slane %v650, 6
    %v779 = vrot.slane %v653, 2
    %v780 = vrot.slane %v653, 4
    %v781 = vrot.slane %v653, 6
    %v782 = vrot.slane %v656, 2
    %v783 = vrot.slane %v656, 4
    %v784 = vrot.slane %v656, 6
    %v785 = vrot.slane %v659, 2
    %v786 = vrot.slane %v659, 4
    %v787 = vrot.slane %v659, 6
    %v788 = vrot.slane %v662, 2
    %v789 = vrot.slane %v662, 4
    %v790 = vrot.slane %v662, 6
    %v791 = vrot.slane %v665, 2
    %v792 = vrot.slane %v665, 4
    %v793 = vrot.slane %v665, 6
    %v794 = vrot.slane %v668, 2
    %v795 = vrot.slane %v668, 4
    %v796 = vrot.slane %v668, 6
    %v797 = vrot.slane %v671, 2
    %v798 = vrot.slane %v671, 4
    %v799 = vrot.slane %v671, 6
    %v800 = vrot.slane %v674, 2
    %v801 = vrot.slane %v674, 4
    %v802 = vrot.slane %v674, 6
    %v803 = vrot.slane %v677, 2
    %v804 = vrot.slane %v677, 4
    %v805 = vrot.slane %v677, 6
    %v806 = vrot.slane %v680, 2
    %v807 = vrot.slane %v680, 4
    %v808 = vrot.slane %v680, 6
    %v809 = vrot.slane %v683, 2
    %v810 = vrot.slane %v683, 4
    %v811 = vrot.slane %v683, 6
    %v812 = vrot.slane %v686, 2
    %v813 = vrot.slane %v686, 4
    %v814 = vrot.slane %v686, 6
    %v815 = vrot.slane %v689, 2
    %v816 = vrot.slane %v689, 4
    %v817 = vrot.slane %v689, 6
    %v818 = vrot.slane %v692, 2
    %v819 = vrot.slane %v692, 4
    %v820 = vrot.slane %v692, 6
    %v821 = vrot.slane %v695, 2
    %v822 = vrot.slane %v695, 4
    %v823 = vrot.slane %v695, 6
    %v824 = vrot.slane %v698, 2
    %v825 = vrot.slane %v698, 4
    %v826 = vrot.slane %v698, 6
    %v827 = vrot.slane %v701, 2
    %v828 = vrot.slane %v701, 4
    %v829 = vrot.slane %v701, 6
    %v830 = vrot.slane %v704, 2
    %v831 = vrot.slane %v704, 4
    %v832 = vrot.slane %v704, 6
    %vm929 = vcmask 517120
    %v930 = vsel %vm929, %v611, -inf
    %v931 = vrot.slane %v930, 4
    %v932 = vmax.f32 %v930, %v931
    %v933 = vrot.slane %v932, 2
    %v934 = vmax.f32 %v932, %v933
    %v935 = vrot.slane %v934, 1
    %v936 = vmax.f32 %v934, %v935
    %v937 = vsel %vm929, %v737, -inf
    %v938 = vrot.slane %v937, 4
    %v939 = vmax.f32 %v937, %v938
    %v940 = vrot.slane %v939, 2
    %v941 = vmax.f32 %v939, %v940
    %v942 = vrot.slane %v941, 1
    %v943 = vmax.f32 %v941, %v942
    %v944 = vsel %vm929, %v738, -inf
    %v945 = vrot.slane %v944, 4
    %v946 = vmax.f32 %v944, %v945
    %v947 = vrot.slane %v946, 2
    %v948 = vmax.f32 %v946, %v947
    %v949 = vrot.slane %v948, 1
    %v950 = vmax.f32 %v948, %v949
    %v951 = vsel %vm929, %v739, -inf
    %v952 = vrot.slane %v951, 4
    %v953 = vmax.f32 %v951, %v952
    %v954 = vrot.slane %v953, 2
    %v955 = vmax.f32 %v953, %v954
    %v956 = vrot.slane %v955, 1
    %v957 = vmax.f32 %v955, %v956
    %v958 = vsel %vm929, %v614, -inf
    %v959 = vrot.slane %v958, 4
    %v960 = vmax.f32 %v958, %v959
    %v961 = vrot.slane %v960, 2
    %v962 = vmax.f32 %v960, %v961
    %v963 = vrot.slane %v962, 1
    %v964 = vmax.f32 %v962, %v963
    %v965 = vsel %vm929, %v740, -inf
    %v966 = vrot.slane %v965, 4
    %v967 = vmax.f32 %v965, %v966
    %v968 = vrot.slane %v967, 2
    %v969 = vmax.f32 %v967, %v968
    %v970 = vrot.slane %v969, 1
    %v971 = vmax.f32 %v969, %v970
    %v972 = vsel %vm929, %v741, -inf
    %v973 = vrot.slane %v972, 4
    %v974 = vmax.f32 %v972, %v973
    %v975 = vrot.slane %v974, 2
    %v976 = vmax.f32 %v974, %v975
    %v977 = vrot.slane %v976, 1
    %v978 = vmax.f32 %v976, %v977
    %v979 = vsel %vm929, %v742, -inf
    %v980 = vrot.slane %v979, 4
    %v981 = vmax.f32 %v979, %v980
    %v982 = vrot.slane %v981, 2
    %v983 = vmax.f32 %v981, %v982
    %v984 = vrot.slane %v983, 1
    %v985 = vmax.f32 %v983, %v984
    %v986 = vsel %vm929, %v617, -inf
    %v987 = vrot.slane %v986, 4
    %v988 = vmax.f32 %v986, %v987
    %v989 = vrot.slane %v988, 2
    %v990 = vmax.f32 %v988, %v989
    %v991 = vrot.slane %v990, 1
    %v992 = vmax.f32 %v990, %v991
    %v993 = vsel %vm929, %v743, -inf
    %v994 = vrot.slane %v993, 4
    %v995 = vmax.f32 %v993, %v994
    %v996 = vrot.slane %v995, 2
    %v997 = vmax.f32 %v995, %v996
    %v998 = vrot.slane %v997, 1
    %v999 = vmax.f32 %v997, %v998
    %v1000 = vsel %vm929, %v744, -inf
    %v1001 = vrot.slane %v1000, 4
    %v1002 = vmax.f32 %v1000, %v1001
    %v1003 = vrot.slane %v1002, 2
    %v1004 = vmax.f32 %v1002, %v1003
    %v1005 = vrot.slane %v1004, 1
    %v1006 = vmax.f32 %v1004, %v1005
    %v1007 = vsel %vm929, %v745, -inf
    %v1008 = vrot.slane %v1007, 4
    %v1009 = vmax.f32 %v1007, %v1008
    %v1010 = vrot.slane %v1009, 2
    %v1011 = vmax.f32 %v1009, %v1010
    %v1012 = vrot.slane %v1011, 1
    %v1013 = vmax.f32 %v1011, %v1012
    %v1014 = vsel %vm929, %v620, -inf
    %v1015 = vrot.slane %v1014, 4
    %v1016 = vmax.f32 %v1014, %v1015
    %v1017 = vrot.slane %v1016, 2
    %v1018 = vmax.f32 %v1016, %v1017
    %v1019 = vrot.slane %v1018, 1
    %v1020 = vmax.f32 %v1018, %v1019
    %v1021 = vsel %vm929, %v746, -inf
    %v1022 = vrot.slane %v1021, 4
    %v1023 = vmax.f32 %v1021, %v1022
    %v1024 = vrot.slane %v1023, 2
    %v1025 = vmax.f32 %v1023, %v1024
    %v1026 = vrot.slane %v1025, 1
    %v1027 = vmax.f32 %v1025, %v1026
    %v1028 = vsel %vm929, %v747, -inf
    %v1029 = vrot.slane %v1028, 4
    %v1030 = vmax.f32 %v1028, %v1029
    %v1031 = vrot.slane %v1030, 2
    %v1032 = vmax.f32 %v1030, %v1031
    %v1033 = vrot.slane %v1032, 1
    %v1034 = vmax.f32 %v1032, %v1033
    %v1035 = vsel %vm929, %v748, -inf
    %v1036 = vrot.slane %v1035, 4
    %v1037 = vmax.f32 %v1035, %v1036
    %v1038 = vrot.slane %v1037, 2
    %v1039 = vmax.f32 %v1037, %v1038
    %v1040 = vrot.slane %v1039, 1
    %v1041 = vmax.f32 %v1039, %v1040
    %v1042 = vsel %vm929, %v623, -inf
    %v1043 = vrot.slane %v1042, 4
    %v1044 = vmax.f32 %v1042, %v1043
    %v1045 = vrot.slane %v1044, 2
    %v1046 = vmax.f32 %v1044, %v1045
    %v1047 = vrot.slane %v1046, 1
    %v1048 = vmax.f32 %v1046, %v1047
    %v1049 = vsel %vm929, %v749, -inf
    %v1050 = vrot.slane %v1049, 4
    %v1051 = vmax.f32 %v1049, %v1050
    %v1052 = vrot.slane %v1051, 2
    %v1053 = vmax.f32 %v1051, %v1052
    %v1054 = vrot.slane %v1053, 1
    %v1055 = vmax.f32 %v1053, %v1054
    %v1056 = vsel %vm929, %v750, -inf
    %v1057 = vrot.slane %v1056, 4
    %v1058 = vmax.f32 %v1056, %v1057
    %v1059 = vrot.slane %v1058, 2
    %v1060 = vmax.f32 %v1058, %v1059
    %v1061 = vrot.slane %v1060, 1
    %v1062 = vmax.f32 %v1060, %v1061
    %v1063 = vsel %vm929, %v751, -inf
    %v1064 = vrot.slane %v1063, 4
    %v1065 = vmax.f32 %v1063, %v1064
    %v1066 = vrot.slane %v1065, 2
    %v1067 = vmax.f32 %v1065, %v1066
    %v1068 = vrot.slane %v1067, 1
    %v1069 = vmax.f32 %v1067, %v1068
    %v1070 = vsel %vm929, %v626, -inf
    %v1071 = vrot.slane %v1070, 4
    %v1072 = vmax.f32 %v1070, %v1071
    %v1073 = vrot.slane %v1072, 2
    %v1074 = vmax.f32 %v1072, %v1073
    %v1075 = vrot.slane %v1074, 1
    %v1076 = vmax.f32 %v1074, %v1075
    %v1077 = vsel %vm929, %v752, -inf
    %v1078 = vrot.slane %v1077, 4
    %v1079 = vmax.f32 %v1077, %v1078
    %v1080 = vrot.slane %v1079, 2
    %v1081 = vmax.f32 %v1079, %v1080
    %v1082 = vrot.slane %v1081, 1
    %v1083 = vmax.f32 %v1081, %v1082
    %v1084 = vsel %vm929, %v753, -inf
    %v1085 = vrot.slane %v1084, 4
    %v1086 = vmax.f32 %v1084, %v1085
    %v1087 = vrot.slane %v1086, 2
    %v1088 = vmax.f32 %v1086, %v1087
    %v1089 = vrot.slane %v1088, 1
    %v1090 = vmax.f32 %v1088, %v1089
    %v1091 = vsel %vm929, %v754, -inf
    %v1092 = vrot.slane %v1091, 4
    %v1093 = vmax.f32 %v1091, %v1092
    %v1094 = vrot.slane %v1093, 2
    %v1095 = vmax.f32 %v1093, %v1094
    %v1096 = vrot.slane %v1095, 1
    %v1097 = vmax.f32 %v1095, %v1096
    %v1098 = vsel %vm929, %v629, -inf
    %v1099 = vrot.slane %v1098, 4
    %v1100 = vmax.f32 %v1098, %v1099
    %v1101 = vrot.slane %v1100, 2
    %v1102 = vmax.f32 %v1100, %v1101
    %v1103 = vrot.slane %v1102, 1
    %v1104 = vmax.f32 %v1102, %v1103
    %v1105 = vsel %vm929, %v755, -inf
    %v1106 = vrot.slane %v1105, 4
    %v1107 = vmax.f32 %v1105, %v1106
    %v1108 = vrot.slane %v1107, 2
    %v1109 = vmax.f32 %v1107, %v1108
    %v1110 = vrot.slane %v1109, 1
    %v1111 = vmax.f32 %v1109, %v1110
    %v1112 = vsel %vm929, %v756, -inf
    %v1113 = vrot.slane %v1112, 4
    %v1114 = vmax.f32 %v1112, %v1113
    %v1115 = vrot.slane %v1114, 2
    %v1116 = vmax.f32 %v1114, %v1115
    %v1117 = vrot.slane %v1116, 1
    %v1118 = vmax.f32 %v1116, %v1117
    %v1119 = vsel %vm929, %v757, -inf
    %v1120 = vrot.slane %v1119, 4
    %v1121 = vmax.f32 %v1119, %v1120
    %v1122 = vrot.slane %v1121, 2
    %v1123 = vmax.f32 %v1121, %v1122
    %v1124 = vrot.slane %v1123, 1
    %v1125 = vmax.f32 %v1123, %v1124
    %v1126 = vsel %vm929, %v632, -inf
    %v1127 = vrot.slane %v1126, 4
    %v1128 = vmax.f32 %v1126, %v1127
    %v1129 = vrot.slane %v1128, 2
    %v1130 = vmax.f32 %v1128, %v1129
    %v1131 = vrot.slane %v1130, 1
    %v1132 = vmax.f32 %v1130, %v1131
    %v1133 = vsel %vm929, %v758, -inf
    %v1134 = vrot.slane %v1133, 4
    %v1135 = vmax.f32 %v1133, %v1134
    %v1136 = vrot.slane %v1135, 2
    %v1137 = vmax.f32 %v1135, %v1136
    %v1138 = vrot.slane %v1137, 1
    %v1139 = vmax.f32 %v1137, %v1138
    %v1140 = vsel %vm929, %v759, -inf
    %v1141 = vrot.slane %v1140, 4
    %v1142 = vmax.f32 %v1140, %v1141
    %v1143 = vrot.slane %v1142, 2
    %v1144 = vmax.f32 %v1142, %v1143
    %v1145 = vrot.slane %v1144, 1
    %v1146 = vmax.f32 %v1144, %v1145
    %v1147 = vsel %vm929, %v760, -inf
    %v1148 = vrot.slane %v1147, 4
    %v1149 = vmax.f32 %v1147, %v1148
    %v1150 = vrot.slane %v1149, 2
    %v1151 = vmax.f32 %v1149, %v1150
    %v1152 = vrot.slane %v1151, 1
    %v1153 = vmax.f32 %v1151, %v1152
    %v1154 = vsel %vm929, %v635, -inf
    %v1155 = vrot.slane %v1154, 4
    %v1156 = vmax.f32 %v1154, %v1155
    %v1157 = vrot.slane %v1156, 2
    %v1158 = vmax.f32 %v1156, %v1157
    %v1159 = vrot.slane %v1158, 1
    %v1160 = vmax.f32 %v1158, %v1159
    %v1161 = vsel %vm929, %v761, -inf
    %v1162 = vrot.slane %v1161, 4
    %v1163 = vmax.f32 %v1161, %v1162
    %v1164 = vrot.slane %v1163, 2
    %v1165 = vmax.f32 %v1163, %v1164
    %v1166 = vrot.slane %v1165, 1
    %v1167 = vmax.f32 %v1165, %v1166
    %v1168 = vsel %vm929, %v762, -inf
    %v1169 = vrot.slane %v1168, 4
    %v1170 = vmax.f32 %v1168, %v1169
    %v1171 = vrot.slane %v1170, 2
    %v1172 = vmax.f32 %v1170, %v1171
    %v1173 = vrot.slane %v1172, 1
    %v1174 = vmax.f32 %v1172, %v1173
    %v1175 = vsel %vm929, %v763, -inf
    %v1176 = vrot.slane %v1175, 4
    %v1177 = vmax.f32 %v1175, %v1176
    %v1178 = vrot.slane %v1177, 2
    %v1179 = vmax.f32 %v1177, %v1178
    %v1180 = vrot.slane %v1179, 1
    %v1181 = vmax.f32 %v1179, %v1180
    %v1182 = vsel %vm929, %v638, -inf
    %v1183 = vrot.slane %v1182, 4
    %v1184 = vmax.f32 %v1182, %v1183
    %v1185 = vrot.slane %v1184, 2
    %v1186 = vmax.f32 %v1184, %v1185
    %v1187 = vrot.slane %v1186, 1
    %v1188 = vmax.f32 %v1186, %v1187
    %v1189 = vsel %vm929, %v764, -inf
    %v1190 = vrot.slane %v1189, 4
    %v1191 = vmax.f32 %v1189, %v1190
    %v1192 = vrot.slane %v1191, 2
    %v1193 = vmax.f32 %v1191, %v1192
    %v1194 = vrot.slane %v1193, 1
    %v1195 = vmax.f32 %v1193, %v1194
    %v1196 = vsel %vm929, %v765, -inf
    %v1197 = vrot.slane %v1196, 4
    %v1198 = vmax.f32 %v1196, %v1197
    %v1199 = vrot.slane %v1198, 2
    %v1200 = vmax.f32 %v1198, %v1199
    %v1201 = vrot.slane %v1200, 1
    %v1202 = vmax.f32 %v1200, %v1201
    %v1203 = vsel %vm929, %v766, -inf
    %v1204 = vrot.slane %v1203, 4
    %v1205 = vmax.f32 %v1203, %v1204
    %v1206 = vrot.slane %v1205, 2
    %v1207 = vmax.f32 %v1205, %v1206
    %v1208 = vrot.slane %v1207, 1
    %v1209 = vmax.f32 %v1207, %v1208
    %v1210 = vsel %vm929, %v641, -inf
    %v1211 = vrot.slane %v1210, 4
    %v1212 = vmax.f32 %v1210, %v1211
    %v1213 = vrot.slane %v1212, 2
    %v1214 = vmax.f32 %v1212, %v1213
    %v1215 = vrot.slane %v1214, 1
    %v1216 = vmax.f32 %v1214, %v1215
    %v1217 = vsel %vm929, %v767, -inf
    %v1218 = vrot.slane %v1217, 4
    %v1219 = vmax.f32 %v1217, %v1218
    %v1220 = vrot.slane %v1219, 2
    %v1221 = vmax.f32 %v1219, %v1220
    %v1222 = vrot.slane %v1221, 1
    %v1223 = vmax.f32 %v1221, %v1222
    %v1224 = vsel %vm929, %v768, -inf
    %v1225 = vrot.slane %v1224, 4
    %v1226 = vmax.f32 %v1224, %v1225
    %v1227 = vrot.slane %v1226, 2
    %v1228 = vmax.f32 %v1226, %v1227
    %v1229 = vrot.slane %v1228, 1
    %v1230 = vmax.f32 %v1228, %v1229
    %v1231 = vsel %vm929, %v769, -inf
    %v1232 = vrot.slane %v1231, 4
    %v1233 = vmax.f32 %v1231, %v1232
    %v1234 = vrot.slane %v1233, 2
    %v1235 = vmax.f32 %v1233, %v1234
    %v1236 = vrot.slane %v1235, 1
    %v1237 = vmax.f32 %v1235, %v1236
    %v1238 = vsel %vm929, %v644, -inf
    %v1239 = vrot.slane %v1238, 4
    %v1240 = vmax.f32 %v1238, %v1239
    %v1241 = vrot.slane %v1240, 2
    %v1242 = vmax.f32 %v1240, %v1241
    %v1243 = vrot.slane %v1242, 1
    %v1244 = vmax.f32 %v1242, %v1243
    %v1245 = vsel %vm929, %v770, -inf
    %v1246 = vrot.slane %v1245, 4
    %v1247 = vmax.f32 %v1245, %v1246
    %v1248 = vrot.slane %v1247, 2
    %v1249 = vmax.f32 %v1247, %v1248
    %v1250 = vrot.slane %v1249, 1
    %v1251 = vmax.f32 %v1249, %v1250
    %v1252 = vsel %vm929, %v771, -inf
    %v1253 = vrot.slane %v1252, 4
    %v1254 = vmax.f32 %v1252, %v1253
    %v1255 = vrot.slane %v1254, 2
    %v1256 = vmax.f32 %v1254, %v1255
    %v1257 = vrot.slane %v1256, 1
    %v1258 = vmax.f32 %v1256, %v1257
    %v1259 = vsel %vm929, %v772, -inf
    %v1260 = vrot.slane %v1259, 4
    %v1261 = vmax.f32 %v1259, %v1260
    %v1262 = vrot.slane %v1261, 2
    %v1263 = vmax.f32 %v1261, %v1262
    %v1264 = vrot.slane %v1263, 1
    %v1265 = vmax.f32 %v1263, %v1264
    %v1266 = vsel %vm929, %v647, -inf
    %v1267 = vrot.slane %v1266, 4
    %v1268 = vmax.f32 %v1266, %v1267
    %v1269 = vrot.slane %v1268, 2
    %v1270 = vmax.f32 %v1268, %v1269
    %v1271 = vrot.slane %v1270, 1
    %v1272 = vmax.f32 %v1270, %v1271
    %v1273 = vsel %vm929, %v773, -inf
    %v1274 = vrot.slane %v1273, 4
    %v1275 = vmax.f32 %v1273, %v1274
    %v1276 = vrot.slane %v1275, 2
    %v1277 = vmax.f32 %v1275, %v1276
    %v1278 = vrot.slane %v1277, 1
    %v1279 = vmax.f32 %v1277, %v1278
    %v1280 = vsel %vm929, %v774, -inf
    %v1281 = vrot.slane %v1280, 4
    %v1282 = vmax.f32 %v1280, %v1281
    %v1283 = vrot.slane %v1282, 2
    %v1284 = vmax.f32 %v1282, %v1283
    %v1285 = vrot.slane %v1284, 1
    %v1286 = vmax.f32 %v1284, %v1285
    %v1287 = vsel %vm929, %v775, -inf
    %v1288 = vrot.slane %v1287, 4
    %v1289 = vmax.f32 %v1287, %v1288
    %v1290 = vrot.slane %v1289, 2
    %v1291 = vmax.f32 %v1289, %v1290
    %v1292 = vrot.slane %v1291, 1
    %v1293 = vmax.f32 %v1291, %v1292
    %v1294 = vsel %vm929, %v650, -inf
    %v1295 = vrot.slane %v1294, 4
    %v1296 = vmax.f32 %v1294, %v1295
    %v1297 = vrot.slane %v1296, 2
    %v1298 = vmax.f32 %v1296, %v1297
    %v1299 = vrot.slane %v1298, 1
    %v1300 = vmax.f32 %v1298, %v1299
    %v1301 = vsel %vm929, %v776, -inf
    %v1302 = vrot.slane %v1301, 4
    %v1303 = vmax.f32 %v1301, %v1302
    %v1304 = vrot.slane %v1303, 2
    %v1305 = vmax.f32 %v1303, %v1304
    %v1306 = vrot.slane %v1305, 1
    %v1307 = vmax.f32 %v1305, %v1306
    %v1308 = vsel %vm929, %v777, -inf
    %v1309 = vrot.slane %v1308, 4
    %v1310 = vmax.f32 %v1308, %v1309
    %v1311 = vrot.slane %v1310, 2
    %v1312 = vmax.f32 %v1310, %v1311
    %v1313 = vrot.slane %v1312, 1
    %v1314 = vmax.f32 %v1312, %v1313
    %v1315 = vsel %vm929, %v778, -inf
    %v1316 = vrot.slane %v1315, 4
    %v1317 = vmax.f32 %v1315, %v1316
    %v1318 = vrot.slane %v1317, 2
    %v1319 = vmax.f32 %v1317, %v1318
    %v1320 = vrot.slane %v1319, 1
    %v1321 = vmax.f32 %v1319, %v1320
    %v1322 = vsel %vm929, %v653, -inf
    %v1323 = vrot.slane %v1322, 4
    %v1324 = vmax.f32 %v1322, %v1323
    %v1325 = vrot.slane %v1324, 2
    %v1326 = vmax.f32 %v1324, %v1325
    %v1327 = vrot.slane %v1326, 1
    %v1328 = vmax.f32 %v1326, %v1327
    %v1329 = vsel %vm929, %v779, -inf
    %v1330 = vrot.slane %v1329, 4
    %v1331 = vmax.f32 %v1329, %v1330
    %v1332 = vrot.slane %v1331, 2
    %v1333 = vmax.f32 %v1331, %v1332
    %v1334 = vrot.slane %v1333, 1
    %v1335 = vmax.f32 %v1333, %v1334
    %v1336 = vsel %vm929, %v780, -inf
    %v1337 = vrot.slane %v1336, 4
    %v1338 = vmax.f32 %v1336, %v1337
    %v1339 = vrot.slane %v1338, 2
    %v1340 = vmax.f32 %v1338, %v1339
    %v1341 = vrot.slane %v1340, 1
    %v1342 = vmax.f32 %v1340, %v1341
    %v1343 = vsel %vm929, %v781, -inf
    %v1344 = vrot.slane %v1343, 4
    %v1345 = vmax.f32 %v1343, %v1344
    %v1346 = vrot.slane %v1345, 2
    %v1347 = vmax.f32 %v1345, %v1346
    %v1348 = vrot.slane %v1347, 1
    %v1349 = vmax.f32 %v1347, %v1348
    %v1350 = vsel %vm929, %v656, -inf
    %v1351 = vrot.slane %v1350, 4
    %v1352 = vmax.f32 %v1350, %v1351
    %v1353 = vrot.slane %v1352, 2
    %v1354 = vmax.f32 %v1352, %v1353
    %v1355 = vrot.slane %v1354, 1
    %v1356 = vmax.f32 %v1354, %v1355
    %v1357 = vsel %vm929, %v782, -inf
    %v1358 = vrot.slane %v1357, 4
    %v1359 = vmax.f32 %v1357, %v1358
    %v1360 = vrot.slane %v1359, 2
    %v1361 = vmax.f32 %v1359, %v1360
    %v1362 = vrot.slane %v1361, 1
    %v1363 = vmax.f32 %v1361, %v1362
    %v1364 = vsel %vm929, %v783, -inf
    %v1365 = vrot.slane %v1364, 4
    %v1366 = vmax.f32 %v1364, %v1365
    %v1367 = vrot.slane %v1366, 2
    %v1368 = vmax.f32 %v1366, %v1367
    %v1369 = vrot.slane %v1368, 1
    %v1370 = vmax.f32 %v1368, %v1369
    %v1371 = vsel %vm929, %v784, -inf
    %v1372 = vrot.slane %v1371, 4
    %v1373 = vmax.f32 %v1371, %v1372
    %v1374 = vrot.slane %v1373, 2
    %v1375 = vmax.f32 %v1373, %v1374
    %v1376 = vrot.slane %v1375, 1
    %v1377 = vmax.f32 %v1375, %v1376
    %v1378 = vsel %vm929, %v659, -inf
    %v1379 = vrot.slane %v1378, 4
    %v1380 = vmax.f32 %v1378, %v1379
    %v1381 = vrot.slane %v1380, 2
    %v1382 = vmax.f32 %v1380, %v1381
    %v1383 = vrot.slane %v1382, 1
    %v1384 = vmax.f32 %v1382, %v1383
    %v1385 = vsel %vm929, %v785, -inf
    %v1386 = vrot.slane %v1385, 4
    %v1387 = vmax.f32 %v1385, %v1386
    %v1388 = vrot.slane %v1387, 2
    %v1389 = vmax.f32 %v1387, %v1388
    %v1390 = vrot.slane %v1389, 1
    %v1391 = vmax.f32 %v1389, %v1390
    %v1392 = vsel %vm929, %v786, -inf
    %v1393 = vrot.slane %v1392, 4
    %v1394 = vmax.f32 %v1392, %v1393
    %v1395 = vrot.slane %v1394, 2
    %v1396 = vmax.f32 %v1394, %v1395
    %v1397 = vrot.slane %v1396, 1
    %v1398 = vmax.f32 %v1396, %v1397
    %v1399 = vsel %vm929, %v787, -inf
    %v1400 = vrot.slane %v1399, 4
    %v1401 = vmax.f32 %v1399, %v1400
    %v1402 = vrot.slane %v1401, 2
    %v1403 = vmax.f32 %v1401, %v1402
    %v1404 = vrot.slane %v1403, 1
    %v1405 = vmax.f32 %v1403, %v1404
    %v1406 = vsel %vm929, %v662, -inf
    %v1407 = vrot.slane %v1406, 4
    %v1408 = vmax.f32 %v1406, %v1407
    %v1409 = vrot.slane %v1408, 2
    %v1410 = vmax.f32 %v1408, %v1409
    %v1411 = vrot.slane %v1410, 1
    %v1412 = vmax.f32 %v1410, %v1411
    %v1413 = vsel %vm929, %v788, -inf
    %v1414 = vrot.slane %v1413, 4
    %v1415 = vmax.f32 %v1413, %v1414
    %v1416 = vrot.slane %v1415, 2
    %v1417 = vmax.f32 %v1415, %v1416
    %v1418 = vrot.slane %v1417, 1
    %v1419 = vmax.f32 %v1417, %v1418
    %v1420 = vsel %vm929, %v789, -inf
    %v1421 = vrot.slane %v1420, 4
    %v1422 = vmax.f32 %v1420, %v1421
    %v1423 = vrot.slane %v1422, 2
    %v1424 = vmax.f32 %v1422, %v1423
    %v1425 = vrot.slane %v1424, 1
    %v1426 = vmax.f32 %v1424, %v1425
    %v1427 = vsel %vm929, %v790, -inf
    %v1428 = vrot.slane %v1427, 4
    %v1429 = vmax.f32 %v1427, %v1428
    %v1430 = vrot.slane %v1429, 2
    %v1431 = vmax.f32 %v1429, %v1430
    %v1432 = vrot.slane %v1431, 1
    %v1433 = vmax.f32 %v1431, %v1432
    %v1434 = vsel %vm929, %v665, -inf
    %v1435 = vrot.slane %v1434, 4
    %v1436 = vmax.f32 %v1434, %v1435
    %v1437 = vrot.slane %v1436, 2
    %v1438 = vmax.f32 %v1436, %v1437
    %v1439 = vrot.slane %v1438, 1
    %v1440 = vmax.f32 %v1438, %v1439
    %v1441 = vsel %vm929, %v791, -inf
    %v1442 = vrot.slane %v1441, 4
    %v1443 = vmax.f32 %v1441, %v1442
    %v1444 = vrot.slane %v1443, 2
    %v1445 = vmax.f32 %v1443, %v1444
    %v1446 = vrot.slane %v1445, 1
    %v1447 = vmax.f32 %v1445, %v1446
    %v1448 = vsel %vm929, %v792, -inf
    %v1449 = vrot.slane %v1448, 4
    %v1450 = vmax.f32 %v1448, %v1449
    %v1451 = vrot.slane %v1450, 2
    %v1452 = vmax.f32 %v1450, %v1451
    %v1453 = vrot.slane %v1452, 1
    %v1454 = vmax.f32 %v1452, %v1453
    %v1455 = vsel %vm929, %v793, -inf
    %v1456 = vrot.slane %v1455, 4
    %v1457 = vmax.f32 %v1455, %v1456
    %v1458 = vrot.slane %v1457, 2
    %v1459 = vmax.f32 %v1457, %v1458
    %v1460 = vrot.slane %v1459, 1
    %v1461 = vmax.f32 %v1459, %v1460
    %v1462 = vsel %vm929, %v668, -inf
    %v1463 = vrot.slane %v1462, 4
    %v1464 = vmax.f32 %v1462, %v1463
    %v1465 = vrot.slane %v1464, 2
    %v1466 = vmax.f32 %v1464, %v1465
    %v1467 = vrot.slane %v1466, 1
    %v1468 = vmax.f32 %v1466, %v1467
    %v1469 = vsel %vm929, %v794, -inf
    %v1470 = vrot.slane %v1469, 4
    %v1471 = vmax.f32 %v1469, %v1470
    %v1472 = vrot.slane %v1471, 2
    %v1473 = vmax.f32 %v1471, %v1472
    %v1474 = vrot.slane %v1473, 1
    %v1475 = vmax.f32 %v1473, %v1474
    %v1476 = vsel %vm929, %v795, -inf
    %v1477 = vrot.slane %v1476, 4
    %v1478 = vmax.f32 %v1476, %v1477
    %v1479 = vrot.slane %v1478, 2
    %v1480 = vmax.f32 %v1478, %v1479
    %v1481 = vrot.slane %v1480, 1
    %v1482 = vmax.f32 %v1480, %v1481
    %v1483 = vsel %vm929, %v796, -inf
    %v1484 = vrot.slane %v1483, 4
    %v1485 = vmax.f32 %v1483, %v1484
    %v1486 = vrot.slane %v1485, 2
    %v1487 = vmax.f32 %v1485, %v1486
    %v1488 = vrot.slane %v1487, 1
    %v1489 = vmax.f32 %v1487, %v1488
    %v1490 = vsel %vm929, %v671, -inf
    %v1491 = vrot.slane %v1490, 4
    %v1492 = vmax.f32 %v1490, %v1491
    %v1493 = vrot.slane %v1492, 2
    %v1494 = vmax.f32 %v1492, %v1493
    %v1495 = vrot.slane %v1494, 1
    %v1496 = vmax.f32 %v1494, %v1495
    %v1497 = vsel %vm929, %v797, -inf
    %v1498 = vrot.slane %v1497, 4
    %v1499 = vmax.f32 %v1497, %v1498
    %v1500 = vrot.slane %v1499, 2
    %v1501 = vmax.f32 %v1499, %v1500
    %v1502 = vrot.slane %v1501, 1
    %v1503 = vmax.f32 %v1501, %v1502
    %v1504 = vsel %vm929, %v798, -inf
    %v1505 = vrot.slane %v1504, 4
    %v1506 = vmax.f32 %v1504, %v1505
    %v1507 = vrot.slane %v1506, 2
    %v1508 = vmax.f32 %v1506, %v1507
    %v1509 = vrot.slane %v1508, 1
    %v1510 = vmax.f32 %v1508, %v1509
    %v1511 = vsel %vm929, %v799, -inf
    %v1512 = vrot.slane %v1511, 4
    %v1513 = vmax.f32 %v1511, %v1512
    %v1514 = vrot.slane %v1513, 2
    %v1515 = vmax.f32 %v1513, %v1514
    %v1516 = vrot.slane %v1515, 1
    %v1517 = vmax.f32 %v1515, %v1516
    %v1518 = vsel %vm929, %v674, -inf
    %v1519 = vrot.slane %v1518, 4
    %v1520 = vmax.f32 %v1518, %v1519
    %v1521 = vrot.slane %v1520, 2
    %v1522 = vmax.f32 %v1520, %v1521
    %v1523 = vrot.slane %v1522, 1
    %v1524 = vmax.f32 %v1522, %v1523
    %v1525 = vsel %vm929, %v800, -inf
    %v1526 = vrot.slane %v1525, 4
    %v1527 = vmax.f32 %v1525, %v1526
    %v1528 = vrot.slane %v1527, 2
    %v1529 = vmax.f32 %v1527, %v1528
    %v1530 = vrot.slane %v1529, 1
    %v1531 = vmax.f32 %v1529, %v1530
    %v1532 = vsel %vm929, %v801, -inf
    %v1533 = vrot.slane %v1532, 4
    %v1534 = vmax.f32 %v1532, %v1533
    %v1535 = vrot.slane %v1534, 2
    %v1536 = vmax.f32 %v1534, %v1535
    %v1537 = vrot.slane %v1536, 1
    %v1538 = vmax.f32 %v1536, %v1537
    %v1539 = vsel %vm929, %v802, -inf
    %v1540 = vrot.slane %v1539, 4
    %v1541 = vmax.f32 %v1539, %v1540
    %v1542 = vrot.slane %v1541, 2
    %v1543 = vmax.f32 %v1541, %v1542
    %v1544 = vrot.slane %v1543, 1
    %v1545 = vmax.f32 %v1543, %v1544
    %v1546 = vsel %vm929, %v677, -inf
    %v1547 = vrot.slane %v1546, 4
    %v1548 = vmax.f32 %v1546, %v1547
    %v1549 = vrot.slane %v1548, 2
    %v1550 = vmax.f32 %v1548, %v1549
    %v1551 = vrot.slane %v1550, 1
    %v1552 = vmax.f32 %v1550, %v1551
    %v1553 = vsel %vm929, %v803, -inf
    %v1554 = vrot.slane %v1553, 4
    %v1555 = vmax.f32 %v1553, %v1554
    %v1556 = vrot.slane %v1555, 2
    %v1557 = vmax.f32 %v1555, %v1556
    %v1558 = vrot.slane %v1557, 1
    %v1559 = vmax.f32 %v1557, %v1558
    %v1560 = vsel %vm929, %v804, -inf
    %v1561 = vrot.slane %v1560, 4
    %v1562 = vmax.f32 %v1560, %v1561
    %v1563 = vrot.slane %v1562, 2
    %v1564 = vmax.f32 %v1562, %v1563
    %v1565 = vrot.slane %v1564, 1
    %v1566 = vmax.f32 %v1564, %v1565
    %v1567 = vsel %vm929, %v805, -inf
    %v1568 = vrot.slane %v1567, 4
    %v1569 = vmax.f32 %v1567, %v1568
    %v1570 = vrot.slane %v1569, 2
    %v1571 = vmax.f32 %v1569, %v1570
    %v1572 = vrot.slane %v1571, 1
    %v1573 = vmax.f32 %v1571, %v1572
    %v1574 = vsel %vm929, %v680, -inf
    %v1575 = vrot.slane %v1574, 4
    %v1576 = vmax.f32 %v1574, %v1575
    %v1577 = vrot.slane %v1576, 2
    %v1578 = vmax.f32 %v1576, %v1577
    %v1579 = vrot.slane %v1578, 1
    %v1580 = vmax.f32 %v1578, %v1579
    %v1581 = vsel %vm929, %v806, -inf
    %v1582 = vrot.slane %v1581, 4
    %v1583 = vmax.f32 %v1581, %v1582
    %v1584 = vrot.slane %v1583, 2
    %v1585 = vmax.f32 %v1583, %v1584
    %v1586 = vrot.slane %v1585, 1
    %v1587 = vmax.f32 %v1585, %v1586
    %v1588 = vsel %vm929, %v807, -inf
    %v1589 = vrot.slane %v1588, 4
    %v1590 = vmax.f32 %v1588, %v1589
    %v1591 = vrot.slane %v1590, 2
    %v1592 = vmax.f32 %v1590, %v1591
    %v1593 = vrot.slane %v1592, 1
    %v1594 = vmax.f32 %v1592, %v1593
    %v1595 = vsel %vm929, %v808, -inf
    %v1596 = vrot.slane %v1595, 4
    %v1597 = vmax.f32 %v1595, %v1596
    %v1598 = vrot.slane %v1597, 2
    %v1599 = vmax.f32 %v1597, %v1598
    %v1600 = vrot.slane %v1599, 1
    %v1601 = vmax.f32 %v1599, %v1600
    %v1602 = vsel %vm929, %v683, -inf
    %v1603 = vrot.slane %v1602, 4
    %v1604 = vmax.f32 %v1602, %v1603
    %v1605 = vrot.slane %v1604, 2
    %v1606 = vmax.f32 %v1604, %v1605
    %v1607 = vrot.slane %v1606, 1
    %v1608 = vmax.f32 %v1606, %v1607
    %v1609 = vsel %vm929, %v809, -inf
    %v1610 = vrot.slane %v1609, 4
    %v1611 = vmax.f32 %v1609, %v1610
    %v1612 = vrot.slane %v1611, 2
    %v1613 = vmax.f32 %v1611, %v1612
    %v1614 = vrot.slane %v1613, 1
    %v1615 = vmax.f32 %v1613, %v1614
    %v1616 = vsel %vm929, %v810, -inf
    %v1617 = vrot.slane %v1616, 4
    %v1618 = vmax.f32 %v1616, %v1617
    %v1619 = vrot.slane %v1618, 2
    %v1620 = vmax.f32 %v1618, %v1619
    %v1621 = vrot.slane %v1620, 1
    %v1622 = vmax.f32 %v1620, %v1621
    %v1623 = vsel %vm929, %v811, -inf
    %v1624 = vrot.slane %v1623, 4
    %v1625 = vmax.f32 %v1623, %v1624
    %v1626 = vrot.slane %v1625, 2
    %v1627 = vmax.f32 %v1625, %v1626
    %v1628 = vrot.slane %v1627, 1
    %v1629 = vmax.f32 %v1627, %v1628
    %v1630 = vsel %vm929, %v686, -inf
    %v1631 = vrot.slane %v1630, 4
    %v1632 = vmax.f32 %v1630, %v1631
    %v1633 = vrot.slane %v1632, 2
    %v1634 = vmax.f32 %v1632, %v1633
    %v1635 = vrot.slane %v1634, 1
    %v1636 = vmax.f32 %v1634, %v1635
    %v1637 = vsel %vm929, %v812, -inf
    %v1638 = vrot.slane %v1637, 4
    %v1639 = vmax.f32 %v1637, %v1638
    %v1640 = vrot.slane %v1639, 2
    %v1641 = vmax.f32 %v1639, %v1640
    %v1642 = vrot.slane %v1641, 1
    %v1643 = vmax.f32 %v1641, %v1642
    %v1644 = vsel %vm929, %v813, -inf
    %v1645 = vrot.slane %v1644, 4
    %v1646 = vmax.f32 %v1644, %v1645
    %v1647 = vrot.slane %v1646, 2
    %v1648 = vmax.f32 %v1646, %v1647
    %v1649 = vrot.slane %v1648, 1
    %v1650 = vmax.f32 %v1648, %v1649
    %v1651 = vsel %vm929, %v814, -inf
    %v1652 = vrot.slane %v1651, 4
    %v1653 = vmax.f32 %v1651, %v1652
    %v1654 = vrot.slane %v1653, 2
    %v1655 = vmax.f32 %v1653, %v1654
    %v1656 = vrot.slane %v1655, 1
    %v1657 = vmax.f32 %v1655, %v1656
    %v1658 = vsel %vm929, %v689, -inf
    %v1659 = vrot.slane %v1658, 4
    %v1660 = vmax.f32 %v1658, %v1659
    %v1661 = vrot.slane %v1660, 2
    %v1662 = vmax.f32 %v1660, %v1661
    %v1663 = vrot.slane %v1662, 1
    %v1664 = vmax.f32 %v1662, %v1663
    %v1665 = vsel %vm929, %v815, -inf
    %v1666 = vrot.slane %v1665, 4
    %v1667 = vmax.f32 %v1665, %v1666
    %v1668 = vrot.slane %v1667, 2
    %v1669 = vmax.f32 %v1667, %v1668
    %v1670 = vrot.slane %v1669, 1
    %v1671 = vmax.f32 %v1669, %v1670
    %v1672 = vsel %vm929, %v816, -inf
    %v1673 = vrot.slane %v1672, 4
    %v1674 = vmax.f32 %v1672, %v1673
    %v1675 = vrot.slane %v1674, 2
    %v1676 = vmax.f32 %v1674, %v1675
    %v1677 = vrot.slane %v1676, 1
    %v1678 = vmax.f32 %v1676, %v1677
    %v1679 = vsel %vm929, %v817, -inf
    %v1680 = vrot.slane %v1679, 4
    %v1681 = vmax.f32 %v1679, %v1680
    %v1682 = vrot.slane %v1681, 2
    %v1683 = vmax.f32 %v1681, %v1682
    %v1684 = vrot.slane %v1683, 1
    %v1685 = vmax.f32 %v1683, %v1684
    %v1686 = vsel %vm929, %v692, -inf
    %v1687 = vrot.slane %v1686, 4
    %v1688 = vmax.f32 %v1686, %v1687
    %v1689 = vrot.slane %v1688, 2
    %v1690 = vmax.f32 %v1688, %v1689
    %v1691 = vrot.slane %v1690, 1
    %v1692 = vmax.f32 %v1690, %v1691
    %v1693 = vsel %vm929, %v818, -inf
    %v1694 = vrot.slane %v1693, 4
    %v1695 = vmax.f32 %v1693, %v1694
    %v1696 = vrot.slane %v1695, 2
    %v1697 = vmax.f32 %v1695, %v1696
    %v1698 = vrot.slane %v1697, 1
    %v1699 = vmax.f32 %v1697, %v1698
    %v1700 = vsel %vm929, %v819, -inf
    %v1701 = vrot.slane %v1700, 4
    %v1702 = vmax.f32 %v1700, %v1701
    %v1703 = vrot.slane %v1702, 2
    %v1704 = vmax.f32 %v1702, %v1703
    %v1705 = vrot.slane %v1704, 1
    %v1706 = vmax.f32 %v1704, %v1705
    %v1707 = vsel %vm929, %v820, -inf
    %v1708 = vrot.slane %v1707, 4
    %v1709 = vmax.f32 %v1707, %v1708
    %v1710 = vrot.slane %v1709, 2
    %v1711 = vmax.f32 %v1709, %v1710
    %v1712 = vrot.slane %v1711, 1
    %v1713 = vmax.f32 %v1711, %v1712
    %v1714 = vsel %vm929, %v695, -inf
    %v1715 = vrot.slane %v1714, 4
    %v1716 = vmax.f32 %v1714, %v1715
    %v1717 = vrot.slane %v1716, 2
    %v1718 = vmax.f32 %v1716, %v1717
    %v1719 = vrot.slane %v1718, 1
    %v1720 = vmax.f32 %v1718, %v1719
    %v1721 = vsel %vm929, %v821, -inf
    %v1722 = vrot.slane %v1721, 4
    %v1723 = vmax.f32 %v1721, %v1722
    %v1724 = vrot.slane %v1723, 2
    %v1725 = vmax.f32 %v1723, %v1724
    %v1726 = vrot.slane %v1725, 1
    %v1727 = vmax.f32 %v1725, %v1726
    %v1728 = vsel %vm929, %v822, -inf
    %v1729 = vrot.slane %v1728, 4
    %v1730 = vmax.f32 %v1728, %v1729
    %v1731 = vrot.slane %v1730, 2
    %v1732 = vmax.f32 %v1730, %v1731
    %v1733 = vrot.slane %v1732, 1
    %v1734 = vmax.f32 %v1732, %v1733
    %v1735 = vsel %vm929, %v823, -inf
    %v1736 = vrot.slane %v1735, 4
    %v1737 = vmax.f32 %v1735, %v1736
    %v1738 = vrot.slane %v1737, 2
    %v1739 = vmax.f32 %v1737, %v1738
    %v1740 = vrot.slane %v1739, 1
    %v1741 = vmax.f32 %v1739, %v1740
    %v1742 = vsel %vm929, %v698, -inf
    %v1743 = vrot.slane %v1742, 4
    %v1744 = vmax.f32 %v1742, %v1743
    %v1745 = vrot.slane %v1744, 2
    %v1746 = vmax.f32 %v1744, %v1745
    %v1747 = vrot.slane %v1746, 1
    %v1748 = vmax.f32 %v1746, %v1747
    %v1749 = vsel %vm929, %v824, -inf
    %v1750 = vrot.slane %v1749, 4
    %v1751 = vmax.f32 %v1749, %v1750
    %v1752 = vrot.slane %v1751, 2
    %v1753 = vmax.f32 %v1751, %v1752
    %v1754 = vrot.slane %v1753, 1
    %v1755 = vmax.f32 %v1753, %v1754
    %v1756 = vsel %vm929, %v825, -inf
    %v1757 = vrot.slane %v1756, 4
    %v1758 = vmax.f32 %v1756, %v1757
    %v1759 = vrot.slane %v1758, 2
    %v1760 = vmax.f32 %v1758, %v1759
    %v1761 = vrot.slane %v1760, 1
    %v1762 = vmax.f32 %v1760, %v1761
    %v1763 = vsel %vm929, %v826, -inf
    %v1764 = vrot.slane %v1763, 4
    %v1765 = vmax.f32 %v1763, %v1764
    %v1766 = vrot.slane %v1765, 2
    %v1767 = vmax.f32 %v1765, %v1766
    %v1768 = vrot.slane %v1767, 1
    %v1769 = vmax.f32 %v1767, %v1768
    %v1770 = vsel %vm929, %v701, -inf
    %v1771 = vrot.slane %v1770, 4
    %v1772 = vmax.f32 %v1770, %v1771
    %v1773 = vrot.slane %v1772, 2
    %v1774 = vmax.f32 %v1772, %v1773
    %v1775 = vrot.slane %v1774, 1
    %v1776 = vmax.f32 %v1774, %v1775
    %v1777 = vsel %vm929, %v827, -inf
    %v1778 = vrot.slane %v1777, 4
    %v1779 = vmax.f32 %v1777, %v1778
    %v1780 = vrot.slane %v1779, 2
    %v1781 = vmax.f32 %v1779, %v1780
    %v1782 = vrot.slane %v1781, 1
    %v1783 = vmax.f32 %v1781, %v1782
    %v1784 = vsel %vm929, %v828, -inf
    %v1785 = vrot.slane %v1784, 4
    %v1786 = vmax.f32 %v1784, %v1785
    %v1787 = vrot.slane %v1786, 2
    %v1788 = vmax.f32 %v1786, %v1787
    %v1789 = vrot.slane %v1788, 1
    %v1790 = vmax.f32 %v1788, %v1789
    %v1791 = vsel %vm929, %v829, -inf
    %v1792 = vrot.slane %v1791, 4
    %v1793 = vmax.f32 %v1791, %v1792
    %v1794 = vrot.slane %v1793, 2
    %v1795 = vmax.f32 %v1793, %v1794
    %v1796 = vrot.slane %v1795, 1
    %v1797 = vmax.f32 %v1795, %v1796
    %v1798 = vsel %vm929, %v704, -inf
    %v1799 = vrot.slane %v1798, 4
    %v1800 = vmax.f32 %v1798, %v1799
    %v1801 = vrot.slane %v1800, 2
    %v1802 = vmax.f32 %v1800, %v1801
    %v1803 = vrot.slane %v1802, 1
    %v1804 = vmax.f32 %v1802, %v1803
    %v1805 = vsel %vm929, %v830, -inf
    %v1806 = vrot.slane %v1805, 4
    %v1807 = vmax.f32 %v1805, %v1806
    %v1808 = vrot.slane %v1807, 2
    %v1809 = vmax.f32 %v1807, %v1808
    %v1810 = vrot.slane %v1809, 1
    %v1811 = vmax.f32 %v1809, %v1810
    %v1812 = vsel %vm929, %v831, -inf
    %v1813 = vrot.slane %v1812, 4
    %v1814 = vmax.f32 %v1812, %v1813
    %v1815 = vrot.slane %v1814, 2
    %v1816 = vmax.f32 %v1814, %v1815
    %v1817 = vrot.slane %v1816, 1
    %v1818 = vmax.f32 %v1816, %v1817
    %v1819 = vsel %vm929, %v832, -inf
    %v1820 = vrot.slane %v1819, 4
    %v1821 = vmax.f32 %v1819, %v1820
    %v1822 = vrot.slane %v1821, 2
    %v1823 = vmax.f32 %v1821, %v1822
    %v1824 = vrot.slane %v1823, 1
    %v1825 = vmax.f32 %v1823, %v1824
    %1826 = vst.msk [vmem:[#allocation2] sm:$0xff] %vm608, 0.0
    %1827 = vst.msk [vmem:[#allocation2 + $0x8] sm:$0x3] %vm929, 0.0
    %1828 = vst.msk [vmem:[#allocation2 + $0xa0] sm:$0xff] %vm608, 0.0
    %1829 = vst.msk [vmem:[#allocation2 + $0xa8] sm:$0x3] %vm929, 0.0
    %s1830 = scalar_lea.vmem [#allocation2], 144
    %1831 = vst.msk [vmem:[%s1830] sm:$0xff] %vm608, 0.0
    %1832 = vst.msk [vmem:[%s1830 + $0x8] sm:$0x3] %vm929, 0.0
    %1833 = vst.msk [vmem:[%s1830 + $0xa0] sm:$0xff] %vm608, 0.0
    %1834 = vst.msk [vmem:[%s1830 + $0xa8] sm:$0x3] %vm929, 0.0
    %vm1835 = vcmask 516096
    %1836 = vst.msk [vmem:[#allocation2] sm:$0x1] %vm1835, 0.0
    %1837 = vst.msk [vmem:[#allocation2 + $0x10] sm:$0x1] %vm1835, 0.0
    %1838 = vst.msk [vmem:[#allocation2 + $0x20] sm:$0x1] %vm1835, 0.0
    %1839 = vst.msk [vmem:[#allocation2 + $0x30] sm:$0x1] %vm1835, 0.0
    %1840 = vst.msk [vmem:[#allocation2 + $0x40] sm:$0x1] %vm1835, 0.0
    %1841 = vst.msk [vmem:[#allocation2 + $0x50] sm:$0x1] %vm1835, 0.0
    %1842 = vst.msk [vmem:[#allocation2 + $0x60] sm:$0x1] %vm1835, 0.0
    %1843 = vst.msk [vmem:[#allocation2 + $0x70] sm:$0x1] %vm1835, 0.0
    %1844 = vst.msk [vmem:[#allocation2 + $0x80] sm:$0x1] %vm1835, 0.0
    %1845 = vst.msk [vmem:[#allocation2 + $0x90] sm:$0x1] %vm1835, 0.0
    %1846 = vst.msk [vmem:[#allocation2 + $0xa0] sm:$0x1] %vm1835, 0.0
    %1847 = vst.msk [vmem:[#allocation2 + $0xb0] sm:$0x1] %vm1835, 0.0
    %1848 = vst.msk [vmem:[#allocation2 + $0xc0] sm:$0x1] %vm1835, 0.0
    %1849 = vst.msk [vmem:[#allocation2 + $0xd0] sm:$0x1] %vm1835, 0.0
    %1850 = vst.msk [vmem:[#allocation2 + $0xe0] sm:$0x1] %vm1835, 0.0
    %1851 = vst.msk [vmem:[#allocation2 + $0xf0] sm:$0x1] %vm1835, 0.0
    %1852 = vst.msk [vmem:[#allocation2 + $0x100] sm:$0x1] %vm1835, 0.0
    %1853 = vst.msk [vmem:[#allocation2 + $0x110] sm:$0x1] %vm1835, 0.0
    %1854 = vst.msk [vmem:[#allocation2 + $0x120] sm:$0x1] %vm1835, 0.0
    %1855 = vst.msk [vmem:[#allocation2 + $0x130] sm:$0x1] %vm1835, 0.0
    %1856 = vst.msk [vmem:[#allocation2 + $0x9] sm:$0x1] %vm1835, 0.0
    %1857 = vst.msk [vmem:[#allocation2 + $0x19] sm:$0x1] %vm1835, 0.0
    %1858 = vst.msk [vmem:[#allocation2 + $0x29] sm:$0x1] %vm1835, 0.0
    %1859 = vst.msk [vmem:[#allocation2 + $0x39] sm:$0x1] %vm1835, 0.0
    %1860 = vst.msk [vmem:[#allocation2 + $0x49] sm:$0x1] %vm1835, 0.0
    %1861 = vst.msk [vmem:[#allocation2 + $0x59] sm:$0x1] %vm1835, 0.0
    %1862 = vst.msk [vmem:[#allocation2 + $0x69] sm:$0x1] %vm1835, 0.0
    %1863 = vst.msk [vmem:[#allocation2 + $0x79] sm:$0x1] %vm1835, 0.0
    %1864 = vst.msk [vmem:[#allocation2 + $0x89] sm:$0x1] %vm1835, 0.0
    %1865 = vst.msk [vmem:[#allocation2 + $0x99] sm:$0x1] %vm1835, 0.0
    %1866 = vst.msk [vmem:[#allocation2 + $0xa9] sm:$0x1] %vm1835, 0.0
    %1867 = vst.msk [vmem:[#allocation2 + $0xb9] sm:$0x1] %vm1835, 0.0
    %1868 = vst.msk [vmem:[#allocation2 + $0xc9] sm:$0x1] %vm1835, 0.0
    %1869 = vst.msk [vmem:[#allocation2 + $0xd9] sm:$0x1] %vm1835, 0.0
    %1870 = vst.msk [vmem:[#allocation2 + $0xe9] sm:$0x1] %vm1835, 0.0
    %1871 = vst.msk [vmem:[#allocation2 + $0xf9] sm:$0x1] %vm1835, 0.0
    %1872 = vst.msk [vmem:[#allocation2 + $0x109] sm:$0x1] %vm1835, 0.0
    %1873 = vst.msk [vmem:[#allocation2 + $0x119] sm:$0x1] %vm1835, 0.0
    %1874 = vst.msk [vmem:[#allocation2 + $0x129] sm:$0x1] %vm1835, 0.0
    %1875 = vst.msk [vmem:[#allocation2 + $0x139] sm:$0x1] %vm1835, 0.0
    %vm2004 = vcmask 1041409
    %v2005 = vsel %vm2004, %v943, %v936
    %vm2006 = vcmask 1042434
    %v2007 = vsel %vm2006, %v950, %v2005
    %vm2008 = vcmask 1043459
    %v2009 = vsel %vm2008, %v957, %v2007
    %vm2010 = vcmask 1044484
    %v2011 = vsel %vm2010, %v964, %v2009
    %vm2012 = vcmask 1045509
    %v2013 = vsel %vm2012, %v971, %v2011
    %vm2014 = vcmask 1046534
    %v2015 = vsel %vm2014, %v978, %v2013
    %vm2016 = vcmask 1047559
    %v2017 = vsel %vm2016, %v985, %v2015
    %v2018 = vsel %vm2004, %v999, %v992
    %v2019 = vsel %vm2006, %v1006, %v2018
    %v2020 = vsel %vm2008, %v1013, %v2019
    %v2021 = vsel %vm2010, %v1020, %v2020
    %v2022 = vsel %vm2012, %v1027, %v2021
    %v2023 = vsel %vm2014, %v1034, %v2022
    %v2024 = vsel %vm2016, %v1041, %v2023
    %v2025 = vsel %vm2004, %v1055, %v1048
    %v2026 = vsel %vm2006, %v1062, %v2025
    %v2027 = vsel %vm2008, %v1069, %v2026
    %v2028 = vsel %vm2010, %v1076, %v2027
    %v2029 = vsel %vm2012, %v1083, %v2028
    %v2030 = vsel %vm2014, %v1090, %v2029
    %v2031 = vsel %vm2016, %v1097, %v2030
    %v2032 = vsel %vm2004, %v1111, %v1104
    %v2033 = vsel %vm2006, %v1118, %v2032
    %v2034 = vsel %vm2008, %v1125, %v2033
    %v2035 = vsel %vm2010, %v1132, %v2034
    %v2036 = vsel %vm2012, %v1139, %v2035
    %v2037 = vsel %vm2014, %v1146, %v2036
    %v2038 = vsel %vm2016, %v1153, %v2037
    %v2039 = vsel %vm2004, %v1167, %v1160
    %v2040 = vsel %vm2006, %v1174, %v2039
    %v2041 = vsel %vm2008, %v1181, %v2040
    %v2042 = vsel %vm2010, %v1188, %v2041
    %v2043 = vsel %vm2012, %v1195, %v2042
    %v2044 = vsel %vm2014, %v1202, %v2043
    %v2045 = vsel %vm2016, %v1209, %v2044
    %v2046 = vsel %vm2004, %v1223, %v1216
    %v2047 = vsel %vm2006, %v1230, %v2046
    %v2048 = vsel %vm2008, %v1237, %v2047
    %v2049 = vsel %vm2010, %v1244, %v2048
    %v2050 = vsel %vm2012, %v1251, %v2049
    %v2051 = vsel %vm2014, %v1258, %v2050
    %v2052 = vsel %vm2016, %v1265, %v2051
    %v2053 = vsel %vm2004, %v1279, %v1272
    %v2054 = vsel %vm2006, %v1286, %v2053
    %v2055 = vsel %vm2008, %v1293, %v2054
    %v2056 = vsel %vm2010, %v1300, %v2055
    %v2057 = vsel %vm2012, %v1307, %v2056
    %v2058 = vsel %vm2014, %v1314, %v2057
    %v2059 = vsel %vm2016, %v1321, %v2058
    %v2060 = vsel %vm2004, %v1335, %v1328
    %v2061 = vsel %vm2006, %v1342, %v2060
    %v2062 = vsel %vm2008, %v1349, %v2061
    %v2063 = vsel %vm2010, %v1356, %v2062
    %v2064 = vsel %vm2012, %v1363, %v2063
    %v2065 = vsel %vm2014, %v1370, %v2064
    %v2066 = vsel %vm2016, %v1377, %v2065
    %v2067 = vsel %vm2004, %v1391, %v1384
    %v2068 = vsel %vm2006, %v1398, %v2067
    %v2069 = vsel %vm2008, %v1405, %v2068
    %v2070 = vsel %vm2010, %v1412, %v2069
    %v2071 = vsel %vm2012, %v1419, %v2070
    %v2072 = vsel %vm2014, %v1426, %v2071
    %v2073 = vsel %vm2016, %v1433, %v2072
    %v2074 = vsel %vm2004, %v1447, %v1440
    %v2075 = vsel %vm2006, %v1454, %v2074
    %v2076 = vsel %vm2008, %v1461, %v2075
    %v2077 = vsel %vm2010, %v1468, %v2076
    %v2078 = vsel %vm2012, %v1475, %v2077
    %v2079 = vsel %vm2014, %v1482, %v2078
    %v2080 = vsel %vm2016, %v1489, %v2079
    %v2081 = vsel %vm2004, %v1503, %v1496
    %v2082 = vsel %vm2006, %v1510, %v2081
    %v2083 = vsel %vm2008, %v1517, %v2082
    %v2084 = vsel %vm2010, %v1524, %v2083
    %v2085 = vsel %vm2012, %v1531, %v2084
    %v2086 = vsel %vm2014, %v1538, %v2085
    %v2087 = vsel %vm2016, %v1545, %v2086
    %v2088 = vsel %vm2004, %v1559, %v1552
    %v2089 = vsel %vm2006, %v1566, %v2088
    %v2090 = vsel %vm2008, %v1573, %v2089
    %v2091 = vsel %vm2010, %v1580, %v2090
    %v2092 = vsel %vm2012, %v1587, %v2091
    %v2093 = vsel %vm2014, %v1594, %v2092
    %v2094 = vsel %vm2016, %v1601, %v2093
    %v2095 = vsel %vm2004, %v1615, %v1608
    %v2096 = vsel %vm2006, %v1622, %v2095
    %v2097 = vsel %vm2008, %v1629, %v2096
    %v2098 = vsel %vm2010, %v1636, %v2097
    %v2099 = vsel %vm2012, %v1643, %v2098
    %v2100 = vsel %vm2014, %v1650, %v2099
    %v2101 = vsel %vm2016, %v1657, %v2100
    %v2102 = vsel %vm2004, %v1671, %v1664
    %v2103 = vsel %vm2006, %v1678, %v2102
    %v2104 = vsel %vm2008, %v1685, %v2103
    %v2105 = vsel %vm2010, %v1692, %v2104
    %v2106 = vsel %vm2012, %v1699, %v2105
    %v2107 = vsel %vm2014, %v1706, %v2106
    %v2108 = vsel %vm2016, %v1713, %v2107
    %v2109 = vsel %vm2004, %v1727, %v1720
    %v2110 = vsel %vm2006, %v1734, %v2109
    %v2111 = vsel %vm2008, %v1741, %v2110
    %v2112 = vsel %vm2010, %v1748, %v2111
    %v2113 = vsel %vm2012, %v1755, %v2112
    %v2114 = vsel %vm2014, %v1762, %v2113
    %v2115 = vsel %vm2016, %v1769, %v2114
    %v2116 = vsel %vm2004, %v1783, %v1776
    %v2117 = vsel %vm2006, %v1790, %v2116
    %v2118 = vsel %vm2008, %v1797, %v2117
    %v2119 = vsel %vm2010, %v1804, %v2118
    %v2120 = vsel %vm2012, %v1811, %v2119
    %v2121 = vsel %vm2014, %v1818, %v2120
    %v2122 = vsel %vm2016, %v1825, %v2121
    %s2139 = scalar_lea.vmem [#allocation2], 16
    %2140 = vst.msk [vmem:[%s2139 + $0x1] sm:$0xff] %vm608, %v2017
    %2141 = vst.msk [vmem:[%s2139 + $0x11] sm:$0xff] %vm608, %v2024
    %2142 = vst.msk [vmem:[%s2139 + $0x21] sm:$0xff] %vm608, %v2031
    %2143 = vst.msk [vmem:[%s2139 + $0x31] sm:$0xff] %vm608, %v2038
    %2144 = vst.msk [vmem:[%s2139 + $0x41] sm:$0xff] %vm608, %v2045
    %2145 = vst.msk [vmem:[%s2139 + $0x51] sm:$0xff] %vm608, %v2052
    %2146 = vst.msk [vmem:[%s2139 + $0x61] sm:$0xff] %vm608, %v2059
    %2147 = vst.msk [vmem:[%s2139 + $0x71] sm:$0xff] %vm608, %v2066
    %2148 = vst.msk [vmem:[%s2139 + $0xa1] sm:$0xff] %vm608, %v2073
    %2149 = vst.msk [vmem:[%s2139 + $0xb1] sm:$0xff] %vm608, %v2080
    %2150 = vst.msk [vmem:[%s2139 + $0xc1] sm:$0xff] %vm608, %v2087
    %2151 = vst.msk [vmem:[%s2139 + $0xd1] sm:$0xff] %vm608, %v2094
    %2152 = vst.msk [vmem:[%s2139 + $0xe1] sm:$0xff] %vm608, %v2101
    %2153 = vst.msk [vmem:[%s2139 + $0xf1] sm:$0xff] %vm608, %v2108
    %2154 = vst.msk [vmem:[%s2139 + $0x101] sm:$0xff] %vm608, %v2115
    %2155 = vst.msk [vmem:[%s2139 + $0x111] sm:$0xff] %vm608, %v2122
    %v2156 = vld [vmem:[#allocation2] sm:$0xff]
    %v2157 = vld [vmem:[#allocation2 + $0x10] sm:$0xff]
    %v2158 = vld [vmem:[#allocation2 + $0x20] sm:$0xff]
    %v2159 = vld [vmem:[#allocation2 + $0x30] sm:$0xff]
    %v2160 = vld [vmem:[#allocation2 + $0x40] sm:$0xff]
    %v2161 = vld [vmem:[#allocation2 + $0x50] sm:$0xff]
    %v2162 = vld [vmem:[#allocation2 + $0x60] sm:$0xff]
    %v2163 = vld [vmem:[#allocation2 + $0x70] sm:$0xff]
    %v2164 = vld [vmem:[#allocation2 + $0xa0] sm:$0xff]
    %v2165 = vld [vmem:[#allocation2 + $0xb0] sm:$0xff]
    %v2166 = vld [vmem:[#allocation2 + $0xc0] sm:$0xff]
    %v2167 = vld [vmem:[#allocation2 + $0xd0] sm:$0xff]
    %v2168 = vld [vmem:[#allocation2 + $0xe0] sm:$0xff]
    %v2169 = vld [vmem:[#allocation2 + $0xf0] sm:$0xff]
    %v2170 = vld [vmem:[#allocation2 + $0x100] sm:$0xff]
    %v2171 = vld [vmem:[#allocation2 + $0x110] sm:$0xff]
    %v2172 = vpack.c.bf16 %v2157, %v2156
    %v2173 = vpack.c.bf16 %v2159, %v2158
    %v2174 = vpack.c.bf16 %v2161, %v2160
    %v2175 = vpack.c.bf16 %v2163, %v2162
    %v2176 = vpack.c.bf16 %v2165, %v2164
    %v2177 = vpack.c.bf16 %v2167, %v2166
    %v2178 = vpack.c.bf16 %v2169, %v2168
    %v2179 = vpack.c.bf16 %v2171, %v2170
    %v2180 = vld [vmem:[%s3] sm:$0xf]
    %v2181 = vld [vmem:[%s3 + $0x4] sm:$0xf]
    %v2182 = vld [vmem:[%s3 + $0x8] sm:$0xf]
    %v2183 = vld [vmem:[%s3 + $0xc] sm:$0xf]
    %v2184 = vld [vmem:[%s3 + $0x10] sm:$0xf]
    %v2185 = vld [vmem:[%s3 + $0x14] sm:$0xf]
    %v2186 = vld [vmem:[%s3 + $0x18] sm:$0xf]
    %v2187 = vld [vmem:[%s3 + $0x1c] sm:$0xf]
    %v2188 = vld [vmem:[#allocation2 + $0x1] sm:$0xff]
    %v2189 = vld [vmem:[#allocation2 + $0x11] sm:$0xff]
    %v2190 = vld [vmem:[#allocation2 + $0x21] sm:$0xff]
    %v2191 = vld [vmem:[#allocation2 + $0x31] sm:$0xff]
    %v2192 = vld [vmem:[#allocation2 + $0x41] sm:$0xff]
    %v2193 = vld [vmem:[#allocation2 + $0x51] sm:$0xff]
    %v2194 = vld [vmem:[#allocation2 + $0x61] sm:$0xff]
    %v2195 = vld [vmem:[#allocation2 + $0x71] sm:$0xff]
    %v2196 = vld [vmem:[#allocation2 + $0xa1] sm:$0xff]
    %v2197 = vld [vmem:[#allocation2 + $0xb1] sm:$0xff]
    %v2198 = vld [vmem:[#allocation2 + $0xc1] sm:$0xff]
    %v2199 = vld [vmem:[#allocation2 + $0xd1] sm:$0xff]
    %v2200 = vld [vmem:[#allocation2 + $0xe1] sm:$0xff]
    %v2201 = vld [vmem:[#allocation2 + $0xf1] sm:$0xff]
    %v2202 = vld [vmem:[#allocation2 + $0x101] sm:$0xff]
    %v2203 = vld [vmem:[#allocation2 + $0x111] sm:$0xff]
    %v2204 = vpack.c.bf16 %v2189, %v2188
    %v2205 = vpack.c.bf16 %v2191, %v2190
    %v2206 = vpack.c.bf16 %v2193, %v2192
    %v2207 = vpack.c.bf16 %v2195, %v2194
    %v2208 = vpack.c.bf16 %v2197, %v2196
    %v2209 = vpack.c.bf16 %v2199, %v2198
    %v2210 = vpack.c.bf16 %v2201, %v2200
    %v2211 = vpack.c.bf16 %v2203, %v2202
    %s2212 = scalar_lea.vmem %s3, 32
    %v2213 = vld [vmem:[%s2212] sm:$0xf]
    %v2214 = vld [vmem:[%s2212 + $0x4] sm:$0xf]
    %v2215 = vld [vmem:[%s2212 + $0x8] sm:$0xf]
    %v2216 = vld [vmem:[%s2212 + $0xc] sm:$0xf]
    %v2217 = vld [vmem:[%s2212 + $0x10] sm:$0xf]
    %v2218 = vld [vmem:[%s2212 + $0x14] sm:$0xf]
    %v2219 = vld [vmem:[%s2212 + $0x18] sm:$0xf]
    %v2220 = vld [vmem:[%s2212 + $0x1c] sm:$0xf]
    %v2229 = vunpack.c.l.b16 %v2213
    %v2230 = vunpack.c.l.b16 %v2214
    %v2231 = vunpack.c.l.b16 %v2215
    %v2232 = vunpack.c.l.b16 %v2216
    %v2233 = vunpack.c.l.b16 %v2217
    %v2234 = vunpack.c.l.b16 %v2218
    %v2235 = vunpack.c.l.b16 %v2219
    %v2236 = vunpack.c.l.b16 %v2220
    %v2237 = vpack.c.b16 %v2230, %v2229
    %v2238 = vpack.c.b16 %v2232, %v2231
    %v2239 = vpack.c.b16 %v2234, %v2233
    %v2240 = vpack.c.b16 %v2236, %v2235
    %v2246 = vsel %vm608, %v2204, 0
    %v2249 = vsel %vm608, %v2205, 0
    %v2252 = vsel %vm608, %v2206, 0
    %v2255 = vsel %vm608, %v2207, 0
    %v2258 = vsel %vm608, %v2208, 0
    %v2261 = vsel %vm608, %v2209, 0
    %v2264 = vsel %vm608, %v2210, 0
    %v2267 = vsel %vm608, %v2211, 0
    %2269 = vmatpush.bf16.msra.mxu0 0
    %2270 = vmatpush.bf16.msra.mxu0 0
    %2271 = vmatpush.bf16.msra.mxu0 0
    %2272 = vmatpush.bf16.msra.mxu0 0
    %2273 = vmatpush.bf16.msra.mxu0 %v2240
    %2274 = vmatpush.bf16.msra.mxu0 %v2239
    %2275 = vmatpush.bf16.msra.mxu0 %v2238
    %2276 = vmatpush.bf16.msra.mxu0 %v2237
    %2277 = vmatmul.bf16.gmra.mxu0 %v2246
    %v2278 = vpop.f32.mrf.mxu0
    %v2279 = vadd.f32 0.0, %v2278
    %v2280 = vpop.f32.mrf.mxu0
    %v2281 = vadd.f32 0.0, %v2280
    %2282 = vmatmul.bf16.gmra.mxu0 %v2249
    %v2283 = vpop.f32.mrf.mxu0
    %v2284 = vadd.f32 0.0, %v2283
    %v2285 = vpop.f32.mrf.mxu0
    %v2286 = vadd.f32 0.0, %v2285
    %2287 = vmatmul.bf16.gmra.mxu0 %v2252
    %v2288 = vpop.f32.mrf.mxu0
    %v2289 = vadd.f32 0.0, %v2288
    %v2290 = vpop.f32.mrf.mxu0
    %v2291 = vadd.f32 0.0, %v2290
    %2292 = vmatmul.bf16.gmra.mxu0 %v2255
    %v2293 = vpop.f32.mrf.mxu0
    %v2294 = vadd.f32 0.0, %v2293
    %v2295 = vpop.f32.mrf.mxu0
    %v2296 = vadd.f32 0.0, %v2295
    %2297 = vmatmul.bf16.gmra.mxu0 %v2258
    %v2298 = vpop.f32.mrf.mxu0
    %v2299 = vadd.f32 0.0, %v2298
    %v2300 = vpop.f32.mrf.mxu0
    %v2301 = vadd.f32 0.0, %v2300
    %2302 = vmatmul.bf16.gmra.mxu0 %v2261
    %v2303 = vpop.f32.mrf.mxu0
    %v2304 = vadd.f32 0.0, %v2303
    %v2305 = vpop.f32.mrf.mxu0
    %v2306 = vadd.f32 0.0, %v2305
    %2307 = vmatmul.bf16.gmra.mxu0 %v2264
    %v2308 = vpop.f32.mrf.mxu0
    %v2309 = vadd.f32 0.0, %v2308
    %v2310 = vpop.f32.mrf.mxu0
    %v2311 = vadd.f32 0.0, %v2310
    %2312 = vmatmul.bf16.gmra.mxu0 %v2267
    %v2313 = vpop.f32.mrf.mxu0
    %v2314 = vadd.f32 0.0, %v2313
    %v2315 = vpop.f32.mrf.mxu0
    %v2316 = vadd.f32 0.0, %v2315
    %2317 = vdwg.mxu0
    %v2326 = vunpack.c.l.b16 %v2180
    %v2327 = vunpack.c.l.b16 %v2181
    %v2328 = vunpack.c.l.b16 %v2182
    %v2329 = vunpack.c.l.b16 %v2183
    %v2330 = vunpack.c.l.b16 %v2184
    %v2331 = vunpack.c.l.b16 %v2185
    %v2332 = vunpack.c.l.b16 %v2186
    %v2333 = vunpack.c.l.b16 %v2187
    %v2334 = vpack.c.b16 %v2327, %v2326
    %v2335 = vpack.c.b16 %v2329, %v2328
    %v2336 = vpack.c.b16 %v2331, %v2330
    %v2337 = vpack.c.b16 %v2333, %v2332
    %v2343 = vsel %vm608, %v2172, 0
    %v2346 = vsel %vm608, %v2173, 0
    %v2349 = vsel %vm608, %v2174, 0
    %v2352 = vsel %vm608, %v2175, 0
    %v2355 = vsel %vm608, %v2176, 0
    %v2358 = vsel %vm608, %v2177, 0
    %v2361 = vsel %vm608, %v2178, 0
    %v2364 = vsel %vm608, %v2179, 0
    %2366 = vmatpush.bf16.msra.mxu0 0
    %2367 = vmatpush.bf16.msra.mxu0 0
    %2368 = vmatpush.bf16.msra.mxu0 0
    %2369 = vmatpush.bf16.msra.mxu0 0
    %2370 = vmatpush.bf16.msra.mxu0 %v2337
    %2371 = vmatpush.bf16.msra.mxu0 %v2336
    %2372 = vmatpush.bf16.msra.mxu0 %v2335
    %2373 = vmatpush.bf16.msra.mxu0 %v2334
    %2374 = vmatmul.bf16.gmra.mxu0 %v2343
    %v2375 = vpop.f32.mrf.mxu0
    %v2376 = vadd.f32 %v2279, %v2375
    %v2377 = vpop.f32.mrf.mxu0
    %v2378 = vadd.f32 %v2281, %v2377
    %2379 = vmatmul.bf16.gmra.mxu0 %v2346
    %v2380 = vpop.f32.mrf.mxu0
    %v2381 = vadd.f32 %v2284, %v2380
    %v2382 = vpop.f32.mrf.mxu0
    %v2383 = vadd.f32 %v2286, %v2382
    %2384 = vmatmul.bf16.gmra.mxu0 %v2349
    %v2385 = vpop.f32.mrf.mxu0
    %v2386 = vadd.f32 %v2289, %v2385
    %v2387 = vpop.f32.mrf.mxu0
    %v2388 = vadd.f32 %v2291, %v2387
    %2389 = vmatmul.bf16.gmra.mxu0 %v2352
    %v2390 = vpop.f32.mrf.mxu0
    %v2391 = vadd.f32 %v2294, %v2390
    %v2392 = vpop.f32.mrf.mxu0
    %v2393 = vadd.f32 %v2296, %v2392
    %2394 = vmatmul.bf16.gmra.mxu0 %v2355
    %v2395 = vpop.f32.mrf.mxu0
    %v2396 = vadd.f32 %v2299, %v2395
    %v2397 = vpop.f32.mrf.mxu0
    %v2398 = vadd.f32 %v2301, %v2397
    %2399 = vmatmul.bf16.gmra.mxu0 %v2358
    %v2400 = vpop.f32.mrf.mxu0
    %v2401 = vadd.f32 %v2304, %v2400
    %v2402 = vpop.f32.mrf.mxu0
    %v2403 = vadd.f32 %v2306, %v2402
    %2404 = vmatmul.bf16.gmra.mxu0 %v2361
    %v2405 = vpop.f32.mrf.mxu0
    %v2406 = vadd.f32 %v2309, %v2405
    %v2407 = vpop.f32.mrf.mxu0
    %v2408 = vadd.f32 %v2311, %v2407
    %2409 = vmatmul.bf16.gmra.mxu0 %v2364
    %v2410 = vpop.f32.mrf.mxu0
    %v2411 = vadd.f32 %v2314, %v2410
    %v2412 = vpop.f32.mrf.mxu0
    %v2413 = vadd.f32 %v2316, %v2412
    %2414 = vdwg.mxu0
    %v2415 = vld [vmem:[#allocation2 + $0x2] sm:$0xff]
    %v2416 = vld [vmem:[#allocation2 + $0x12] sm:$0xff]
    %v2417 = vld [vmem:[#allocation2 + $0x22] sm:$0xff]
    %v2418 = vld [vmem:[#allocation2 + $0x32] sm:$0xff]
    %v2419 = vld [vmem:[#allocation2 + $0x42] sm:$0xff]
    %v2420 = vld [vmem:[#allocation2 + $0x52] sm:$0xff]
    %v2421 = vld [vmem:[#allocation2 + $0x62] sm:$0xff]
    %v2422 = vld [vmem:[#allocation2 + $0x72] sm:$0xff]
    %v2423 = vld [vmem:[#allocation2 + $0xa2] sm:$0xff]
    %v2424 = vld [vmem:[#allocation2 + $0xb2] sm:$0xff]
    %v2425 = vld [vmem:[#allocation2 + $0xc2] sm:$0xff]
    %v2426 = vld [vmem:[#allocation2 + $0xd2] sm:$0xff]
    %v2427 = vld [vmem:[#allocation2 + $0xe2] sm:$0xff]
    %v2428 = vld [vmem:[#allocation2 + $0xf2] sm:$0xff]
    %v2429 = vld [vmem:[#allocation2 + $0x102] sm:$0xff]
    %v2430 = vld [vmem:[#allocation2 + $0x112] sm:$0xff]
    %v2431 = vpack.c.bf16 %v2416, %v2415
    %v2432 = vpack.c.bf16 %v2418, %v2417
    %v2433 = vpack.c.bf16 %v2420, %v2419
    %v2434 = vpack.c.bf16 %v2422, %v2421
    %v2435 = vpack.c.bf16 %v2424, %v2423
    %v2436 = vpack.c.bf16 %v2426, %v2425
    %v2437 = vpack.c.bf16 %v2428, %v2427
    %v2438 = vpack.c.bf16 %v2430, %v2429
    %s2439 = scalar_lea.vmem %s3, 64
    %v2440 = vld [vmem:[%s2439] sm:$0xf]
    %v2441 = vld [vmem:[%s2439 + $0x4] sm:$0xf]
    %v2442 = vld [vmem:[%s2439 + $0x8] sm:$0xf]
    %v2443 = vld [vmem:[%s2439 + $0xc] sm:$0xf]
    %v2444 = vld [vmem:[%s2439 + $0x10] sm:$0xf]
    %v2445 = vld [vmem:[%s2439 + $0x14] sm:$0xf]
    %v2446 = vld [vmem:[%s2439 + $0x18] sm:$0xf]
    %v2447 = vld [vmem:[%s2439 + $0x1c] sm:$0xf]
    %v2456 = vunpack.c.l.b16 %v2440
    %v2457 = vunpack.c.l.b16 %v2441
    %v2458 = vunpack.c.l.b16 %v2442
    %v2459 = vunpack.c.l.b16 %v2443
    %v2460 = vunpack.c.l.b16 %v2444
    %v2461 = vunpack.c.l.b16 %v2445
    %v2462 = vunpack.c.l.b16 %v2446
    %v2463 = vunpack.c.l.b16 %v2447
    %v2464 = vpack.c.b16 %v2457, %v2456
    %v2465 = vpack.c.b16 %v2459, %v2458
    %v2466 = vpack.c.b16 %v2461, %v2460
    %v2467 = vpack.c.b16 %v2463, %v2462
    %v2473 = vsel %vm608, %v2431, 0
    %v2476 = vsel %vm608, %v2432, 0
    %v2479 = vsel %vm608, %v2433, 0
    %v2482 = vsel %vm608, %v2434, 0
    %v2485 = vsel %vm608, %v2435, 0
    %v2488 = vsel %vm608, %v2436, 0
    %v2491 = vsel %vm608, %v2437, 0
    %v2494 = vsel %vm608, %v2438, 0
    %2496 = vmatpush.bf16.msra.mxu0 0
    %2497 = vmatpush.bf16.msra.mxu0 0
    %2498 = vmatpush.bf16.msra.mxu0 0
    %2499 = vmatpush.bf16.msra.mxu0 0
    %2500 = vmatpush.bf16.msra.mxu0 %v2467
    %2501 = vmatpush.bf16.msra.mxu0 %v2466
    %2502 = vmatpush.bf16.msra.mxu0 %v2465
    %2503 = vmatpush.bf16.msra.mxu0 %v2464
    %2504 = vmatmul.bf16.gmra.mxu0 %v2473
    %v2505 = vpop.f32.mrf.mxu0
    %v2506 = vadd.f32 0.0, %v2505
    %v2507 = vpop.f32.mrf.mxu0
    %v2508 = vadd.f32 0.0, %v2507
    %2509 = vmatmul.bf16.gmra.mxu0 %v2476
    %v2510 = vpop.f32.mrf.mxu0
    %v2511 = vadd.f32 0.0, %v2510
    %v2512 = vpop.f32.mrf.mxu0
    %v2513 = vadd.f32 0.0, %v2512
    %2514 = vmatmul.bf16.gmra.mxu0 %v2479
    %v2515 = vpop.f32.mrf.mxu0
    %v2516 = vadd.f32 0.0, %v2515
    %v2517 = vpop.f32.mrf.mxu0
    %v2518 = vadd.f32 0.0, %v2517
    %2519 = vmatmul.bf16.gmra.mxu0 %v2482
    %v2520 = vpop.f32.mrf.mxu0
    %v2521 = vadd.f32 0.0, %v2520
    %v2522 = vpop.f32.mrf.mxu0
    %v2523 = vadd.f32 0.0, %v2522
    %2524 = vmatmul.bf16.gmra.mxu0 %v2485
    %v2525 = vpop.f32.mrf.mxu0
    %v2526 = vadd.f32 0.0, %v2525
    %v2527 = vpop.f32.mrf.mxu0
    %v2528 = vadd.f32 0.0, %v2527
    %2529 = vmatmul.bf16.gmra.mxu0 %v2488
    %v2530 = vpop.f32.mrf.mxu0
    %v2531 = vadd.f32 0.0, %v2530
    %v2532 = vpop.f32.mrf.mxu0
    %v2533 = vadd.f32 0.0, %v2532
    %2534 = vmatmul.bf16.gmra.mxu0 %v2491
    %v2535 = vpop.f32.mrf.mxu0
    %v2536 = vadd.f32 0.0, %v2535
    %v2537 = vpop.f32.mrf.mxu0
    %v2538 = vadd.f32 0.0, %v2537
    %2539 = vmatmul.bf16.gmra.mxu0 %v2494
    %v2540 = vpop.f32.mrf.mxu0
    %v2541 = vadd.f32 0.0, %v2540
    %v2542 = vpop.f32.mrf.mxu0
    %v2543 = vadd.f32 0.0, %v2542
    %2544 = vdwg.mxu0
    %v2545 = vadd.f32 %v2376, %v2506
    %v2546 = vadd.f32 %v2378, %v2508
    %v2547 = vadd.f32 %v2381, %v2511
    %v2548 = vadd.f32 %v2383, %v2513
    %v2549 = vadd.f32 %v2386, %v2516
    %v2550 = vadd.f32 %v2388, %v2518
    %v2551 = vadd.f32 %v2391, %v2521
    %v2552 = vadd.f32 %v2393, %v2523
    %v2553 = vadd.f32 %v2396, %v2526
    %v2554 = vadd.f32 %v2398, %v2528
    %v2555 = vadd.f32 %v2401, %v2531
    %v2556 = vadd.f32 %v2403, %v2533
    %v2557 = vadd.f32 %v2406, %v2536
    %v2558 = vadd.f32 %v2408, %v2538
    %v2559 = vadd.f32 %v2411, %v2541
    %v2560 = vadd.f32 %v2413, %v2543
    %v2561 = vld [vmem:[%s2139] sm:$0xff]
    %v2562 = vld [vmem:[%s2139 + $0x10] sm:$0xff]
    %v2563 = vld [vmem:[%s2139 + $0x20] sm:$0xff]
    %v2564 = vld [vmem:[%s2139 + $0x30] sm:$0xff]
    %v2565 = vld [vmem:[%s2139 + $0x40] sm:$0xff]
    %v2566 = vld [vmem:[%s2139 + $0x50] sm:$0xff]
    %v2567 = vld [vmem:[%s2139 + $0x60] sm:$0xff]
    %v2568 = vld [vmem:[%s2139 + $0x70] sm:$0xff]
    %v2569 = vld [vmem:[%s2139 + $0xa0] sm:$0xff]
    %v2570 = vld [vmem:[%s2139 + $0xb0] sm:$0xff]
    %v2571 = vld [vmem:[%s2139 + $0xc0] sm:$0xff]
    %v2572 = vld [vmem:[%s2139 + $0xd0] sm:$0xff]
    %v2573 = vld [vmem:[%s2139 + $0xe0] sm:$0xff]
    %v2574 = vld [vmem:[%s2139 + $0xf0] sm:$0xff]
    %v2575 = vld [vmem:[%s2139 + $0x100] sm:$0xff]
    %v2576 = vld [vmem:[%s2139 + $0x110] sm:$0xff]
    %v2577 = vpack.c.bf16 %v2562, %v2561
    %v2578 = vpack.c.bf16 %v2564, %v2563
    %v2579 = vpack.c.bf16 %v2566, %v2565
    %v2580 = vpack.c.bf16 %v2568, %v2567
    %v2581 = vpack.c.bf16 %v2570, %v2569
    %v2582 = vpack.c.bf16 %v2572, %v2571
    %v2583 = vpack.c.bf16 %v2574, %v2573
    %v2584 = vpack.c.bf16 %v2576, %v2575
    %s2585 = scalar_lea.vmem %s3, 96
    %v2586 = vld [vmem:[%s2585] sm:$0xf]
    %v2587 = vld [vmem:[%s2585 + $0x4] sm:$0xf]
    %v2588 = vld [vmem:[%s2585 + $0x8] sm:$0xf]
    %v2589 = vld [vmem:[%s2585 + $0xc] sm:$0xf]
    %v2590 = vld [vmem:[%s2585 + $0x10] sm:$0xf]
    %v2591 = vld [vmem:[%s2585 + $0x14] sm:$0xf]
    %v2592 = vld [vmem:[%s2585 + $0x18] sm:$0xf]
    %v2593 = vld [vmem:[%s2585 + $0x1c] sm:$0xf]
    %v2602 = vunpack.c.l.b16 %v2586
    %v2603 = vunpack.c.l.b16 %v2587
    %v2604 = vunpack.c.l.b16 %v2588
    %v2605 = vunpack.c.l.b16 %v2589
    %v2606 = vunpack.c.l.b16 %v2590
    %v2607 = vunpack.c.l.b16 %v2591
    %v2608 = vunpack.c.l.b16 %v2592
    %v2609 = vunpack.c.l.b16 %v2593
    %v2610 = vpack.c.b16 %v2603, %v2602
    %v2611 = vpack.c.b16 %v2605, %v2604
    %v2612 = vpack.c.b16 %v2607, %v2606
    %v2613 = vpack.c.b16 %v2609, %v2608
    %v2619 = vsel %vm608, %v2577, 0
    %v2622 = vsel %vm608, %v2578, 0
    %v2625 = vsel %vm608, %v2579, 0
    %v2628 = vsel %vm608, %v2580, 0
    %v2631 = vsel %vm608, %v2581, 0
    %v2634 = vsel %vm608, %v2582, 0
    %v2637 = vsel %vm608, %v2583, 0
    %v2640 = vsel %vm608, %v2584, 0
    %2642 = vmatpush.bf16.msra.mxu0 0
    %2643 = vmatpush.bf16.msra.mxu0 0
    %2644 = vmatpush.bf16.msra.mxu0 0
    %2645 = vmatpush.bf16.msra.mxu0 0
    %2646 = vmatpush.bf16.msra.mxu0 %v2613
    %2647 = vmatpush.bf16.msra.mxu0 %v2612
    %2648 = vmatpush.bf16.msra.mxu0 %v2611
    %2649 = vmatpush.bf16.msra.mxu0 %v2610
    %2650 = vmatmul.bf16.gmra.mxu0 %v2619
    %v2651 = vpop.f32.mrf.mxu0
    %v2652 = vadd.f32 0.0, %v2651
    %v2653 = vpop.f32.mrf.mxu0
    %v2654 = vadd.f32 0.0, %v2653
    %2655 = vmatmul.bf16.gmra.mxu0 %v2622
    %v2656 = vpop.f32.mrf.mxu0
    %v2657 = vadd.f32 0.0, %v2656
    %v2658 = vpop.f32.mrf.mxu0
    %v2659 = vadd.f32 0.0, %v2658
    %2660 = vmatmul.bf16.gmra.mxu0 %v2625
    %v2661 = vpop.f32.mrf.mxu0
    %v2662 = vadd.f32 0.0, %v2661
    %v2663 = vpop.f32.mrf.mxu0
    %v2664 = vadd.f32 0.0, %v2663
    %2665 = vmatmul.bf16.gmra.mxu0 %v2628
    %v2666 = vpop.f32.mrf.mxu0
    %v2667 = vadd.f32 0.0, %v2666
    %v2668 = vpop.f32.mrf.mxu0
    %v2669 = vadd.f32 0.0, %v2668
    %2670 = vmatmul.bf16.gmra.mxu0 %v2631
    %v2671 = vpop.f32.mrf.mxu0
    %v2672 = vadd.f32 0.0, %v2671
    %v2673 = vpop.f32.mrf.mxu0
    %v2674 = vadd.f32 0.0, %v2673
    %2675 = vmatmul.bf16.gmra.mxu0 %v2634
    %v2676 = vpop.f32.mrf.mxu0
    %v2677 = vadd.f32 0.0, %v2676
    %v2678 = vpop.f32.mrf.mxu0
    %v2679 = vadd.f32 0.0, %v2678
    %2680 = vmatmul.bf16.gmra.mxu0 %v2637
    %v2681 = vpop.f32.mrf.mxu0
    %v2682 = vadd.f32 0.0, %v2681
    %v2683 = vpop.f32.mrf.mxu0
    %v2684 = vadd.f32 0.0, %v2683
    %2685 = vmatmul.bf16.gmra.mxu0 %v2640
    %v2686 = vpop.f32.mrf.mxu0
    %v2687 = vadd.f32 0.0, %v2686
    %v2688 = vpop.f32.mrf.mxu0
    %v2689 = vadd.f32 0.0, %v2688
    %2690 = vdwg.mxu0
    %v2691 = vadd.f32 %v2545, %v2652
    %v2692 = vadd.f32 %v2546, %v2654
    %v2693 = vadd.f32 %v2547, %v2657
    %v2694 = vadd.f32 %v2548, %v2659
    %v2695 = vadd.f32 %v2549, %v2662
    %v2696 = vadd.f32 %v2550, %v2664
    %v2697 = vadd.f32 %v2551, %v2667
    %v2698 = vadd.f32 %v2552, %v2669
    %v2699 = vadd.f32 %v2553, %v2672
    %v2700 = vadd.f32 %v2554, %v2674
    %v2701 = vadd.f32 %v2555, %v2677
    %v2702 = vadd.f32 %v2556, %v2679
    %v2703 = vadd.f32 %v2557, %v2682
    %v2704 = vadd.f32 %v2558, %v2684
    %v2705 = vadd.f32 %v2559, %v2687
    %v2706 = vadd.f32 %v2560, %v2689
    %v2707 = vld [vmem:[%s2139 + $0x1] sm:$0xff]
    %v2708 = vld [vmem:[%s2139 + $0x11] sm:$0xff]
    %v2709 = vld [vmem:[%s2139 + $0x21] sm:$0xff]
    %v2710 = vld [vmem:[%s2139 + $0x31] sm:$0xff]
    %v2711 = vld [vmem:[%s2139 + $0x41] sm:$0xff]
    %v2712 = vld [vmem:[%s2139 + $0x51] sm:$0xff]
    %v2713 = vld [vmem:[%s2139 + $0x61] sm:$0xff]
    %v2714 = vld [vmem:[%s2139 + $0x71] sm:$0xff]
    %v2715 = vld [vmem:[%s2139 + $0xa1] sm:$0xff]
    %v2716 = vld [vmem:[%s2139 + $0xb1] sm:$0xff]
    %v2717 = vld [vmem:[%s2139 + $0xc1] sm:$0xff]
    %v2718 = vld [vmem:[%s2139 + $0xd1] sm:$0xff]
    %v2719 = vld [vmem:[%s2139 + $0xe1] sm:$0xff]
    %v2720 = vld [vmem:[%s2139 + $0xf1] sm:$0xff]
    %v2721 = vld [vmem:[%s2139 + $0x101] sm:$0xff]
    %v2722 = vld [vmem:[%s2139 + $0x111] sm:$0xff]
    %v2723 = vpack.c.bf16 %v2708, %v2707
    %v2724 = vpack.c.bf16 %v2710, %v2709
    %v2725 = vpack.c.bf16 %v2712, %v2711
    %v2726 = vpack.c.bf16 %v2714, %v2713
    %v2727 = vpack.c.bf16 %v2716, %v2715
    %v2728 = vpack.c.bf16 %v2718, %v2717
    %v2729 = vpack.c.bf16 %v2720, %v2719
    %v2730 = vpack.c.bf16 %v2722, %v2721
    %s2731 = scalar_lea.vmem %s3, 128
    %v2732 = vld [vmem:[%s2731] sm:$0xf]
    %v2733 = vld [vmem:[%s2731 + $0x4] sm:$0xf]
    %v2734 = vld [vmem:[%s2731 + $0x8] sm:$0xf]
    %v2735 = vld [vmem:[%s2731 + $0xc] sm:$0xf]
    %v2736 = vld [vmem:[%s2731 + $0x10] sm:$0xf]
    %v2737 = vld [vmem:[%s2731 + $0x14] sm:$0xf]
    %v2738 = vld [vmem:[%s2731 + $0x18] sm:$0xf]
    %v2739 = vld [vmem:[%s2731 + $0x1c] sm:$0xf]
    %v2748 = vunpack.c.l.b16 %v2732
    %v2749 = vunpack.c.l.b16 %v2733
    %v2750 = vunpack.c.l.b16 %v2734
    %v2751 = vunpack.c.l.b16 %v2735
    %v2752 = vunpack.c.l.b16 %v2736
    %v2753 = vunpack.c.l.b16 %v2737
    %v2754 = vunpack.c.l.b16 %v2738
    %v2755 = vunpack.c.l.b16 %v2739
    %v2756 = vpack.c.b16 %v2749, %v2748
    %v2757 = vpack.c.b16 %v2751, %v2750
    %v2758 = vpack.c.b16 %v2753, %v2752
    %v2759 = vpack.c.b16 %v2755, %v2754
    %v2765 = vsel %vm608, %v2723, 0
    %v2768 = vsel %vm608, %v2724, 0
    %v2771 = vsel %vm608, %v2725, 0
    %v2774 = vsel %vm608, %v2726, 0
    %v2777 = vsel %vm608, %v2727, 0
    %v2780 = vsel %vm608, %v2728, 0
    %v2783 = vsel %vm608, %v2729, 0
    %v2786 = vsel %vm608, %v2730, 0
    %2788 = vmatpush.bf16.msra.mxu0 0
    %2789 = vmatpush.bf16.msra.mxu0 0
    %2790 = vmatpush.bf16.msra.mxu0 0
    %2791 = vmatpush.bf16.msra.mxu0 0
    %2792 = vmatpush.bf16.msra.mxu0 %v2759
    %2793 = vmatpush.bf16.msra.mxu0 %v2758
    %2794 = vmatpush.bf16.msra.mxu0 %v2757
    %2795 = vmatpush.bf16.msra.mxu0 %v2756
    %2796 = vmatmul.bf16.gmra.mxu0 %v2765
    %v2797 = vpop.f32.mrf.mxu0
    %v2798 = vadd.f32 0.0, %v2797
    %v2799 = vpop.f32.mrf.mxu0
    %v2800 = vadd.f32 0.0, %v2799
    %2801 = vmatmul.bf16.gmra.mxu0 %v2768
    %v2802 = vpop.f32.mrf.mxu0
    %v2803 = vadd.f32 0.0, %v2802
    %v2804 = vpop.f32.mrf.mxu0
    %v2805 = vadd.f32 0.0, %v2804
    %2806 = vmatmul.bf16.gmra.mxu0 %v2771
    %v2807 = vpop.f32.mrf.mxu0
    %v2808 = vadd.f32 0.0, %v2807
    %v2809 = vpop.f32.mrf.mxu0
    %v2810 = vadd.f32 0.0, %v2809
    %2811 = vmatmul.bf16.gmra.mxu0 %v2774
    %v2812 = vpop.f32.mrf.mxu0
    %v2813 = vadd.f32 0.0, %v2812
    %v2814 = vpop.f32.mrf.mxu0
    %v2815 = vadd.f32 0.0, %v2814
    %2816 = vmatmul.bf16.gmra.mxu0 %v2777
    %v2817 = vpop.f32.mrf.mxu0
    %v2818 = vadd.f32 0.0, %v2817
    %v2819 = vpop.f32.mrf.mxu0
    %v2820 = vadd.f32 0.0, %v2819
    %2821 = vmatmul.bf16.gmra.mxu0 %v2780
    %v2822 = vpop.f32.mrf.mxu0
    %v2823 = vadd.f32 0.0, %v2822
    %v2824 = vpop.f32.mrf.mxu0
    %v2825 = vadd.f32 0.0, %v2824
    %2826 = vmatmul.bf16.gmra.mxu0 %v2783
    %v2827 = vpop.f32.mrf.mxu0
    %v2828 = vadd.f32 0.0, %v2827
    %v2829 = vpop.f32.mrf.mxu0
    %v2830 = vadd.f32 0.0, %v2829
    %2831 = vmatmul.bf16.gmra.mxu0 %v2786
    %v2832 = vpop.f32.mrf.mxu0
    %v2833 = vadd.f32 0.0, %v2832
    %v2834 = vpop.f32.mrf.mxu0
    %v2835 = vadd.f32 0.0, %v2834
    %2836 = vdwg.mxu0
    %v2837 = vadd.f32 %v2691, %v2798
    %v2838 = vadd.f32 %v2692, %v2800
    %v2839 = vadd.f32 %v2693, %v2803
    %v2840 = vadd.f32 %v2694, %v2805
    %v2841 = vadd.f32 %v2695, %v2808
    %v2842 = vadd.f32 %v2696, %v2810
    %v2843 = vadd.f32 %v2697, %v2813
    %v2844 = vadd.f32 %v2698, %v2815
    %v2845 = vadd.f32 %v2699, %v2818
    %v2846 = vadd.f32 %v2700, %v2820
    %v2847 = vadd.f32 %v2701, %v2823
    %v2848 = vadd.f32 %v2702, %v2825
    %v2849 = vadd.f32 %v2703, %v2828
    %v2850 = vadd.f32 %v2704, %v2830
    %v2851 = vadd.f32 %v2705, %v2833
    %v2852 = vadd.f32 %v2706, %v2835
    %v2853 = vld [vmem:[%s2139 + $0x2] sm:$0xff]
    %v2854 = vld [vmem:[%s2139 + $0x12] sm:$0xff]
    %v2855 = vld [vmem:[%s2139 + $0x22] sm:$0xff]
    %v2856 = vld [vmem:[%s2139 + $0x32] sm:$0xff]
    %v2857 = vld [vmem:[%s2139 + $0x42] sm:$0xff]
    %v2858 = vld [vmem:[%s2139 + $0x52] sm:$0xff]
    %v2859 = vld [vmem:[%s2139 + $0x62] sm:$0xff]
    %v2860 = vld [vmem:[%s2139 + $0x72] sm:$0xff]
    %v2861 = vld [vmem:[%s2139 + $0xa2] sm:$0xff]
    %v2862 = vld [vmem:[%s2139 + $0xb2] sm:$0xff]
    %v2863 = vld [vmem:[%s2139 + $0xc2] sm:$0xff]
    %v2864 = vld [vmem:[%s2139 + $0xd2] sm:$0xff]
    %v2865 = vld [vmem:[%s2139 + $0xe2] sm:$0xff]
    %v2866 = vld [vmem:[%s2139 + $0xf2] sm:$0xff]
    %v2867 = vld [vmem:[%s2139 + $0x102] sm:$0xff]
    %v2868 = vld [vmem:[%s2139 + $0x112] sm:$0xff]
    %v2869 = vpack.c.bf16 %v2854, %v2853
    %v2870 = vpack.c.bf16 %v2856, %v2855
    %v2871 = vpack.c.bf16 %v2858, %v2857
    %v2872 = vpack.c.bf16 %v2860, %v2859
    %v2873 = vpack.c.bf16 %v2862, %v2861
    %v2874 = vpack.c.bf16 %v2864, %v2863
    %v2875 = vpack.c.bf16 %v2866, %v2865
    %v2876 = vpack.c.bf16 %v2868, %v2867
    %s2877 = scalar_lea.vmem %s3, 160
    %v2878 = vld [vmem:[%s2877] sm:$0xf]
    %v2879 = vld [vmem:[%s2877 + $0x4] sm:$0xf]
    %v2880 = vld [vmem:[%s2877 + $0x8] sm:$0xf]
    %v2881 = vld [vmem:[%s2877 + $0xc] sm:$0xf]
    %v2882 = vld [vmem:[%s2877 + $0x10] sm:$0xf]
    %v2883 = vld [vmem:[%s2877 + $0x14] sm:$0xf]
    %v2884 = vld [vmem:[%s2877 + $0x18] sm:$0xf]
    %v2885 = vld [vmem:[%s2877 + $0x1c] sm:$0xf]
    %v2894 = vunpack.c.l.b16 %v2878
    %v2895 = vunpack.c.l.b16 %v2879
    %v2896 = vunpack.c.l.b16 %v2880
    %v2897 = vunpack.c.l.b16 %v2881
    %v2898 = vunpack.c.l.b16 %v2882
    %v2899 = vunpack.c.l.b16 %v2883
    %v2900 = vunpack.c.l.b16 %v2884
    %v2901 = vunpack.c.l.b16 %v2885
    %v2902 = vpack.c.b16 %v2895, %v2894
    %v2903 = vpack.c.b16 %v2897, %v2896
    %v2904 = vpack.c.b16 %v2899, %v2898
    %v2905 = vpack.c.b16 %v2901, %v2900
    %v2911 = vsel %vm608, %v2869, 0
    %v2914 = vsel %vm608, %v2870, 0
    %v2917 = vsel %vm608, %v2871, 0
    %v2920 = vsel %vm608, %v2872, 0
    %v2923 = vsel %vm608, %v2873, 0
    %v2926 = vsel %vm608, %v2874, 0
    %v2929 = vsel %vm608, %v2875, 0
    %v2932 = vsel %vm608, %v2876, 0
    %2934 = vmatpush.bf16.msra.mxu0 0
    %2935 = vmatpush.bf16.msra.mxu0 0
    %2936 = vmatpush.bf16.msra.mxu0 0
    %2937 = vmatpush.bf16.msra.mxu0 0
    %2938 = vmatpush.bf16.msra.mxu0 %v2905
    %2939 = vmatpush.bf16.msra.mxu0 %v2904
    %2940 = vmatpush.bf16.msra.mxu0 %v2903
    %2941 = vmatpush.bf16.msra.mxu0 %v2902
    %2942 = vmatmul.bf16.gmra.mxu0 %v2911
    %v2943 = vpop.f32.mrf.mxu0
    %v2944 = vadd.f32 0.0, %v2943
    %v2945 = vpop.f32.mrf.mxu0
    %v2946 = vadd.f32 0.0, %v2945
    %2947 = vmatmul.bf16.gmra.mxu0 %v2914
    %v2948 = vpop.f32.mrf.mxu0
    %v2949 = vadd.f32 0.0, %v2948
    %v2950 = vpop.f32.mrf.mxu0
    %v2951 = vadd.f32 0.0, %v2950
    %2952 = vmatmul.bf16.gmra.mxu0 %v2917
    %v2953 = vpop.f32.mrf.mxu0
    %v2954 = vadd.f32 0.0, %v2953
    %v2955 = vpop.f32.mrf.mxu0
    %v2956 = vadd.f32 0.0, %v2955
    %2957 = vmatmul.bf16.gmra.mxu0 %v2920
    %v2958 = vpop.f32.mrf.mxu0
    %v2959 = vadd.f32 0.0, %v2958
    %v2960 = vpop.f32.mrf.mxu0
    %v2961 = vadd.f32 0.0, %v2960
    %2962 = vmatmul.bf16.gmra.mxu0 %v2923
    %v2963 = vpop.f32.mrf.mxu0
    %v2964 = vadd.f32 0.0, %v2963
    %v2965 = vpop.f32.mrf.mxu0
    %v2966 = vadd.f32 0.0, %v2965
    %2967 = vmatmul.bf16.gmra.mxu0 %v2926
    %v2968 = vpop.f32.mrf.mxu0
    %v2969 = vadd.f32 0.0, %v2968
    %v2970 = vpop.f32.mrf.mxu0
    %v2971 = vadd.f32 0.0, %v2970
    %2972 = vmatmul.bf16.gmra.mxu0 %v2929
    %v2973 = vpop.f32.mrf.mxu0
    %v2974 = vadd.f32 0.0, %v2973
    %v2975 = vpop.f32.mrf.mxu0
    %v2976 = vadd.f32 0.0, %v2975
    %2977 = vmatmul.bf16.gmra.mxu0 %v2932
    %v2978 = vpop.f32.mrf.mxu0
    %v2979 = vadd.f32 0.0, %v2978
    %v2980 = vpop.f32.mrf.mxu0
    %v2981 = vadd.f32 0.0, %v2980
    %2982 = vdwg.mxu0
    %v2983 = vadd.f32 %v2837, %v2944
    %v2984 = vadd.f32 %v2838, %v2946
    %v2985 = vadd.f32 %v2839, %v2949
    %v2986 = vadd.f32 %v2840, %v2951
    %v2987 = vadd.f32 %v2841, %v2954
    %v2988 = vadd.f32 %v2842, %v2956
    %v2989 = vadd.f32 %v2843, %v2959
    %v2990 = vadd.f32 %v2844, %v2961
    %v2991 = vadd.f32 %v2845, %v2964
    %v2992 = vadd.f32 %v2846, %v2966
    %v2993 = vadd.f32 %v2847, %v2969
    %v2994 = vadd.f32 %v2848, %v2971
    %v2995 = vadd.f32 %v2849, %v2974
    %v2996 = vadd.f32 %v2850, %v2976
    %v2997 = vadd.f32 %v2851, %v2979
    %v2998 = vadd.f32 %v2852, %v2981
    %s2999 = scalar_lea.vmem [#allocation2], 32
    %v3000 = vld [vmem:[%s2999] sm:$0xff]
    %v3001 = vld [vmem:[%s2999 + $0x10] sm:$0xff]
    %v3002 = vld [vmem:[%s2999 + $0x20] sm:$0xff]
    %v3003 = vld [vmem:[%s2999 + $0x30] sm:$0xff]
    %v3004 = vld [vmem:[%s2999 + $0x40] sm:$0xff]
    %v3005 = vld [vmem:[%s2999 + $0x50] sm:$0xff]
    %v3006 = vld [vmem:[%s2999 + $0x60] sm:$0xff]
    %v3007 = vld [vmem:[%s2999 + $0x70] sm:$0xff]
    %v3008 = vld [vmem:[%s2999 + $0xa0] sm:$0xff]
    %v3009 = vld [vmem:[%s2999 + $0xb0] sm:$0xff]
    %v3010 = vld [vmem:[%s2999 + $0xc0] sm:$0xff]
    %v3011 = vld [vmem:[%s2999 + $0xd0] sm:$0xff]
    %v3012 = vld [vmem:[%s2999 + $0xe0] sm:$0xff]
    %v3013 = vld [vmem:[%s2999 + $0xf0] sm:$0xff]
    %v3014 = vld [vmem:[%s2999 + $0x100] sm:$0xff]
    %v3015 = vld [vmem:[%s2999 + $0x110] sm:$0xff]
    %v3016 = vpack.c.bf16 %v3001, %v3000
    %v3017 = vpack.c.bf16 %v3003, %v3002
    %v3018 = vpack.c.bf16 %v3005, %v3004
    %v3019 = vpack.c.bf16 %v3007, %v3006
    %v3020 = vpack.c.bf16 %v3009, %v3008
    %v3021 = vpack.c.bf16 %v3011, %v3010
    %v3022 = vpack.c.bf16 %v3013, %v3012
    %v3023 = vpack.c.bf16 %v3015, %v3014
    %s3024 = scalar_lea.vmem %s3, 192
    %v3025 = vld [vmem:[%s3024] sm:$0xf]
    %v3026 = vld [vmem:[%s3024 + $0x4] sm:$0xf]
    %v3027 = vld [vmem:[%s3024 + $0x8] sm:$0xf]
    %v3028 = vld [vmem:[%s3024 + $0xc] sm:$0xf]
    %v3029 = vld [vmem:[%s3024 + $0x10] sm:$0xf]
    %v3030 = vld [vmem:[%s3024 + $0x14] sm:$0xf]
    %v3031 = vld [vmem:[%s3024 + $0x18] sm:$0xf]
    %v3032 = vld [vmem:[%s3024 + $0x1c] sm:$0xf]
    %v3041 = vunpack.c.l.b16 %v3025
    %v3042 = vunpack.c.l.b16 %v3026
    %v3043 = vunpack.c.l.b16 %v3027
    %v3044 = vunpack.c.l.b16 %v3028
    %v3045 = vunpack.c.l.b16 %v3029
    %v3046 = vunpack.c.l.b16 %v3030
    %v3047 = vunpack.c.l.b16 %v3031
    %v3048 = vunpack.c.l.b16 %v3032
    %v3049 = vpack.c.b16 %v3042, %v3041
    %v3050 = vpack.c.b16 %v3044, %v3043
    %v3051 = vpack.c.b16 %v3046, %v3045
    %v3052 = vpack.c.b16 %v3048, %v3047
    %v3058 = vsel %vm608, %v3016, 0
    %v3061 = vsel %vm608, %v3017, 0
    %v3064 = vsel %vm608, %v3018, 0
    %v3067 = vsel %vm608, %v3019, 0
    %v3070 = vsel %vm608, %v3020, 0
    %v3073 = vsel %vm608, %v3021, 0
    %v3076 = vsel %vm608, %v3022, 0
    %v3079 = vsel %vm608, %v3023, 0
    %3081 = vmatpush.bf16.msra.mxu0 0
    %3082 = vmatpush.bf16.msra.mxu0 0
    %3083 = vmatpush.bf16.msra.mxu0 0
    %3084 = vmatpush.bf16.msra.mxu0 0
    %3085 = vmatpush.bf16.msra.mxu0 %v3052
    %3086 = vmatpush.bf16.msra.mxu0 %v3051
    %3087 = vmatpush.bf16.msra.mxu0 %v3050
    %3088 = vmatpush.bf16.msra.mxu0 %v3049
    %3089 = vmatmul.bf16.gmra.mxu0 %v3058
    %v3090 = vpop.f32.mrf.mxu0
    %v3091 = vadd.f32 0.0, %v3090
    %v3092 = vpop.f32.mrf.mxu0
    %v3093 = vadd.f32 0.0, %v3092
    %3094 = vmatmul.bf16.gmra.mxu0 %v3061
    %v3095 = vpop.f32.mrf.mxu0
    %v3096 = vadd.f32 0.0, %v3095
    %v3097 = vpop.f32.mrf.mxu0
    %v3098 = vadd.f32 0.0, %v3097
    %3099 = vmatmul.bf16.gmra.mxu0 %v3064
    %v3100 = vpop.f32.mrf.mxu0
    %v3101 = vadd.f32 0.0, %v3100
    %v3102 = vpop.f32.mrf.mxu0
    %v3103 = vadd.f32 0.0, %v3102
    %3104 = vmatmul.bf16.gmra.mxu0 %v3067
    %v3105 = vpop.f32.mrf.mxu0
    %v3106 = vadd.f32 0.0, %v3105
    %v3107 = vpop.f32.mrf.mxu0
    %v3108 = vadd.f32 0.0, %v3107
    %3109 = vmatmul.bf16.gmra.mxu0 %v3070
    %v3110 = vpop.f32.mrf.mxu0
    %v3111 = vadd.f32 0.0, %v3110
    %v3112 = vpop.f32.mrf.mxu0
    %v3113 = vadd.f32 0.0, %v3112
    %3114 = vmatmul.bf16.gmra.mxu0 %v3073
    %v3115 = vpop.f32.mrf.mxu0
    %v3116 = vadd.f32 0.0, %v3115
    %v3117 = vpop.f32.mrf.mxu0
    %v3118 = vadd.f32 0.0, %v3117
    %3119 = vmatmul.bf16.gmra.mxu0 %v3076
    %v3120 = vpop.f32.mrf.mxu0
    %v3121 = vadd.f32 0.0, %v3120
    %v3122 = vpop.f32.mrf.mxu0
    %v3123 = vadd.f32 0.0, %v3122
    %3124 = vmatmul.bf16.gmra.mxu0 %v3079
    %v3125 = vpop.f32.mrf.mxu0
    %v3126 = vadd.f32 0.0, %v3125
    %v3127 = vpop.f32.mrf.mxu0
    %v3128 = vadd.f32 0.0, %v3127
    %3129 = vdwg.mxu0
    %v3130 = vadd.f32 %v2983, %v3091
    %v3131 = vadd.f32 %v2984, %v3093
    %v3132 = vadd.f32 %v2985, %v3096
    %v3133 = vadd.f32 %v2986, %v3098
    %v3134 = vadd.f32 %v2987, %v3101
    %v3135 = vadd.f32 %v2988, %v3103
    %v3136 = vadd.f32 %v2989, %v3106
    %v3137 = vadd.f32 %v2990, %v3108
    %v3138 = vadd.f32 %v2991, %v3111
    %v3139 = vadd.f32 %v2992, %v3113
    %v3140 = vadd.f32 %v2993, %v3116
    %v3141 = vadd.f32 %v2994, %v3118
    %v3142 = vadd.f32 %v2995, %v3121
    %v3143 = vadd.f32 %v2996, %v3123
    %v3144 = vadd.f32 %v2997, %v3126
    %v3145 = vadd.f32 %v2998, %v3128
    %v3146 = vld [vmem:[%s2999 + $0x1] sm:$0xff]
    %v3147 = vld [vmem:[%s2999 + $0x11] sm:$0xff]
    %v3148 = vld [vmem:[%s2999 + $0x21] sm:$0xff]
    %v3149 = vld [vmem:[%s2999 + $0x31] sm:$0xff]
    %v3150 = vld [vmem:[%s2999 + $0x41] sm:$0xff]
    %v3151 = vld [vmem:[%s2999 + $0x51] sm:$0xff]
    %v3152 = vld [vmem:[%s2999 + $0x61] sm:$0xff]
    %v3153 = vld [vmem:[%s2999 + $0x71] sm:$0xff]
    %v3154 = vld [vmem:[%s2999 + $0xa1] sm:$0xff]
    %v3155 = vld [vmem:[%s2999 + $0xb1] sm:$0xff]
    %v3156 = vld [vmem:[%s2999 + $0xc1] sm:$0xff]
    %v3157 = vld [vmem:[%s2999 + $0xd1] sm:$0xff]
    %v3158 = vld [vmem:[%s2999 + $0xe1] sm:$0xff]
    %v3159 = vld [vmem:[%s2999 + $0xf1] sm:$0xff]
    %v3160 = vld [vmem:[%s2999 + $0x101] sm:$0xff]
    %v3161 = vld [vmem:[%s2999 + $0x111] sm:$0xff]
    %v3162 = vpack.c.bf16 %v3147, %v3146
    %v3163 = vpack.c.bf16 %v3149, %v3148
    %v3164 = vpack.c.bf16 %v3151, %v3150
    %v3165 = vpack.c.bf16 %v3153, %v3152
    %v3166 = vpack.c.bf16 %v3155, %v3154
    %v3167 = vpack.c.bf16 %v3157, %v3156
    %v3168 = vpack.c.bf16 %v3159, %v3158
    %v3169 = vpack.c.bf16 %v3161, %v3160
    %s3170 = scalar_lea.vmem %s3, 224
    %v3171 = vld [vmem:[%s3170] sm:$0xf]
    %v3172 = vld [vmem:[%s3170 + $0x4] sm:$0xf]
    %v3173 = vld [vmem:[%s3170 + $0x8] sm:$0xf]
    %v3174 = vld [vmem:[%s3170 + $0xc] sm:$0xf]
    %v3175 = vld [vmem:[%s3170 + $0x10] sm:$0xf]
    %v3176 = vld [vmem:[%s3170 + $0x14] sm:$0xf]
    %v3177 = vld [vmem:[%s3170 + $0x18] sm:$0xf]
    %v3178 = vld [vmem:[%s3170 + $0x1c] sm:$0xf]
    %v3187 = vunpack.c.l.b16 %v3171
    %v3188 = vunpack.c.l.b16 %v3172
    %v3189 = vunpack.c.l.b16 %v3173
    %v3190 = vunpack.c.l.b16 %v3174
    %v3191 = vunpack.c.l.b16 %v3175
    %v3192 = vunpack.c.l.b16 %v3176
    %v3193 = vunpack.c.l.b16 %v3177
    %v3194 = vunpack.c.l.b16 %v3178
    %v3195 = vpack.c.b16 %v3188, %v3187
    %v3196 = vpack.c.b16 %v3190, %v3189
    %v3197 = vpack.c.b16 %v3192, %v3191
    %v3198 = vpack.c.b16 %v3194, %v3193
    %v3204 = vsel %vm608, %v3162, 0
    %v3207 = vsel %vm608, %v3163, 0
    %v3210 = vsel %vm608, %v3164, 0
    %v3213 = vsel %vm608, %v3165, 0
    %v3216 = vsel %vm608, %v3166, 0
    %v3219 = vsel %vm608, %v3167, 0
    %v3222 = vsel %vm608, %v3168, 0
    %v3225 = vsel %vm608, %v3169, 0
    %3227 = vmatpush.bf16.msra.mxu0 0
    %3228 = vmatpush.bf16.msra.mxu0 0
    %3229 = vmatpush.bf16.msra.mxu0 0
    %3230 = vmatpush.bf16.msra.mxu0 0
    %3231 = vmatpush.bf16.msra.mxu0 %v3198
    %3232 = vmatpush.bf16.msra.mxu0 %v3197
    %3233 = vmatpush.bf16.msra.mxu0 %v3196
    %3234 = vmatpush.bf16.msra.mxu0 %v3195
    %3235 = vmatmul.bf16.gmra.mxu0 %v3204
    %v3236 = vpop.f32.mrf.mxu0
    %v3237 = vadd.f32 0.0, %v3236
    %v3238 = vpop.f32.mrf.mxu0
    %v3239 = vadd.f32 0.0, %v3238
    %3240 = vmatmul.bf16.gmra.mxu0 %v3207
    %v3241 = vpop.f32.mrf.mxu0
    %v3242 = vadd.f32 0.0, %v3241
    %v3243 = vpop.f32.mrf.mxu0
    %v3244 = vadd.f32 0.0, %v3243
    %3245 = vmatmul.bf16.gmra.mxu0 %v3210
    %v3246 = vpop.f32.mrf.mxu0
    %v3247 = vadd.f32 0.0, %v3246
    %v3248 = vpop.f32.mrf.mxu0
    %v3249 = vadd.f32 0.0, %v3248
    %3250 = vmatmul.bf16.gmra.mxu0 %v3213
    %v3251 = vpop.f32.mrf.mxu0
    %v3252 = vadd.f32 0.0, %v3251
    %v3253 = vpop.f32.mrf.mxu0
    %v3254 = vadd.f32 0.0, %v3253
    %3255 = vmatmul.bf16.gmra.mxu0 %v3216
    %v3256 = vpop.f32.mrf.mxu0
    %v3257 = vadd.f32 0.0, %v3256
    %v3258 = vpop.f32.mrf.mxu0
    %v3259 = vadd.f32 0.0, %v3258
    %3260 = vmatmul.bf16.gmra.mxu0 %v3219
    %v3261 = vpop.f32.mrf.mxu0
    %v3262 = vadd.f32 0.0, %v3261
    %v3263 = vpop.f32.mrf.mxu0
    %v3264 = vadd.f32 0.0, %v3263
    %3265 = vmatmul.bf16.gmra.mxu0 %v3222
    %v3266 = vpop.f32.mrf.mxu0
    %v3267 = vadd.f32 0.0, %v3266
    %v3268 = vpop.f32.mrf.mxu0
    %v3269 = vadd.f32 0.0, %v3268
    %3270 = vmatmul.bf16.gmra.mxu0 %v3225
    %v3271 = vpop.f32.mrf.mxu0
    %v3272 = vadd.f32 0.0, %v3271
    %v3273 = vpop.f32.mrf.mxu0
    %v3274 = vadd.f32 0.0, %v3273
    %3275 = vdwg.mxu0
    %v3276 = vadd.f32 %v3130, %v3237
    %v3277 = vadd.f32 %v3131, %v3239
    %v3278 = vadd.f32 %v3132, %v3242
    %v3279 = vadd.f32 %v3133, %v3244
    %v3280 = vadd.f32 %v3134, %v3247
    %v3281 = vadd.f32 %v3135, %v3249
    %v3282 = vadd.f32 %v3136, %v3252
    %v3283 = vadd.f32 %v3137, %v3254
    %v3284 = vadd.f32 %v3138, %v3257
    %v3285 = vadd.f32 %v3139, %v3259
    %v3286 = vadd.f32 %v3140, %v3262
    %v3287 = vadd.f32 %v3141, %v3264
    %v3288 = vadd.f32 %v3142, %v3267
    %v3289 = vadd.f32 %v3143, %v3269
    %v3290 = vadd.f32 %v3144, %v3272
    %v3291 = vadd.f32 %v3145, %v3274
    %v3292 = vld [vmem:[%s2999 + $0x2] sm:$0xff]
    %v3293 = vld [vmem:[%s2999 + $0x12] sm:$0xff]
    %v3294 = vld [vmem:[%s2999 + $0x22] sm:$0xff]
    %v3295 = vld [vmem:[%s2999 + $0x32] sm:$0xff]
    %v3296 = vld [vmem:[%s2999 + $0x42] sm:$0xff]
    %v3297 = vld [vmem:[%s2999 + $0x52] sm:$0xff]
    %v3298 = vld [vmem:[%s2999 + $0x62] sm:$0xff]
    %v3299 = vld [vmem:[%s2999 + $0x72] sm:$0xff]
    %v3300 = vld [vmem:[%s2999 + $0xa2] sm:$0xff]
    %v3301 = vld [vmem:[%s2999 + $0xb2] sm:$0xff]
    %v3302 = vld [vmem:[%s2999 + $0xc2] sm:$0xff]
    %v3303 = vld [vmem:[%s2999 + $0xd2] sm:$0xff]
    %v3304 = vld [vmem:[%s2999 + $0xe2] sm:$0xff]
    %v3305 = vld [vmem:[%s2999 + $0xf2] sm:$0xff]
    %v3306 = vld [vmem:[%s2999 + $0x102] sm:$0xff]
    %v3307 = vld [vmem:[%s2999 + $0x112] sm:$0xff]
    %v3308 = vpack.c.bf16 %v3293, %v3292
    %v3309 = vpack.c.bf16 %v3295, %v3294
    %v3310 = vpack.c.bf16 %v3297, %v3296
    %v3311 = vpack.c.bf16 %v3299, %v3298
    %v3312 = vpack.c.bf16 %v3301, %v3300
    %v3313 = vpack.c.bf16 %v3303, %v3302
    %v3314 = vpack.c.bf16 %v3305, %v3304
    %v3315 = vpack.c.bf16 %v3307, %v3306
    %s3316 = scalar_lea.vmem %s3, 256
    %v3317 = vld [vmem:[%s3316] sm:$0xf]
    %v3318 = vld [vmem:[%s3316 + $0x4] sm:$0xf]
    %v3319 = vld [vmem:[%s3316 + $0x8] sm:$0xf]
    %v3320 = vld [vmem:[%s3316 + $0xc] sm:$0xf]
    %v3321 = vld [vmem:[%s3316 + $0x10] sm:$0xf]
    %v3322 = vld [vmem:[%s3316 + $0x14] sm:$0xf]
    %v3323 = vld [vmem:[%s3316 + $0x18] sm:$0xf]
    %v3324 = vld [vmem:[%s3316 + $0x1c] sm:$0xf]
    %v3333 = vunpack.c.l.b16 %v3317
    %v3334 = vunpack.c.l.b16 %v3318
    %v3335 = vunpack.c.l.b16 %v3319
    %v3336 = vunpack.c.l.b16 %v3320
    %v3337 = vunpack.c.l.b16 %v3321
    %v3338 = vunpack.c.l.b16 %v3322
    %v3339 = vunpack.c.l.b16 %v3323
    %v3340 = vunpack.c.l.b16 %v3324
    %v3341 = vpack.c.b16 %v3334, %v3333
    %v3342 = vpack.c.b16 %v3336, %v3335
    %v3343 = vpack.c.b16 %v3338, %v3337
    %v3344 = vpack.c.b16 %v3340, %v3339
    %v3350 = vsel %vm608, %v3308, 0
    %v3353 = vsel %vm608, %v3309, 0
    %v3356 = vsel %vm608, %v3310, 0
    %v3359 = vsel %vm608, %v3311, 0
    %v3362 = vsel %vm608, %v3312, 0
    %v3365 = vsel %vm608, %v3313, 0
    %v3368 = vsel %vm608, %v3314, 0
    %v3371 = vsel %vm608, %v3315, 0
    %3373 = vmatpush.bf16.msra.mxu0 0
    %3374 = vmatpush.bf16.msra.mxu0 0
    %3375 = vmatpush.bf16.msra.mxu0 0
    %3376 = vmatpush.bf16.msra.mxu0 0
    %3377 = vmatpush.bf16.msra.mxu0 %v3344
    %3378 = vmatpush.bf16.msra.mxu0 %v3343
    %3379 = vmatpush.bf16.msra.mxu0 %v3342
    %3380 = vmatpush.bf16.msra.mxu0 %v3341
    %3381 = vmatmul.bf16.gmra.mxu0 %v3350
    %v3382 = vpop.f32.mrf.mxu0
    %v3383 = vadd.f32 0.0, %v3382
    %v3384 = vpop.f32.mrf.mxu0
    %v3385 = vadd.f32 0.0, %v3384
    %3386 = vmatmul.bf16.gmra.mxu0 %v3353
    %v3387 = vpop.f32.mrf.mxu0
    %v3388 = vadd.f32 0.0, %v3387
    %v3389 = vpop.f32.mrf.mxu0
    %v3390 = vadd.f32 0.0, %v3389
    %3391 = vmatmul.bf16.gmra.mxu0 %v3356
    %v3392 = vpop.f32.mrf.mxu0
    %v3393 = vadd.f32 0.0, %v3392
    %v3394 = vpop.f32.mrf.mxu0
    %v3395 = vadd.f32 0.0, %v3394
    %3396 = vmatmul.bf16.gmra.mxu0 %v3359
    %v3397 = vpop.f32.mrf.mxu0
    %v3398 = vadd.f32 0.0, %v3397
    %v3399 = vpop.f32.mrf.mxu0
    %v3400 = vadd.f32 0.0, %v3399
    %3401 = vmatmul.bf16.gmra.mxu0 %v3362
    %v3402 = vpop.f32.mrf.mxu0
    %v3403 = vadd.f32 0.0, %v3402
    %v3404 = vpop.f32.mrf.mxu0
    %v3405 = vadd.f32 0.0, %v3404
    %3406 = vmatmul.bf16.gmra.mxu0 %v3365
    %v3407 = vpop.f32.mrf.mxu0
    %v3408 = vadd.f32 0.0, %v3407
    %v3409 = vpop.f32.mrf.mxu0
    %v3410 = vadd.f32 0.0, %v3409
    %3411 = vmatmul.bf16.gmra.mxu0 %v3368
    %v3412 = vpop.f32.mrf.mxu0
    %v3413 = vadd.f32 0.0, %v3412
    %v3414 = vpop.f32.mrf.mxu0
    %v3415 = vadd.f32 0.0, %v3414
    %3416 = vmatmul.bf16.gmra.mxu0 %v3371
    %v3417 = vpop.f32.mrf.mxu0
    %v3418 = vadd.f32 0.0, %v3417
    %v3419 = vpop.f32.mrf.mxu0
    %v3420 = vadd.f32 0.0, %v3419
    %3421 = vdwg.mxu0
    %v3422 = vadd.f32 %v3276, %v3383
    %v3423 = vadd.f32 %v3277, %v3385
    %v3424 = vadd.f32 %v3278, %v3388
    %v3425 = vadd.f32 %v3279, %v3390
    %v3426 = vadd.f32 %v3280, %v3393
    %v3427 = vadd.f32 %v3281, %v3395
    %v3428 = vadd.f32 %v3282, %v3398
    %v3429 = vadd.f32 %v3283, %v3400
    %v3430 = vadd.f32 %v3284, %v3403
    %v3431 = vadd.f32 %v3285, %v3405
    %v3432 = vadd.f32 %v3286, %v3408
    %v3433 = vadd.f32 %v3287, %v3410
    %v3434 = vadd.f32 %v3288, %v3413
    %v3435 = vadd.f32 %v3289, %v3415
    %v3436 = vadd.f32 %v3290, %v3418
    %v3437 = vadd.f32 %v3291, %v3420
    %v3438 = vld [vmem:[%s4] sm:$0x1]
    %v3440 = vperm.slane %v3438, 0
    %v3442 = vadd.f32 %v3422, %v3440
    %v3443 = vadd.f32 %v3423, %v3440
    %v3444 = vadd.f32 %v3424, %v3440
    %v3445 = vadd.f32 %v3425, %v3440
    %v3446 = vadd.f32 %v3426, %v3440
    %v3447 = vadd.f32 %v3427, %v3440
    %v3448 = vadd.f32 %v3428, %v3440
    %v3449 = vadd.f32 %v3429, %v3440
    %v3450 = vadd.f32 %v3430, %v3440
    %v3451 = vadd.f32 %v3431, %v3440
    %v3452 = vadd.f32 %v3432, %v3440
    %v3453 = vadd.f32 %v3433, %v3440
    %v3454 = vadd.f32 %v3434, %v3440
    %v3455 = vadd.f32 %v3435, %v3440
    %v3456 = vadd.f32 %v3436, %v3440
    %v3457 = vadd.f32 %v3437, %v3440
    %v3458 = vmax.f32 %v3442, 0.0
    %v3459 = vmax.f32 %v3443, 0.0
    %v3460 = vmax.f32 %v3444, 0.0
    %v3461 = vmax.f32 %v3445, 0.0
    %v3462 = vmax.f32 %v3446, 0.0
    %v3463 = vmax.f32 %v3447, 0.0
    %v3464 = vmax.f32 %v3448, 0.0
    %v3465 = vmax.f32 %v3449, 0.0
    %v3466 = vmax.f32 %v3450, 0.0
    %v3467 = vmax.f32 %v3451, 0.0
    %v3468 = vmax.f32 %v3452, 0.0
    %v3469 = vmax.f32 %v3453, 0.0
    %v3470 = vmax.f32 %v3454, 0.0
    %v3471 = vmax.f32 %v3455, 0.0
    %v3472 = vmax.f32 %v3456, 0.0
    %v3473 = vmax.f32 %v3457, 0.0
    %v3474 = vsel %vm608, %v3458, -inf
    %v3475 = vsel %vm608, %v3459, -inf
    %v3476 = vmax.f32 %v3474, %v3475
    %v3477 = vsel %vm608, %v3460, -inf
    %v3478 = vsel %vm608, %v3461, -inf
    %v3479 = vmax.f32 %v3477, %v3478
    %v3480 = vsel %vm608, %v3462, -inf
    %v3481 = vsel %vm608, %v3463, -inf
    %v3482 = vmax.f32 %v3480, %v3481
    %v3483 = vsel %vm608, %v3464, -inf
    %v3484 = vsel %vm608, %v3465, -inf
    %v3485 = vmax.f32 %v3483, %v3484
    %v3486 = vsel %vm608, %v3466, -inf
    %v3487 = vsel %vm608, %v3467, -inf
    %v3488 = vmax.f32 %v3486, %v3487
    %v3489 = vsel %vm608, %v3468, -inf
    %v3490 = vsel %vm608, %v3469, -inf
    %v3491 = vmax.f32 %v3489, %v3490
    %v3492 = vsel %vm608, %v3470, -inf
    %v3493 = vsel %vm608, %v3471, -inf
    %v3494 = vmax.f32 %v3492, %v3493
    %v3495 = vsel %vm608, %v3472, -inf
    %v3496 = vsel %vm608, %v3473, -inf
    %v3497 = vmax.f32 %v3495, %v3496
    %v3506 = vrot.slane %v3476, 2
    %v3507 = vrot.slane %v3476, 4
    %v3508 = vrot.slane %v3476, 6
    %v3509 = vrot.slane %v3479, 2
    %v3510 = vrot.slane %v3479, 4
    %v3511 = vrot.slane %v3479, 6
    %v3512 = vrot.slane %v3482, 2
    %v3513 = vrot.slane %v3482, 4
    %v3514 = vrot.slane %v3482, 6
    %v3515 = vrot.slane %v3485, 2
    %v3516 = vrot.slane %v3485, 4
    %v3517 = vrot.slane %v3485, 6
    %v3518 = vrot.slane %v3488, 2
    %v3519 = vrot.slane %v3488, 4
    %v3520 = vrot.slane %v3488, 6
    %v3521 = vrot.slane %v3491, 2
    %v3522 = vrot.slane %v3491, 4
    %v3523 = vrot.slane %v3491, 6
    %v3524 = vrot.slane %v3494, 2
    %v3525 = vrot.slane %v3494, 4
    %v3526 = vrot.slane %v3494, 6
    %v3527 = vrot.slane %v3497, 2
    %v3528 = vrot.slane %v3497, 4
    %v3529 = vrot.slane %v3497, 6
    %v3554 = vsel %vm929, %v3476, -inf
    %v3555 = vrot.slane %v3554, 4
    %v3556 = vmax.f32 %v3554, %v3555
    %v3557 = vrot.slane %v3556, 2
    %v3558 = vmax.f32 %v3556, %v3557
    %v3559 = vrot.slane %v3558, 1
    %v3560 = vmax.f32 %v3558, %v3559
    %v3561 = vsel %vm929, %v3506, -inf
    %v3562 = vrot.slane %v3561, 4
    %v3563 = vmax.f32 %v3561, %v3562
    %v3564 = vrot.slane %v3563, 2
    %v3565 = vmax.f32 %v3563, %v3564
    %v3566 = vrot.slane %v3565, 1
    %v3567 = vmax.f32 %v3565, %v3566
    %v3568 = vsel %vm929, %v3507, -inf
    %v3569 = vrot.slane %v3568, 4
    %v3570 = vmax.f32 %v3568, %v3569
    %v3571 = vrot.slane %v3570, 2
    %v3572 = vmax.f32 %v3570, %v3571
    %v3573 = vrot.slane %v3572, 1
    %v3574 = vmax.f32 %v3572, %v3573
    %v3575 = vsel %vm929, %v3508, -inf
    %v3576 = vrot.slane %v3575, 4
    %v3577 = vmax.f32 %v3575, %v3576
    %v3578 = vrot.slane %v3577, 2
    %v3579 = vmax.f32 %v3577, %v3578
    %v3580 = vrot.slane %v3579, 1
    %v3581 = vmax.f32 %v3579, %v3580
    %v3582 = vsel %vm929, %v3479, -inf
    %v3583 = vrot.slane %v3582, 4
    %v3584 = vmax.f32 %v3582, %v3583
    %v3585 = vrot.slane %v3584, 2
    %v3586 = vmax.f32 %v3584, %v3585
    %v3587 = vrot.slane %v3586, 1
    %v3588 = vmax.f32 %v3586, %v3587
    %v3589 = vsel %vm929, %v3509, -inf
    %v3590 = vrot.slane %v3589, 4
    %v3591 = vmax.f32 %v3589, %v3590
    %v3592 = vrot.slane %v3591, 2
    %v3593 = vmax.f32 %v3591, %v3592
    %v3594 = vrot.slane %v3593, 1
    %v3595 = vmax.f32 %v3593, %v3594
    %v3596 = vsel %vm929, %v3510, -inf
    %v3597 = vrot.slane %v3596, 4
    %v3598 = vmax.f32 %v3596, %v3597
    %v3599 = vrot.slane %v3598, 2
    %v3600 = vmax.f32 %v3598, %v3599
    %v3601 = vrot.slane %v3600, 1
    %v3602 = vmax.f32 %v3600, %v3601
    %v3603 = vsel %vm929, %v3511, -inf
    %v3604 = vrot.slane %v3603, 4
    %v3605 = vmax.f32 %v3603, %v3604
    %v3606 = vrot.slane %v3605, 2
    %v3607 = vmax.f32 %v3605, %v3606
    %v3608 = vrot.slane %v3607, 1
    %v3609 = vmax.f32 %v3607, %v3608
    %v3610 = vsel %vm929, %v3482, -inf
    %v3611 = vrot.slane %v3610, 4
    %v3612 = vmax.f32 %v3610, %v3611
    %v3613 = vrot.slane %v3612, 2
    %v3614 = vmax.f32 %v3612, %v3613
    %v3615 = vrot.slane %v3614, 1
    %v3616 = vmax.f32 %v3614, %v3615
    %v3617 = vsel %vm929, %v3512, -inf
    %v3618 = vrot.slane %v3617, 4
    %v3619 = vmax.f32 %v3617, %v3618
    %v3620 = vrot.slane %v3619, 2
    %v3621 = vmax.f32 %v3619, %v3620
    %v3622 = vrot.slane %v3621, 1
    %v3623 = vmax.f32 %v3621, %v3622
    %v3624 = vsel %vm929, %v3513, -inf
    %v3625 = vrot.slane %v3624, 4
    %v3626 = vmax.f32 %v3624, %v3625
    %v3627 = vrot.slane %v3626, 2
    %v3628 = vmax.f32 %v3626, %v3627
    %v3629 = vrot.slane %v3628, 1
    %v3630 = vmax.f32 %v3628, %v3629
    %v3631 = vsel %vm929, %v3514, -inf
    %v3632 = vrot.slane %v3631, 4
    %v3633 = vmax.f32 %v3631, %v3632
    %v3634 = vrot.slane %v3633, 2
    %v3635 = vmax.f32 %v3633, %v3634
    %v3636 = vrot.slane %v3635, 1
    %v3637 = vmax.f32 %v3635, %v3636
    %v3638 = vsel %vm929, %v3485, -inf
    %v3639 = vrot.slane %v3638, 4
    %v3640 = vmax.f32 %v3638, %v3639
    %v3641 = vrot.slane %v3640, 2
    %v3642 = vmax.f32 %v3640, %v3641
    %v3643 = vrot.slane %v3642, 1
    %v3644 = vmax.f32 %v3642, %v3643
    %v3645 = vsel %vm929, %v3515, -inf
    %v3646 = vrot.slane %v3645, 4
    %v3647 = vmax.f32 %v3645, %v3646
    %v3648 = vrot.slane %v3647, 2
    %v3649 = vmax.f32 %v3647, %v3648
    %v3650 = vrot.slane %v3649, 1
    %v3651 = vmax.f32 %v3649, %v3650
    %v3652 = vsel %vm929, %v3516, -inf
    %v3653 = vrot.slane %v3652, 4
    %v3654 = vmax.f32 %v3652, %v3653
    %v3655 = vrot.slane %v3654, 2
    %v3656 = vmax.f32 %v3654, %v3655
    %v3657 = vrot.slane %v3656, 1
    %v3658 = vmax.f32 %v3656, %v3657
    %v3659 = vsel %vm929, %v3517, -inf
    %v3660 = vrot.slane %v3659, 4
    %v3661 = vmax.f32 %v3659, %v3660
    %v3662 = vrot.slane %v3661, 2
    %v3663 = vmax.f32 %v3661, %v3662
    %v3664 = vrot.slane %v3663, 1
    %v3665 = vmax.f32 %v3663, %v3664
    %v3666 = vsel %vm929, %v3488, -inf
    %v3667 = vrot.slane %v3666, 4
    %v3668 = vmax.f32 %v3666, %v3667
    %v3669 = vrot.slane %v3668, 2
    %v3670 = vmax.f32 %v3668, %v3669
    %v3671 = vrot.slane %v3670, 1
    %v3672 = vmax.f32 %v3670, %v3671
    %v3673 = vsel %vm929, %v3518, -inf
    %v3674 = vrot.slane %v3673, 4
    %v3675 = vmax.f32 %v3673, %v3674
    %v3676 = vrot.slane %v3675, 2
    %v3677 = vmax.f32 %v3675, %v3676
    %v3678 = vrot.slane %v3677, 1
    %v3679 = vmax.f32 %v3677, %v3678
    %v3680 = vsel %vm929, %v3519, -inf
    %v3681 = vrot.slane %v3680, 4
    %v3682 = vmax.f32 %v3680, %v3681
    %v3683 = vrot.slane %v3682, 2
    %v3684 = vmax.f32 %v3682, %v3683
    %v3685 = vrot.slane %v3684, 1
    %v3686 = vmax.f32 %v3684, %v3685
    %v3687 = vsel %vm929, %v3520, -inf
    %v3688 = vrot.slane %v3687, 4
    %v3689 = vmax.f32 %v3687, %v3688
    %v3690 = vrot.slane %v3689, 2
    %v3691 = vmax.f32 %v3689, %v3690
    %v3692 = vrot.slane %v3691, 1
    %v3693 = vmax.f32 %v3691, %v3692
    %v3694 = vsel %vm929, %v3491, -inf
    %v3695 = vrot.slane %v3694, 4
    %v3696 = vmax.f32 %v3694, %v3695
    %v3697 = vrot.slane %v3696, 2
    %v3698 = vmax.f32 %v3696, %v3697
    %v3699 = vrot.slane %v3698, 1
    %v3700 = vmax.f32 %v3698, %v3699
    %v3701 = vsel %vm929, %v3521, -inf
    %v3702 = vrot.slane %v3701, 4
    %v3703 = vmax.f32 %v3701, %v3702
    %v3704 = vrot.slane %v3703, 2
    %v3705 = vmax.f32 %v3703, %v3704
    %v3706 = vrot.slane %v3705, 1
    %v3707 = vmax.f32 %v3705, %v3706
    %v3708 = vsel %vm929, %v3522, -inf
    %v3709 = vrot.slane %v3708, 4
    %v3710 = vmax.f32 %v3708, %v3709
    %v3711 = vrot.slane %v3710, 2
    %v3712 = vmax.f32 %v3710, %v3711
    %v3713 = vrot.slane %v3712, 1
    %v3714 = vmax.f32 %v3712, %v3713
    %v3715 = vsel %vm929, %v3523, -inf
    %v3716 = vrot.slane %v3715, 4
    %v3717 = vmax.f32 %v3715, %v3716
    %v3718 = vrot.slane %v3717, 2
    %v3719 = vmax.f32 %v3717, %v3718
    %v3720 = vrot.slane %v3719, 1
    %v3721 = vmax.f32 %v3719, %v3720
    %v3722 = vsel %vm929, %v3494, -inf
    %v3723 = vrot.slane %v3722, 4
    %v3724 = vmax.f32 %v3722, %v3723
    %v3725 = vrot.slane %v3724, 2
    %v3726 = vmax.f32 %v3724, %v3725
    %v3727 = vrot.slane %v3726, 1
    %v3728 = vmax.f32 %v3726, %v3727
    %v3729 = vsel %vm929, %v3524, -inf
    %v3730 = vrot.slane %v3729, 4
    %v3731 = vmax.f32 %v3729, %v3730
    %v3732 = vrot.slane %v3731, 2
    %v3733 = vmax.f32 %v3731, %v3732
    %v3734 = vrot.slane %v3733, 1
    %v3735 = vmax.f32 %v3733, %v3734
    %v3736 = vsel %vm929, %v3525, -inf
    %v3737 = vrot.slane %v3736, 4
    %v3738 = vmax.f32 %v3736, %v3737
    %v3739 = vrot.slane %v3738, 2
    %v3740 = vmax.f32 %v3738, %v3739
    %v3741 = vrot.slane %v3740, 1
    %v3742 = vmax.f32 %v3740, %v3741
    %v3743 = vsel %vm929, %v3526, -inf
    %v3744 = vrot.slane %v3743, 4
    %v3745 = vmax.f32 %v3743, %v3744
    %v3746 = vrot.slane %v3745, 2
    %v3747 = vmax.f32 %v3745, %v3746
    %v3748 = vrot.slane %v3747, 1
    %v3749 = vmax.f32 %v3747, %v3748
    %v3750 = vsel %vm929, %v3497, -inf
    %v3751 = vrot.slane %v3750, 4
    %v3752 = vmax.f32 %v3750, %v3751
    %v3753 = vrot.slane %v3752, 2
    %v3754 = vmax.f32 %v3752, %v3753
    %v3755 = vrot.slane %v3754, 1
    %v3756 = vmax.f32 %v3754, %v3755
    %v3757 = vsel %vm929, %v3527, -inf
    %v3758 = vrot.slane %v3757, 4
    %v3759 = vmax.f32 %v3757, %v3758
    %v3760 = vrot.slane %v3759, 2
    %v3761 = vmax.f32 %v3759, %v3760
    %v3762 = vrot.slane %v3761, 1
    %v3763 = vmax.f32 %v3761, %v3762
    %v3764 = vsel %vm929, %v3528, -inf
    %v3765 = vrot.slane %v3764, 4
    %v3766 = vmax.f32 %v3764, %v3765
    %v3767 = vrot.slane %v3766, 2
    %v3768 = vmax.f32 %v3766, %v3767
    %v3769 = vrot.slane %v3768, 1
    %v3770 = vmax.f32 %v3768, %v3769
    %v3771 = vsel %vm929, %v3529, -inf
    %v3772 = vrot.slane %v3771, 4
    %v3773 = vmax.f32 %v3771, %v3772
    %v3774 = vrot.slane %v3773, 2
    %v3775 = vmax.f32 %v3773, %v3774
    %v3776 = vrot.slane %v3775, 1
    %v3777 = vmax.f32 %v3775, %v3776
    %vm3778 = vcmask 521216
    %3779 = vst.msk [vmem:[#allocation3] sm:$0x3f] %vm3778, 0.0
    %3780 = vst.msk [vmem:[#allocation3 + $0x30] sm:$0x3f] %vm3778, 0.0
    %s3781 = scalar_lea.vmem [#allocation3], 40
    %3782 = vst.msk [vmem:[%s3781] sm:$0x3f] %vm3778, 0.0
    %3783 = vst.msk [vmem:[%s3781 + $0x30] sm:$0x3f] %vm3778, 0.0
    %3784 = vst.msk [vmem:[#allocation3] sm:$0x1] %vm1835, 0.0
    %3785 = vst.msk [vmem:[#allocation3 + $0x8] sm:$0x1] %vm1835, 0.0
    %3786 = vst.msk [vmem:[#allocation3 + $0x10] sm:$0x1] %vm1835, 0.0
    %3787 = vst.msk [vmem:[#allocation3 + $0x18] sm:$0x1] %vm1835, 0.0
    %3788 = vst.msk [vmem:[#allocation3 + $0x20] sm:$0x1] %vm1835, 0.0
    %3789 = vst.msk [vmem:[#allocation3 + $0x28] sm:$0x1] %vm1835, 0.0
    %3790 = vst.msk [vmem:[#allocation3 + $0x30] sm:$0x1] %vm1835, 0.0
    %3791 = vst.msk [vmem:[#allocation3 + $0x38] sm:$0x1] %vm1835, 0.0
    %3792 = vst.msk [vmem:[#allocation3 + $0x40] sm:$0x1] %vm1835, 0.0
    %3793 = vst.msk [vmem:[#allocation3 + $0x48] sm:$0x1] %vm1835, 0.0
    %3794 = vst.msk [vmem:[#allocation3 + $0x50] sm:$0x1] %vm1835, 0.0
    %3795 = vst.msk [vmem:[#allocation3 + $0x58] sm:$0x1] %vm1835, 0.0
    %3796 = vst.msk [vmem:[#allocation3 + $0x5] sm:$0x1] %vm1835, 0.0
    %3797 = vst.msk [vmem:[#allocation3 + $0xd] sm:$0x1] %vm1835, 0.0
    %3798 = vst.msk [vmem:[#allocation3 + $0x15] sm:$0x1] %vm1835, 0.0
    %3799 = vst.msk [vmem:[#allocation3 + $0x1d] sm:$0x1] %vm1835, 0.0
    %3800 = vst.msk [vmem:[#allocation3 + $0x25] sm:$0x1] %vm1835, 0.0
    %3801 = vst.msk [vmem:[#allocation3 + $0x2d] sm:$0x1] %vm1835, 0.0
    %3802 = vst.msk [vmem:[#allocation3 + $0x35] sm:$0x1] %vm1835, 0.0
    %3803 = vst.msk [vmem:[#allocation3 + $0x3d] sm:$0x1] %vm1835, 0.0
    %3804 = vst.msk [vmem:[#allocation3 + $0x45] sm:$0x1] %vm1835, 0.0
    %3805 = vst.msk [vmem:[#allocation3 + $0x4d] sm:$0x1] %vm1835, 0.0
    %3806 = vst.msk [vmem:[#allocation3 + $0x55] sm:$0x1] %vm1835, 0.0
    %3807 = vst.msk [vmem:[#allocation3 + $0x5d] sm:$0x1] %vm1835, 0.0
    %v3840 = vsel %vm2004, %v3567, %v3560
    %v3841 = vsel %vm2006, %v3574, %v3840
    %v3842 = vsel %vm2008, %v3581, %v3841
    %v3843 = vsel %vm2004, %v3595, %v3588
    %v3844 = vsel %vm2006, %v3602, %v3843
    %v3845 = vsel %vm2008, %v3609, %v3844
    %v3846 = vsel %vm2004, %v3623, %v3616
    %v3847 = vsel %vm2006, %v3630, %v3846
    %v3848 = vsel %vm2008, %v3637, %v3847
    %v3849 = vsel %vm2004, %v3651, %v3644
    %v3850 = vsel %vm2006, %v3658, %v3849
    %v3851 = vsel %vm2008, %v3665, %v3850
    %v3852 = vsel %vm2004, %v3679, %v3672
    %v3853 = vsel %vm2006, %v3686, %v3852
    %v3854 = vsel %vm2008, %v3693, %v3853
    %v3855 = vsel %vm2004, %v3707, %v3700
    %v3856 = vsel %vm2006, %v3714, %v3855
    %v3857 = vsel %vm2008, %v3721, %v3856
    %v3858 = vsel %vm2004, %v3735, %v3728
    %v3859 = vsel %vm2006, %v3742, %v3858
    %v3860 = vsel %vm2008, %v3749, %v3859
    %v3861 = vsel %vm2004, %v3763, %v3756
    %v3862 = vsel %vm2006, %v3770, %v3861
    %v3863 = vsel %vm2008, %v3777, %v3862
    %s3872 = scalar_lea.vmem [#allocation3], 8
    %vm3873 = vcmask 519168
    %3874 = vst.msk [vmem:[%s3872 + $0x1] sm:$0xf] %vm3873, %v3842
    %3875 = vst.msk [vmem:[%s3872 + $0x9] sm:$0xf] %vm3873, %v3845
    %3876 = vst.msk [vmem:[%s3872 + $0x11] sm:$0xf] %vm3873, %v3848
    %3877 = vst.msk [vmem:[%s3872 + $0x19] sm:$0xf] %vm3873, %v3851
    %3878 = vst.msk [vmem:[%s3872 + $0x31] sm:$0xf] %vm3873, %v3854
    %3879 = vst.msk [vmem:[%s3872 + $0x39] sm:$0xf] %vm3873, %v3857
    %3880 = vst.msk [vmem:[%s3872 + $0x41] sm:$0xf] %vm3873, %v3860
    %3881 = vst.msk [vmem:[%s3872 + $0x49] sm:$0xf] %vm3873, %v3863
    %v3882 = vld [vmem:[#allocation3] sm:$0xf]
    %v3883 = vld [vmem:[#allocation3 + $0x8] sm:$0xf]
    %v3884 = vld [vmem:[#allocation3 + $0x10] sm:$0xf]
    %v3885 = vld [vmem:[#allocation3 + $0x18] sm:$0xf]
    %v3886 = vld [vmem:[#allocation3 + $0x30] sm:$0xf]
    %v3887 = vld [vmem:[#allocation3 + $0x38] sm:$0xf]
    %v3888 = vld [vmem:[#allocation3 + $0x40] sm:$0xf]
    %v3889 = vld [vmem:[#allocation3 + $0x48] sm:$0xf]
    %3898 = vst [vmem:[#allocation1] ss:$2 sm:$0xff] %v3882
    %s3899 = scalar_lea.vmem [#allocation1], 1
    %3900 = vst [vmem:[%s3899] ss:$2 sm:$0xff] %v3883
    %s3901 = scalar_lea.vmem [#allocation1], 16
    %3902 = vst [vmem:[%s3901] ss:$2 sm:$0xff] %v3884
    %s3903 = scalar_lea.vmem [#allocation1], 17
    %3904 = vst [vmem:[%s3903] ss:$2 sm:$0xff] %v3885
    %s3905 = scalar_lea.vmem [#allocation1], 32
    %3906 = vst [vmem:[%s3905] ss:$2 sm:$0xff] %v3886
    %s3907 = scalar_lea.vmem [#allocation1], 33
    %3908 = vst [vmem:[%s3907] ss:$2 sm:$0xff] %v3887
    %s3909 = scalar_lea.vmem [#allocation1], 48
    %3910 = vst [vmem:[%s3909] ss:$2 sm:$0xff] %v3888
    %s3911 = scalar_lea.vmem [#allocation1], 49
    %3912 = vst [vmem:[%s3911] ss:$2 sm:$0xff] %v3889
    %v3913 = vld.sshfl [vmem:[#allocation1] sm:$0xff pattern:$0x75316420]
    %v3914 = vld.sshfl [vmem:[#allocation1 + $0x10] sm:$0xff pattern:$0x75316420]
    %v3915 = vld.sshfl [vmem:[#allocation1 + $0x20] sm:$0xff pattern:$0x75316420]
    %v3916 = vld.sshfl [vmem:[#allocation1 + $0x30] sm:$0xff pattern:$0x75316420]
    %v3921 = vpack.c.bf16 %v3914, %v3913
    %v3922 = vpack.c.bf16 %v3916, %v3915
    %v3923 = vld [vmem:[%s5] sm:$0xf]
    %v3924 = vld [vmem:[%s5 + $0x4] sm:$0xf]
    %v3925 = vld [vmem:[%s5 + $0x8] sm:$0xf]
    %v3926 = vld [vmem:[%s5 + $0xc] sm:$0xf]
    %v3927 = vld [vmem:[%s5 + $0x10] sm:$0xf]
    %v3928 = vld [vmem:[%s5 + $0x14] sm:$0xf]
    %v3929 = vld [vmem:[%s5 + $0x18] sm:$0xf]
    %v3930 = vld [vmem:[%s5 + $0x1c] sm:$0xf]
    %v3931 = vld [vmem:[#allocation3 + $0x1] sm:$0xf]
    %v3932 = vld [vmem:[#allocation3 + $0x9] sm:$0xf]
    %v3933 = vld [vmem:[#allocation3 + $0x11] sm:$0xf]
    %v3934 = vld [vmem:[#allocation3 + $0x19] sm:$0xf]
    %v3935 = vld [vmem:[#allocation3 + $0x31] sm:$0xf]
    %v3936 = vld [vmem:[#allocation3 + $0x39] sm:$0xf]
    %v3937 = vld [vmem:[#allocation3 + $0x41] sm:$0xf]
    %v3938 = vld [vmem:[#allocation3 + $0x49] sm:$0xf]
    %3947 = vst [vmem:[#allocation1] ss:$2 sm:$0xff] %v3931
    %s3948 = scalar_lea.vmem [#allocation1], 1
    %3949 = vst [vmem:[%s3948] ss:$2 sm:$0xff] %v3932
    %s3950 = scalar_lea.vmem [#allocation1], 16
    %3951 = vst [vmem:[%s3950] ss:$2 sm:$0xff] %v3933
    %s3952 = scalar_lea.vmem [#allocation1], 17
    %3953 = vst [vmem:[%s3952] ss:$2 sm:$0xff] %v3934
    %s3954 = scalar_lea.vmem [#allocation1], 32
    %3955 = vst [vmem:[%s3954] ss:$2 sm:$0xff] %v3935
    %s3956 = scalar_lea.vmem [#allocation1], 33
    %3957 = vst [vmem:[%s3956] ss:$2 sm:$0xff] %v3936
    %s3958 = scalar_lea.vmem [#allocation1], 48
    %3959 = vst [vmem:[%s3958] ss:$2 sm:$0xff] %v3937
    %s3960 = scalar_lea.vmem [#allocation1], 49
    %3961 = vst [vmem:[%s3960] ss:$2 sm:$0xff] %v3938
    %v3962 = vld.sshfl [vmem:[#allocation1] sm:$0xff pattern:$0x75316420]
    %v3963 = vld.sshfl [vmem:[#allocation1 + $0x10] sm:$0xff pattern:$0x75316420]
    %v3964 = vld.sshfl [vmem:[#allocation1 + $0x20] sm:$0xff pattern:$0x75316420]
    %v3965 = vld.sshfl [vmem:[#allocation1 + $0x30] sm:$0xff pattern:$0x75316420]
    %v3970 = vpack.c.bf16 %v3963, %v3962
    %v3971 = vpack.c.bf16 %v3965, %v3964
    %s3972 = scalar_lea.vmem %s5, 32
    %v3973 = vld [vmem:[%s3972] sm:$0xf]
    %v3974 = vld [vmem:[%s3972 + $0x4] sm:$0xf]
    %v3975 = vld [vmem:[%s3972 + $0x8] sm:$0xf]
    %v3976 = vld [vmem:[%s3972 + $0xc] sm:$0xf]
    %v3977 = vld [vmem:[%s3972 + $0x10] sm:$0xf]
    %v3978 = vld [vmem:[%s3972 + $0x14] sm:$0xf]
    %v3979 = vld [vmem:[%s3972 + $0x18] sm:$0xf]
    %v3980 = vld [vmem:[%s3972 + $0x1c] sm:$0xf]
    %v3989 = vunpack.c.l.b16 %v3973
    %v3990 = vunpack.c.l.b16 %v3974
    %v3991 = vunpack.c.l.b16 %v3975
    %v3992 = vunpack.c.l.b16 %v3976
    %v3993 = vunpack.c.l.b16 %v3977
    %v3994 = vunpack.c.l.b16 %v3978
    %v3995 = vunpack.c.l.b16 %v3979
    %v3996 = vunpack.c.l.b16 %v3980
    %v3997 = vpack.c.b16 %v3990, %v3989
    %v3998 = vpack.c.b16 %v3992, %v3991
    %v3999 = vpack.c.b16 %v3994, %v3993
    %v4000 = vpack.c.b16 %v3996, %v3995
    %v4006 = vsel %vm608, %v3970, 0
    %v4009 = vsel %vm608, %v3971, 0
    %4011 = vmatpush.bf16.msra.mxu0 0
    %4012 = vmatpush.bf16.msra.mxu0 0
    %4013 = vmatpush.bf16.msra.mxu0 0
    %4014 = vmatpush.bf16.msra.mxu0 0
    %4015 = vmatpush.bf16.msra.mxu0 %v4000
    %4016 = vmatpush.bf16.msra.mxu0 %v3999
    %4017 = vmatpush.bf16.msra.mxu0 %v3998
    %4018 = vmatpush.bf16.msra.mxu0 %v3997
    %4019 = vmatmul.bf16.gmra.mxu0 %v4006
    %v4020 = vpop.f32.mrf.mxu0
    %v4021 = vadd.f32 0.0, %v4020
    %v4022 = vpop.f32.mrf.mxu0
    %v4023 = vadd.f32 0.0, %v4022
    %4024 = vmatmul.bf16.gmra.mxu0 %v4009
    %v4025 = vpop.f32.mrf.mxu0
    %v4026 = vadd.f32 0.0, %v4025
    %v4027 = vpop.f32.mrf.mxu0
    %v4028 = vadd.f32 0.0, %v4027
    %4029 = vdwg.mxu0
    %v4038 = vunpack.c.l.b16 %v3923
    %v4039 = vunpack.c.l.b16 %v3924
    %v4040 = vunpack.c.l.b16 %v3925
    %v4041 = vunpack.c.l.b16 %v3926
    %v4042 = vunpack.c.l.b16 %v3927
    %v4043 = vunpack.c.l.b16 %v3928
    %v4044 = vunpack.c.l.b16 %v3929
    %v4045 = vunpack.c.l.b16 %v3930
    %v4046 = vpack.c.b16 %v4039, %v4038
    %v4047 = vpack.c.b16 %v4041, %v4040
    %v4048 = vpack.c.b16 %v4043, %v4042
    %v4049 = vpack.c.b16 %v4045, %v4044
    %v4055 = vsel %vm608, %v3921, 0
    %v4058 = vsel %vm608, %v3922, 0
    %4060 = vmatpush.bf16.msra.mxu0 0
    %4061 = vmatpush.bf16.msra.mxu0 0
    %4062 = vmatpush.bf16.msra.mxu0 0
    %4063 = vmatpush.bf16.msra.mxu0 0
    %4064 = vmatpush.bf16.msra.mxu0 %v4049
    %4065 = vmatpush.bf16.msra.mxu0 %v4048
    %4066 = vmatpush.bf16.msra.mxu0 %v4047
    %4067 = vmatpush.bf16.msra.mxu0 %v4046
    %4068 = vmatmul.bf16.gmra.mxu0 %v4055
    %v4069 = vpop.f32.mrf.mxu0
    %v4070 = vadd.f32 %v4021, %v4069
    %v4071 = vpop.f32.mrf.mxu0
    %v4072 = vadd.f32 %v4023, %v4071
    %4073 = vmatmul.bf16.gmra.mxu0 %v4058
    %v4074 = vpop.f32.mrf.mxu0
    %v4075 = vadd.f32 %v4026, %v4074
    %v4076 = vpop.f32.mrf.mxu0
    %v4077 = vadd.f32 %v4028, %v4076
    %4078 = vdwg.mxu0
    %v4079 = vld [vmem:[#allocation3 + $0x2] sm:$0xf]
    %v4080 = vld [vmem:[#allocation3 + $0xa] sm:$0xf]
    %v4081 = vld [vmem:[#allocation3 + $0x12] sm:$0xf]
    %v4082 = vld [vmem:[#allocation3 + $0x1a] sm:$0xf]
    %v4083 = vld [vmem:[#allocation3 + $0x32] sm:$0xf]
    %v4084 = vld [vmem:[#allocation3 + $0x3a] sm:$0xf]
    %v4085 = vld [vmem:[#allocation3 + $0x42] sm:$0xf]
    %v4086 = vld [vmem:[#allocation3 + $0x4a] sm:$0xf]
    %4095 = vst [vmem:[#allocation1] ss:$2 sm:$0xff] %v4079
    %s4096 = scalar_lea.vmem [#allocation1], 1
    %4097 = vst [vmem:[%s4096] ss:$2 sm:$0xff] %v4080
    %s4098 = scalar_lea.vmem [#allocation1], 16
    %4099 = vst [vmem:[%s4098] ss:$2 sm:$0xff] %v4081
    %s4100 = scalar_lea.vmem [#allocation1], 17
    %4101 = vst [vmem:[%s4100] ss:$2 sm:$0xff] %v4082
    %s4102 = scalar_lea.vmem [#allocation1], 32
    %4103 = vst [vmem:[%s4102] ss:$2 sm:$0xff] %v4083
    %s4104 = scalar_lea.vmem [#allocation1], 33
    %4105 = vst [vmem:[%s4104] ss:$2 sm:$0xff] %v4084
    %s4106 = scalar_lea.vmem [#allocation1], 48
    %4107 = vst [vmem:[%s4106] ss:$2 sm:$0xff] %v4085
    %s4108 = scalar_lea.vmem [#allocation1], 49
    %4109 = vst [vmem:[%s4108] ss:$2 sm:$0xff] %v4086
    %v4110 = vld.sshfl [vmem:[#allocation1] sm:$0xff pattern:$0x75316420]
    %v4111 = vld.sshfl [vmem:[#allocation1 + $0x10] sm:$0xff pattern:$0x75316420]
    %v4112 = vld.sshfl [vmem:[#allocation1 + $0x20] sm:$0xff pattern:$0x75316420]
    %v4113 = vld.sshfl [vmem:[#allocation1 + $0x30] sm:$0xff pattern:$0x75316420]
    %v4118 = vpack.c.bf16 %v4111, %v4110
    %v4119 = vpack.c.bf16 %v4113, %v4112
    %s4120 = scalar_lea.vmem %s5, 64
    %v4121 = vld [vmem:[%s4120] sm:$0xf]
    %v4122 = vld [vmem:[%s4120 + $0x4] sm:$0xf]
    %v4123 = vld [vmem:[%s4120 + $0x8] sm:$0xf]
    %v4124 = vld [vmem:[%s4120 + $0xc] sm:$0xf]
    %v4125 = vld [vmem:[%s4120 + $0x10] sm:$0xf]
    %v4126 = vld [vmem:[%s4120 + $0x14] sm:$0xf]
    %v4127 = vld [vmem:[%s4120 + $0x18] sm:$0xf]
    %v4128 = vld [vmem:[%s4120 + $0x1c] sm:$0xf]
    %v4137 = vunpack.c.l.b16 %v4121
    %v4138 = vunpack.c.l.b16 %v4122
    %v4139 = vunpack.c.l.b16 %v4123
    %v4140 = vunpack.c.l.b16 %v4124
    %v4141 = vunpack.c.l.b16 %v4125
    %v4142 = vunpack.c.l.b16 %v4126
    %v4143 = vunpack.c.l.b16 %v4127
    %v4144 = vunpack.c.l.b16 %v4128
    %v4145 = vpack.c.b16 %v4138, %v4137
    %v4146 = vpack.c.b16 %v4140, %v4139
    %v4147 = vpack.c.b16 %v4142, %v4141
    %v4148 = vpack.c.b16 %v4144, %v4143
    %v4154 = vsel %vm608, %v4118, 0
    %v4157 = vsel %vm608, %v4119, 0
    %4159 = vmatpush.bf16.msra.mxu0 0
    %4160 = vmatpush.bf16.msra.mxu0 0
    %4161 = vmatpush.bf16.msra.mxu0 0
    %4162 = vmatpush.bf16.msra.mxu0 0
    %4163 = vmatpush.bf16.msra.mxu0 %v4148
    %4164 = vmatpush.bf16.msra.mxu0 %v4147
    %4165 = vmatpush.bf16.msra.mxu0 %v4146
    %4166 = vmatpush.bf16.msra.mxu0 %v4145
    %4167 = vmatmul.bf16.gmra.mxu0 %v4154
    %v4168 = vpop.f32.mrf.mxu0
    %v4169 = vadd.f32 0.0, %v4168
    %v4170 = vpop.f32.mrf.mxu0
    %v4171 = vadd.f32 0.0, %v4170
    %4172 = vmatmul.bf16.gmra.mxu0 %v4157
    %v4173 = vpop.f32.mrf.mxu0
    %v4174 = vadd.f32 0.0, %v4173
    %v4175 = vpop.f32.mrf.mxu0
    %v4176 = vadd.f32 0.0, %v4175
    %4177 = vdwg.mxu0
    %v4178 = vadd.f32 %v4070, %v4169
    %v4179 = vadd.f32 %v4072, %v4171
    %v4180 = vadd.f32 %v4075, %v4174
    %v4181 = vadd.f32 %v4077, %v4176
    %v4182 = vld [vmem:[%s3872] sm:$0xf]
    %v4183 = vld [vmem:[%s3872 + $0x8] sm:$0xf]
    %v4184 = vld [vmem:[%s3872 + $0x10] sm:$0xf]
    %v4185 = vld [vmem:[%s3872 + $0x18] sm:$0xf]
    %v4186 = vld [vmem:[%s3872 + $0x30] sm:$0xf]
    %v4187 = vld [vmem:[%s3872 + $0x38] sm:$0xf]
    %v4188 = vld [vmem:[%s3872 + $0x40] sm:$0xf]
    %v4189 = vld [vmem:[%s3872 + $0x48] sm:$0xf]
    %4198 = vst [vmem:[#allocation1] ss:$2 sm:$0xff] %v4182
    %s4199 = scalar_lea.vmem [#allocation1], 1
    %4200 = vst [vmem:[%s4199] ss:$2 sm:$0xff] %v4183
    %s4201 = scalar_lea.vmem [#allocation1], 16
    %4202 = vst [vmem:[%s4201] ss:$2 sm:$0xff] %v4184
    %s4203 = scalar_lea.vmem [#allocation1], 17
    %4204 = vst [vmem:[%s4203] ss:$2 sm:$0xff] %v4185
    %s4205 = scalar_lea.vmem [#allocation1], 32
    %4206 = vst [vmem:[%s4205] ss:$2 sm:$0xff] %v4186
    %s4207 = scalar_lea.vmem [#allocation1], 33
    %4208 = vst [vmem:[%s4207] ss:$2 sm:$0xff] %v4187
    %s4209 = scalar_lea.vmem [#allocation1], 48
    %4210 = vst [vmem:[%s4209] ss:$2 sm:$0xff] %v4188
    %s4211 = scalar_lea.vmem [#allocation1], 49
    %4212 = vst [vmem:[%s4211] ss:$2 sm:$0xff] %v4189
    %v4213 = vld.sshfl [vmem:[#allocation1] sm:$0xff pattern:$0x75316420]
    %v4214 = vld.sshfl [vmem:[#allocation1 + $0x10] sm:$0xff pattern:$0x75316420]
    %v4215 = vld.sshfl [vmem:[#allocation1 + $0x20] sm:$0xff pattern:$0x75316420]
    %v4216 = vld.sshfl [vmem:[#allocation1 + $0x30] sm:$0xff pattern:$0x75316420]
    %v4221 = vpack.c.bf16 %v4214, %v4213
    %v4222 = vpack.c.bf16 %v4216, %v4215
    %s4223 = scalar_lea.vmem %s5, 96
    %v4224 = vld [vmem:[%s4223] sm:$0xf]
    %v4225 = vld [vmem:[%s4223 + $0x4] sm:$0xf]
    %v4226 = vld [vmem:[%s4223 + $0x8] sm:$0xf]
    %v4227 = vld [vmem:[%s4223 + $0xc] sm:$0xf]
    %v4228 = vld [vmem:[%s4223 + $0x10] sm:$0xf]
    %v4229 = vld [vmem:[%s4223 + $0x14] sm:$0xf]
    %v4230 = vld [vmem:[%s4223 + $0x18] sm:$0xf]
    %v4231 = vld [vmem:[%s4223 + $0x1c] sm:$0xf]
    %v4240 = vunpack.c.l.b16 %v4224
    %v4241 = vunpack.c.l.b16 %v4225
    %v4242 = vunpack.c.l.b16 %v4226
    %v4243 = vunpack.c.l.b16 %v4227
    %v4244 = vunpack.c.l.b16 %v4228
    %v4245 = vunpack.c.l.b16 %v4229
    %v4246 = vunpack.c.l.b16 %v4230
    %v4247 = vunpack.c.l.b16 %v4231
    %v4248 = vpack.c.b16 %v4241, %v4240
    %v4249 = vpack.c.b16 %v4243, %v4242
    %v4250 = vpack.c.b16 %v4245, %v4244
    %v4251 = vpack.c.b16 %v4247, %v4246
    %v4257 = vsel %vm608, %v4221, 0
    %v4260 = vsel %vm608, %v4222, 0
    %4262 = vmatpush.bf16.msra.mxu0 0
    %4263 = vmatpush.bf16.msra.mxu0 0
    %4264 = vmatpush.bf16.msra.mxu0 0
    %4265 = vmatpush.bf16.msra.mxu0 0
    %4266 = vmatpush.bf16.msra.mxu0 %v4251
    %4267 = vmatpush.bf16.msra.mxu0 %v4250
    %4268 = vmatpush.bf16.msra.mxu0 %v4249
    %4269 = vmatpush.bf16.msra.mxu0 %v4248
    %4270 = vmatmul.bf16.gmra.mxu0 %v4257
    %v4271 = vpop.f32.mrf.mxu0
    %v4272 = vadd.f32 0.0, %v4271
    %v4273 = vpop.f32.mrf.mxu0
    %v4274 = vadd.f32 0.0, %v4273
    %4275 = vmatmul.bf16.gmra.mxu0 %v4260
    %v4276 = vpop.f32.mrf.mxu0
    %v4277 = vadd.f32 0.0, %v4276
    %v4278 = vpop.f32.mrf.mxu0
    %v4279 = vadd.f32 0.0, %v4278
    %4280 = vdwg.mxu0
    %v4281 = vadd.f32 %v4178, %v4272
    %v4282 = vadd.f32 %v4179, %v4274
    %v4283 = vadd.f32 %v4180, %v4277
    %v4284 = vadd.f32 %v4181, %v4279
    %v4285 = vld [vmem:[%s3872 + $0x1] sm:$0xf]
    %v4286 = vld [vmem:[%s3872 + $0x9] sm:$0xf]
    %v4287 = vld [vmem:[%s3872 + $0x11] sm:$0xf]
    %v4288 = vld [vmem:[%s3872 + $0x19] sm:$0xf]
    %v4289 = vld [vmem:[%s3872 + $0x31] sm:$0xf]
    %v4290 = vld [vmem:[%s3872 + $0x39] sm:$0xf]
    %v4291 = vld [vmem:[%s3872 + $0x41] sm:$0xf]
    %v4292 = vld [vmem:[%s3872 + $0x49] sm:$0xf]
    %4301 = vst [vmem:[#allocation1] ss:$2 sm:$0xff] %v4285
    %s4302 = scalar_lea.vmem [#allocation1], 1
    %4303 = vst [vmem:[%s4302] ss:$2 sm:$0xff] %v4286
    %s4304 = scalar_lea.vmem [#allocation1], 16
    %4305 = vst [vmem:[%s4304] ss:$2 sm:$0xff] %v4287
    %s4306 = scalar_lea.vmem [#allocation1], 17
    %4307 = vst [vmem:[%s4306] ss:$2 sm:$0xff] %v4288
    %s4308 = scalar_lea.vmem [#allocation1], 32
    %4309 = vst [vmem:[%s4308] ss:$2 sm:$0xff] %v4289
    %s4310 = scalar_lea.vmem [#allocation1], 33
    %4311 = vst [vmem:[%s4310] ss:$2 sm:$0xff] %v4290
    %s4312 = scalar_lea.vmem [#allocation1], 48
    %4313 = vst [vmem:[%s4312] ss:$2 sm:$0xff] %v4291
    %s4314 = scalar_lea.vmem [#allocation1], 49
    %4315 = vst [vmem:[%s4314] ss:$2 sm:$0xff] %v4292
    %v4316 = vld.sshfl [vmem:[#allocation1] sm:$0xff pattern:$0x75316420]
    %v4317 = vld.sshfl [vmem:[#allocation1 + $0x10] sm:$0xff pattern:$0x75316420]
    %v4318 = vld.sshfl [vmem:[#allocation1 + $0x20] sm:$0xff pattern:$0x75316420]
    %v4319 = vld.sshfl [vmem:[#allocation1 + $0x30] sm:$0xff pattern:$0x75316420]
    %v4324 = vpack.c.bf16 %v4317, %v4316
    %v4325 = vpack.c.bf16 %v4319, %v4318
    %s4326 = scalar_lea.vmem %s5, 128
    %v4327 = vld [vmem:[%s4326] sm:$0xf]
    %v4328 = vld [vmem:[%s4326 + $0x4] sm:$0xf]
    %v4329 = vld [vmem:[%s4326 + $0x8] sm:$0xf]
    %v4330 = vld [vmem:[%s4326 + $0xc] sm:$0xf]
    %v4331 = vld [vmem:[%s4326 + $0x10] sm:$0xf]
    %v4332 = vld [vmem:[%s4326 + $0x14] sm:$0xf]
    %v4333 = vld [vmem:[%s4326 + $0x18] sm:$0xf]
    %v4334 = vld [vmem:[%s4326 + $0x1c] sm:$0xf]
    %v4343 = vunpack.c.l.b16 %v4327
    %v4344 = vunpack.c.l.b16 %v4328
    %v4345 = vunpack.c.l.b16 %v4329
    %v4346 = vunpack.c.l.b16 %v4330
    %v4347 = vunpack.c.l.b16 %v4331
    %v4348 = vunpack.c.l.b16 %v4332
    %v4349 = vunpack.c.l.b16 %v4333
    %v4350 = vunpack.c.l.b16 %v4334
    %v4351 = vpack.c.b16 %v4344, %v4343
    %v4352 = vpack.c.b16 %v4346, %v4345
    %v4353 = vpack.c.b16 %v4348, %v4347
    %v4354 = vpack.c.b16 %v4350, %v4349
    %v4360 = vsel %vm608, %v4324, 0
    %v4363 = vsel %vm608, %v4325, 0
    %4365 = vmatpush.bf16.msra.mxu0 0
    %4366 = vmatpush.bf16.msra.mxu0 0
    %4367 = vmatpush.bf16.msra.mxu0 0
    %4368 = vmatpush.bf16.msra.mxu0 0
    %4369 = vmatpush.bf16.msra.mxu0 %v4354
    %4370 = vmatpush.bf16.msra.mxu0 %v4353
    %4371 = vmatpush.bf16.msra.mxu0 %v4352
    %4372 = vmatpush.bf16.msra.mxu0 %v4351
    %4373 = vmatmul.bf16.gmra.mxu0 %v4360
    %v4374 = vpop.f32.mrf.mxu0
    %v4375 = vadd.f32 0.0, %v4374
    %v4376 = vpop.f32.mrf.mxu0
    %v4377 = vadd.f32 0.0, %v4376
    %4378 = vmatmul.bf16.gmra.mxu0 %v4363
    %v4379 = vpop.f32.mrf.mxu0
    %v4380 = vadd.f32 0.0, %v4379
    %v4381 = vpop.f32.mrf.mxu0
    %v4382 = vadd.f32 0.0, %v4381
    %4383 = vdwg.mxu0
    %v4384 = vadd.f32 %v4281, %v4375
    %v4385 = vadd.f32 %v4282, %v4377
    %v4386 = vadd.f32 %v4283, %v4380
    %v4387 = vadd.f32 %v4284, %v4382
    %v4388 = vld [vmem:[%s3872 + $0x2] sm:$0xf]
    %v4389 = vld [vmem:[%s3872 + $0xa] sm:$0xf]
    %v4390 = vld [vmem:[%s3872 + $0x12] sm:$0xf]
    %v4391 = vld [vmem:[%s3872 + $0x1a] sm:$0xf]
    %v4392 = vld [vmem:[%s3872 + $0x32] sm:$0xf]
    %v4393 = vld [vmem:[%s3872 + $0x3a] sm:$0xf]
    %v4394 = vld [vmem:[%s3872 + $0x42] sm:$0xf]
    %v4395 = vld [vmem:[%s3872 + $0x4a] sm:$0xf]
    %4404 = vst [vmem:[#allocation1] ss:$2 sm:$0xff] %v4388
    %s4405 = scalar_lea.vmem [#allocation1], 1
    %4406 = vst [vmem:[%s4405] ss:$2 sm:$0xff] %v4389
    %s4407 = scalar_lea.vmem [#allocation1], 16
    %4408 = vst [vmem:[%s4407] ss:$2 sm:$0xff] %v4390
    %s4409 = scalar_lea.vmem [#allocation1], 17
    %4410 = vst [vmem:[%s4409] ss:$2 sm:$0xff] %v4391
    %s4411 = scalar_lea.vmem [#allocation1], 32
    %4412 = vst [vmem:[%s4411] ss:$2 sm:$0xff] %v4392
    %s4413 = scalar_lea.vmem [#allocation1], 33
    %4414 = vst [vmem:[%s4413] ss:$2 sm:$0xff] %v4393
    %s4415 = scalar_lea.vmem [#allocation1], 48
    %4416 = vst [vmem:[%s4415] ss:$2 sm:$0xff] %v4394
    %s4417 = scalar_lea.vmem [#allocation1], 49
    %4418 = vst [vmem:[%s4417] ss:$2 sm:$0xff] %v4395
    %v4419 = vld.sshfl [vmem:[#allocation1] sm:$0xff pattern:$0x75316420]
    %v4420 = vld.sshfl [vmem:[#allocation1 + $0x10] sm:$0xff pattern:$0x75316420]
    %v4421 = vld.sshfl [vmem:[#allocation1 + $0x20] sm:$0xff pattern:$0x75316420]
    %v4422 = vld.sshfl [vmem:[#allocation1 + $0x30] sm:$0xff pattern:$0x75316420]
    %v4427 = vpack.c.bf16 %v4420, %v4419
    %v4428 = vpack.c.bf16 %v4422, %v4421
    %s4429 = scalar_lea.vmem %s5, 160
    %v4430 = vld [vmem:[%s4429] sm:$0xf]
    %v4431 = vld [vmem:[%s4429 + $0x4] sm:$0xf]
    %v4432 = vld [vmem:[%s4429 + $0x8] sm:$0xf]
    %v4433 = vld [vmem:[%s4429 + $0xc] sm:$0xf]
    %v4434 = vld [vmem:[%s4429 + $0x10] sm:$0xf]
    %v4435 = vld [vmem:[%s4429 + $0x14] sm:$0xf]
    %v4436 = vld [vmem:[%s4429 + $0x18] sm:$0xf]
    %v4437 = vld [vmem:[%s4429 + $0x1c] sm:$0xf]
    %v4446 = vunpack.c.l.b16 %v4430
    %v4447 = vunpack.c.l.b16 %v4431
    %v4448 = vunpack.c.l.b16 %v4432
    %v4449 = vunpack.c.l.b16 %v4433
    %v4450 = vunpack.c.l.b16 %v4434
    %v4451 = vunpack.c.l.b16 %v4435
    %v4452 = vunpack.c.l.b16 %v4436
    %v4453 = vunpack.c.l.b16 %v4437
    %v4454 = vpack.c.b16 %v4447, %v4446
    %v4455 = vpack.c.b16 %v4449, %v4448
    %v4456 = vpack.c.b16 %v4451, %v4450
    %v4457 = vpack.c.b16 %v4453, %v4452
    %v4463 = vsel %vm608, %v4427, 0
    %v4466 = vsel %vm608, %v4428, 0
    %4468 = vmatpush.bf16.msra.mxu0 0
    %4469 = vmatpush.bf16.msra.mxu0 0
    %4470 = vmatpush.bf16.msra.mxu0 0
    %4471 = vmatpush.bf16.msra.mxu0 0
    %4472 = vmatpush.bf16.msra.mxu0 %v4457
    %4473 = vmatpush.bf16.msra.mxu0 %v4456
    %4474 = vmatpush.bf16.msra.mxu0 %v4455
    %4475 = vmatpush.bf16.msra.mxu0 %v4454
    %4476 = vmatmul.bf16.gmra.mxu0 %v4463
    %v4477 = vpop.f32.mrf.mxu0
    %v4478 = vadd.f32 0.0, %v4477
    %v4479 = vpop.f32.mrf.mxu0
    %v4480 = vadd.f32 0.0, %v4479
    %4481 = vmatmul.bf16.gmra.mxu0 %v4466
    %v4482 = vpop.f32.mrf.mxu0
    %v4483 = vadd.f32 0.0, %v4482
    %v4484 = vpop.f32.mrf.mxu0
    %v4485 = vadd.f32 0.0, %v4484
    %4486 = vdwg.mxu0
    %v4487 = vadd.f32 %v4384, %v4478
    %v4488 = vadd.f32 %v4385, %v4480
    %v4489 = vadd.f32 %v4386, %v4483
    %v4490 = vadd.f32 %v4387, %v4485
    %s4491 = scalar_lea.vmem [#allocation3], 16
    %v4492 = vld [vmem:[%s4491] sm:$0xf]
    %v4493 = vld [vmem:[%s4491 + $0x8] sm:$0xf]
    %v4494 = vld [vmem:[%s4491 + $0x10] sm:$0xf]
    %v4495 = vld [vmem:[%s4491 + $0x18] sm:$0xf]
    %v4496 = vld [vmem:[%s4491 + $0x30] sm:$0xf]
    %v4497 = vld [vmem:[%s4491 + $0x38] sm:$0xf]
    %v4498 = vld [vmem:[%s4491 + $0x40] sm:$0xf]
    %v4499 = vld [vmem:[%s4491 + $0x48] sm:$0xf]
    %4508 = vst [vmem:[#allocation1] ss:$2 sm:$0xff] %v4492
    %s4509 = scalar_lea.vmem [#allocation1], 1
    %4510 = vst [vmem:[%s4509] ss:$2 sm:$0xff] %v4493
    %s4511 = scalar_lea.vmem [#allocation1], 16
    %4512 = vst [vmem:[%s4511] ss:$2 sm:$0xff] %v4494
    %s4513 = scalar_lea.vmem [#allocation1], 17
    %4514 = vst [vmem:[%s4513] ss:$2 sm:$0xff] %v4495
    %s4515 = scalar_lea.vmem [#allocation1], 32
    %4516 = vst [vmem:[%s4515] ss:$2 sm:$0xff] %v4496
    %s4517 = scalar_lea.vmem [#allocation1], 33
    %4518 = vst [vmem:[%s4517] ss:$2 sm:$0xff] %v4497
    %s4519 = scalar_lea.vmem [#allocation1], 48
    %4520 = vst [vmem:[%s4519] ss:$2 sm:$0xff] %v4498
    %s4521 = scalar_lea.vmem [#allocation1], 49
    %4522 = vst [vmem:[%s4521] ss:$2 sm:$0xff] %v4499
    %v4523 = vld.sshfl [vmem:[#allocation1] sm:$0xff pattern:$0x75316420]
    %v4524 = vld.sshfl [vmem:[#allocation1 + $0x10] sm:$0xff pattern:$0x75316420]
    %v4525 = vld.sshfl [vmem:[#allocation1 + $0x20] sm:$0xff pattern:$0x75316420]
    %v4526 = vld.sshfl [vmem:[#allocation1 + $0x30] sm:$0xff pattern:$0x75316420]
    %v4531 = vpack.c.bf16 %v4524, %v4523
    %v4532 = vpack.c.bf16 %v4526, %v4525
    %s4533 = scalar_lea.vmem %s5, 192
    %v4534 = vld [vmem:[%s4533] sm:$0xf]
    %v4535 = vld [vmem:[%s4533 + $0x4] sm:$0xf]
    %v4536 = vld [vmem:[%s4533 + $0x8] sm:$0xf]
    %v4537 = vld [vmem:[%s4533 + $0xc] sm:$0xf]
    %v4538 = vld [vmem:[%s4533 + $0x10] sm:$0xf]
    %v4539 = vld [vmem:[%s4533 + $0x14] sm:$0xf]
    %v4540 = vld [vmem:[%s4533 + $0x18] sm:$0xf]
    %v4541 = vld [vmem:[%s4533 + $0x1c] sm:$0xf]
    %v4550 = vunpack.c.l.b16 %v4534
    %v4551 = vunpack.c.l.b16 %v4535
    %v4552 = vunpack.c.l.b16 %v4536
    %v4553 = vunpack.c.l.b16 %v4537
    %v4554 = vunpack.c.l.b16 %v4538
    %v4555 = vunpack.c.l.b16 %v4539
    %v4556 = vunpack.c.l.b16 %v4540
    %v4557 = vunpack.c.l.b16 %v4541
    %v4558 = vpack.c.b16 %v4551, %v4550
    %v4559 = vpack.c.b16 %v4553, %v4552
    %v4560 = vpack.c.b16 %v4555, %v4554
    %v4561 = vpack.c.b16 %v4557, %v4556
    %v4567 = vsel %vm608, %v4531, 0
    %v4570 = vsel %vm608, %v4532, 0
    %4572 = vmatpush.bf16.msra.mxu0 0
    %4573 = vmatpush.bf16.msra.mxu0 0
    %4574 = vmatpush.bf16.msra.mxu0 0
    %4575 = vmatpush.bf16.msra.mxu0 0
    %4576 = vmatpush.bf16.msra.mxu0 %v4561
    %4577 = vmatpush.bf16.msra.mxu0 %v4560
    %4578 = vmatpush.bf16.msra.mxu0 %v4559
    %4579 = vmatpush.bf16.msra.mxu0 %v4558
    %4580 = vmatmul.bf16.gmra.mxu0 %v4567
    %v4581 = vpop.f32.mrf.mxu0
    %v4582 = vadd.f32 0.0, %v4581
    %v4583 = vpop.f32.mrf.mxu0
    %v4584 = vadd.f32 0.0, %v4583
    %4585 = vmatmul.bf16.gmra.mxu0 %v4570
    %v4586 = vpop.f32.mrf.mxu0
    %v4587 = vadd.f32 0.0, %v4586
    %v4588 = vpop.f32.mrf.mxu0
    %v4589 = vadd.f32 0.0, %v4588
    %4590 = vdwg.mxu0
    %v4591 = vadd.f32 %v4487, %v4582
    %v4592 = vadd.f32 %v4488, %v4584
    %v4593 = vadd.f32 %v4489, %v4587
    %v4594 = vadd.f32 %v4490, %v4589
    %v4595 = vld [vmem:[%s4491 + $0x1] sm:$0xf]
    %v4596 = vld [vmem:[%s4491 + $0x9] sm:$0xf]
    %v4597 = vld [vmem:[%s4491 + $0x11] sm:$0xf]
    %v4598 = vld [vmem:[%s4491 + $0x19] sm:$0xf]
    %v4599 = vld [vmem:[%s4491 + $0x31] sm:$0xf]
    %v4600 = vld [vmem:[%s4491 + $0x39] sm:$0xf]
    %v4601 = vld [vmem:[%s4491 + $0x41] sm:$0xf]
    %v4602 = vld [vmem:[%s4491 + $0x49] sm:$0xf]
    %4611 = vst [vmem:[#allocation1] ss:$2 sm:$0xff] %v4595
    %s4612 = scalar_lea.vmem [#allocation1], 1
    %4613 = vst [vmem:[%s4612] ss:$2 sm:$0xff] %v4596
    %s4614 = scalar_lea.vmem [#allocation1], 16
    %4615 = vst [vmem:[%s4614] ss:$2 sm:$0xff] %v4597
    %s4616 = scalar_lea.vmem [#allocation1], 17
    %4617 = vst [vmem:[%s4616] ss:$2 sm:$0xff] %v4598
    %s4618 = scalar_lea.vmem [#allocation1], 32
    %4619 = vst [vmem:[%s4618] ss:$2 sm:$0xff] %v4599
    %s4620 = scalar_lea.vmem [#allocation1], 33
    %4621 = vst [vmem:[%s4620] ss:$2 sm:$0xff] %v4600
    %s4622 = scalar_lea.vmem [#allocation1], 48
    %4623 = vst [vmem:[%s4622] ss:$2 sm:$0xff] %v4601
    %s4624 = scalar_lea.vmem [#allocation1], 49
    %4625 = vst [vmem:[%s4624] ss:$2 sm:$0xff] %v4602
    %v4626 = vld.sshfl [vmem:[#allocation1] sm:$0xff pattern:$0x75316420]
    %v4627 = vld.sshfl [vmem:[#allocation1 + $0x10] sm:$0xff pattern:$0x75316420]
    %v4628 = vld.sshfl [vmem:[#allocation1 + $0x20] sm:$0xff pattern:$0x75316420]
    %v4629 = vld.sshfl [vmem:[#allocation1 + $0x30] sm:$0xff pattern:$0x75316420]
    %v4634 = vpack.c.bf16 %v4627, %v4626
    %v4635 = vpack.c.bf16 %v4629, %v4628
    %s4636 = scalar_lea.vmem %s5, 224
    %v4637 = vld [vmem:[%s4636] sm:$0xf]
    %v4638 = vld [vmem:[%s4636 + $0x4] sm:$0xf]
    %v4639 = vld [vmem:[%s4636 + $0x8] sm:$0xf]
    %v4640 = vld [vmem:[%s4636 + $0xc] sm:$0xf]
    %v4641 = vld [vmem:[%s4636 + $0x10] sm:$0xf]
    %v4642 = vld [vmem:[%s4636 + $0x14] sm:$0xf]
    %v4643 = vld [vmem:[%s4636 + $0x18] sm:$0xf]
    %v4644 = vld [vmem:[%s4636 + $0x1c] sm:$0xf]
    %v4653 = vunpack.c.l.b16 %v4637
    %v4654 = vunpack.c.l.b16 %v4638
    %v4655 = vunpack.c.l.b16 %v4639
    %v4656 = vunpack.c.l.b16 %v4640
    %v4657 = vunpack.c.l.b16 %v4641
    %v4658 = vunpack.c.l.b16 %v4642
    %v4659 = vunpack.c.l.b16 %v4643
    %v4660 = vunpack.c.l.b16 %v4644
    %v4661 = vpack.c.b16 %v4654, %v4653
    %v4662 = vpack.c.b16 %v4656, %v4655
    %v4663 = vpack.c.b16 %v4658, %v4657
    %v4664 = vpack.c.b16 %v4660, %v4659
    %v4670 = vsel %vm608, %v4634, 0
    %v4673 = vsel %vm608, %v4635, 0
    %4675 = vmatpush.bf16.msra.mxu0 0
    %4676 = vmatpush.bf16.msra.mxu0 0
    %4677 = vmatpush.bf16.msra.mxu0 0
    %4678 = vmatpush.bf16.msra.mxu0 0
    %4679 = vmatpush.bf16.msra.mxu0 %v4664
    %4680 = vmatpush.bf16.msra.mxu0 %v4663
    %4681 = vmatpush.bf16.msra.mxu0 %v4662
    %4682 = vmatpush.bf16.msra.mxu0 %v4661
    %4683 = vmatmul.bf16.gmra.mxu0 %v4670
    %v4684 = vpop.f32.mrf.mxu0
    %v4685 = vadd.f32 0.0, %v4684
    %v4686 = vpop.f32.mrf.mxu0
    %v4687 = vadd.f32 0.0, %v4686
    %4688 = vmatmul.bf16.gmra.mxu0 %v4673
    %v4689 = vpop.f32.mrf.mxu0
    %v4690 = vadd.f32 0.0, %v4689
    %v4691 = vpop.f32.mrf.mxu0
    %v4692 = vadd.f32 0.0, %v4691
    %4693 = vdwg.mxu0
    %v4694 = vadd.f32 %v4591, %v4685
    %v4695 = vadd.f32 %v4592, %v4687
    %v4696 = vadd.f32 %v4593, %v4690
    %v4697 = vadd.f32 %v4594, %v4692
    %v4698 = vld [vmem:[%s4491 + $0x2] sm:$0xf]
    %v4699 = vld [vmem:[%s4491 + $0xa] sm:$0xf]
    %v4700 = vld [vmem:[%s4491 + $0x12] sm:$0xf]
    %v4701 = vld [vmem:[%s4491 + $0x1a] sm:$0xf]
    %v4702 = vld [vmem:[%s4491 + $0x32] sm:$0xf]
    %v4703 = vld [vmem:[%s4491 + $0x3a] sm:$0xf]
    %v4704 = vld [vmem:[%s4491 + $0x42] sm:$0xf]
    %v4705 = vld [vmem:[%s4491 + $0x4a] sm:$0xf]
    %4714 = vst [vmem:[#allocation1] ss:$2 sm:$0xff] %v4698
    %s4715 = scalar_lea.vmem [#allocation1], 1
    %4716 = vst [vmem:[%s4715] ss:$2 sm:$0xff] %v4699
    %s4717 = scalar_lea.vmem [#allocation1], 16
    %4718 = vst [vmem:[%s4717] ss:$2 sm:$0xff] %v4700
    %s4719 = scalar_lea.vmem [#allocation1], 17
    %4720 = vst [vmem:[%s4719] ss:$2 sm:$0xff] %v4701
    %s4721 = scalar_lea.vmem [#allocation1], 32
    %4722 = vst [vmem:[%s4721] ss:$2 sm:$0xff] %v4702
    %s4723 = scalar_lea.vmem [#allocation1], 33
    %4724 = vst [vmem:[%s4723] ss:$2 sm:$0xff] %v4703
    %s4725 = scalar_lea.vmem [#allocation1], 48
    %4726 = vst [vmem:[%s4725] ss:$2 sm:$0xff] %v4704
    %s4727 = scalar_lea.vmem [#allocation1], 49
    %4728 = vst [vmem:[%s4727] ss:$2 sm:$0xff] %v4705
    %v4729 = vld.sshfl [vmem:[#allocation1] sm:$0xff pattern:$0x75316420]
    %v4730 = vld.sshfl [vmem:[#allocation1 + $0x10] sm:$0xff pattern:$0x75316420]
    %v4731 = vld.sshfl [vmem:[#allocation1 + $0x20] sm:$0xff pattern:$0x75316420]
    %v4732 = vld.sshfl [vmem:[#allocation1 + $0x30] sm:$0xff pattern:$0x75316420]
    %v4737 = vpack.c.bf16 %v4730, %v4729
    %v4738 = vpack.c.bf16 %v4732, %v4731
    %s4739 = scalar_lea.vmem %s5, 256
    %v4740 = vld [vmem:[%s4739] sm:$0xf]
    %v4741 = vld [vmem:[%s4739 + $0x4] sm:$0xf]
    %v4742 = vld [vmem:[%s4739 + $0x8] sm:$0xf]
    %v4743 = vld [vmem:[%s4739 + $0xc] sm:$0xf]
    %v4744 = vld [vmem:[%s4739 + $0x10] sm:$0xf]
    %v4745 = vld [vmem:[%s4739 + $0x14] sm:$0xf]
    %v4746 = vld [vmem:[%s4739 + $0x18] sm:$0xf]
    %v4747 = vld [vmem:[%s4739 + $0x1c] sm:$0xf]
    %v4756 = vunpack.c.l.b16 %v4740
    %v4757 = vunpack.c.l.b16 %v4741
    %v4758 = vunpack.c.l.b16 %v4742
    %v4759 = vunpack.c.l.b16 %v4743
    %v4760 = vunpack.c.l.b16 %v4744
    %v4761 = vunpack.c.l.b16 %v4745
    %v4762 = vunpack.c.l.b16 %v4746
    %v4763 = vunpack.c.l.b16 %v4747
    %v4764 = vpack.c.b16 %v4757, %v4756
    %v4765 = vpack.c.b16 %v4759, %v4758
    %v4766 = vpack.c.b16 %v4761, %v4760
    %v4767 = vpack.c.b16 %v4763, %v4762
    %v4773 = vsel %vm608, %v4737, 0
    %v4776 = vsel %vm608, %v4738, 0
    %4778 = vmatpush.bf16.msra.mxu0 0
    %4779 = vmatpush.bf16.msra.mxu0 0
    %4780 = vmatpush.bf16.msra.mxu0 0
    %4781 = vmatpush.bf16.msra.mxu0 0
    %4782 = vmatpush.bf16.msra.mxu0 %v4767
    %4783 = vmatpush.bf16.msra.mxu0 %v4766
    %4784 = vmatpush.bf16.msra.mxu0 %v4765
    %4785 = vmatpush.bf16.msra.mxu0 %v4764
    %4786 = vmatmul.bf16.gmra.mxu0 %v4773
    %v4787 = vpop.f32.mrf.mxu0
    %v4788 = vadd.f32 0.0, %v4787
    %v4789 = vpop.f32.mrf.mxu0
    %v4790 = vadd.f32 0.0, %v4789
    %4791 = vmatmul.bf16.gmra.mxu0 %v4776
    %v4792 = vpop.f32.mrf.mxu0
    %v4793 = vadd.f32 0.0, %v4792
    %v4794 = vpop.f32.mrf.mxu0
    %v4795 = vadd.f32 0.0, %v4794
    %4796 = vdwg.mxu0
    %v4797 = vadd.f32 %v4694, %v4788
    %v4798 = vadd.f32 %v4695, %v4790
    %v4799 = vadd.f32 %v4696, %v4793
    %v4800 = vadd.f32 %v4697, %v4795
    %v4801 = vld [vmem:[%s6] sm:$0x1]
    %v4803 = vperm.slane %v4801, 0
    %v4805 = vadd.f32 %v4797, %v4803
    %v4806 = vadd.f32 %v4798, %v4803
    %v4807 = vadd.f32 %v4799, %v4803
    %v4808 = vadd.f32 %v4800, %v4803
    %v4809 = vmax.f32 %v4805, 0.0
    %v4810 = vmax.f32 %v4806, 0.0
    %v4811 = vmax.f32 %v4807, 0.0
    %v4812 = vmax.f32 %v4808, 0.0
    %v4817 = vrot.slane %v4809, 4
    %v4818 = vrot.slane %v4810, 4
    %v4819 = vrot.slane %v4811, 4
    %v4820 = vrot.slane %v4812, 4
    %v4825 = vsel %vm3873, %v4809, -inf
    %v4826 = vsel %vm3873, %v4817, -inf
    %v4827 = vmax.f32 %v4825, %v4826
    %v4828 = vsel %vm3873, %v4810, -inf
    %v4829 = vsel %vm3873, %v4818, -inf
    %v4830 = vmax.f32 %v4828, %v4829
    %v4831 = vsel %vm3873, %v4811, -inf
    %v4832 = vsel %vm3873, %v4819, -inf
    %v4833 = vmax.f32 %v4831, %v4832
    %v4834 = vsel %vm3873, %v4812, -inf
    %v4835 = vsel %vm3873, %v4820, -inf
    %v4836 = vmax.f32 %v4834, %v4835
    %v4841 = vrot.slane %v4827, 2
    %v4842 = vrot.slane %v4830, 2
    %v4843 = vrot.slane %v4833, 2
    %v4844 = vrot.slane %v4836, 2
    %vm4845 = vcmask 1041408
    %v4846 = vsel %vm4845, %v4827, %v4841
    %vm4847 = vcmask 1043458
    %v4848 = vsel %vm4847, %v4827, %v4841
    %v4849 = vrot.slane %v4848, 2
    %v4850 = vsel %vm4845, %v4830, %v4842
    %v4851 = vsel %vm4847, %v4830, %v4842
    %v4852 = vrot.slane %v4851, 2
    %v4853 = vsel %vm4845, %v4833, %v4843
    %v4854 = vsel %vm4847, %v4833, %v4843
    %v4855 = vrot.slane %v4854, 2
    %v4856 = vsel %vm4845, %v4836, %v4844
    %v4857 = vsel %vm4847, %v4836, %v4844
    %v4858 = vrot.slane %v4857, 2
    %v4867 = vsel %vm929, %v4846, -inf
    %v4868 = vrot.slane %v4867, 4
    %v4869 = vmax.f32 %v4867, %v4868
    %v4870 = vrot.slane %v4869, 2
    %v4871 = vmax.f32 %v4869, %v4870
    %v4872 = vrot.slane %v4871, 1
    %v4873 = vmax.f32 %v4871, %v4872
    %v4874 = vsel %vm929, %v4849, -inf
    %v4875 = vrot.slane %v4874, 4
    %v4876 = vmax.f32 %v4874, %v4875
    %v4877 = vrot.slane %v4876, 2
    %v4878 = vmax.f32 %v4876, %v4877
    %v4879 = vrot.slane %v4878, 1
    %v4880 = vmax.f32 %v4878, %v4879
    %v4881 = vsel %vm929, %v4850, -inf
    %v4882 = vrot.slane %v4881, 4
    %v4883 = vmax.f32 %v4881, %v4882
    %v4884 = vrot.slane %v4883, 2
    %v4885 = vmax.f32 %v4883, %v4884
    %v4886 = vrot.slane %v4885, 1
    %v4887 = vmax.f32 %v4885, %v4886
    %v4888 = vsel %vm929, %v4852, -inf
    %v4889 = vrot.slane %v4888, 4
    %v4890 = vmax.f32 %v4888, %v4889
    %v4891 = vrot.slane %v4890, 2
    %v4892 = vmax.f32 %v4890, %v4891
    %v4893 = vrot.slane %v4892, 1
    %v4894 = vmax.f32 %v4892, %v4893
    %v4895 = vsel %vm929, %v4853, -inf
    %v4896 = vrot.slane %v4895, 4
    %v4897 = vmax.f32 %v4895, %v4896
    %v4898 = vrot.slane %v4897, 2
    %v4899 = vmax.f32 %v4897, %v4898
    %v4900 = vrot.slane %v4899, 1
    %v4901 = vmax.f32 %v4899, %v4900
    %v4902 = vsel %vm929, %v4855, -inf
    %v4903 = vrot.slane %v4902, 4
    %v4904 = vmax.f32 %v4902, %v4903
    %v4905 = vrot.slane %v4904, 2
    %v4906 = vmax.f32 %v4904, %v4905
    %v4907 = vrot.slane %v4906, 1
    %v4908 = vmax.f32 %v4906, %v4907
    %v4909 = vsel %vm929, %v4856, -inf
    %v4910 = vrot.slane %v4909, 4
    %v4911 = vmax.f32 %v4909, %v4910
    %v4912 = vrot.slane %v4911, 2
    %v4913 = vmax.f32 %v4911, %v4912
    %v4914 = vrot.slane %v4913, 1
    %v4915 = vmax.f32 %v4913, %v4914
    %v4916 = vsel %vm929, %v4858, -inf
    %v4917 = vrot.slane %v4916, 4
    %v4918 = vmax.f32 %v4916, %v4917
    %v4919 = vrot.slane %v4918, 2
    %v4920 = vmax.f32 %v4918, %v4919
    %v4921 = vrot.slane %v4920, 1
    %v4922 = vmax.f32 %v4920, %v4921
    %4923 = vst.msk [vmem:[#allocation4] sm:$0xf] %vm3873, 0.0
    %4924 = vst.msk [vmem:[#allocation4 + $0x10] sm:$0xf] %vm3873, 0.0
    %s4925 = scalar_lea.vmem [#allocation4], 12
    %4926 = vst.msk [vmem:[%s4925] sm:$0xf] %vm3873, 0.0
    %4927 = vst.msk [vmem:[%s4925 + $0x10] sm:$0xf] %vm3873, 0.0
    %4928 = vst.msk [vmem:[#allocation4] sm:$0x1] %vm1835, 0.0
    %4929 = vst.msk [vmem:[#allocation4 + $0x4] sm:$0x1] %vm1835, 0.0
    %4930 = vst.msk [vmem:[#allocation4 + $0x8] sm:$0x1] %vm1835, 0.0
    %4931 = vst.msk [vmem:[#allocation4 + $0xc] sm:$0x1] %vm1835, 0.0
    %4932 = vst.msk [vmem:[#allocation4 + $0x10] sm:$0x1] %vm1835, 0.0
    %4933 = vst.msk [vmem:[#allocation4 + $0x14] sm:$0x1] %vm1835, 0.0
    %4934 = vst.msk [vmem:[#allocation4 + $0x18] sm:$0x1] %vm1835, 0.0
    %4935 = vst.msk [vmem:[#allocation4 + $0x1c] sm:$0x1] %vm1835, 0.0
    %4936 = vst.msk [vmem:[#allocation4 + $0x3] sm:$0x1] %vm1835, 0.0
    %4937 = vst.msk [vmem:[#allocation4 + $0x7] sm:$0x1] %vm1835, 0.0
    %4938 = vst.msk [vmem:[#allocation4 + $0xb] sm:$0x1] %vm1835, 0.0
    %4939 = vst.msk [vmem:[#allocation4 + $0xf] sm:$0x1] %vm1835, 0.0
    %4940 = vst.msk [vmem:[#allocation4 + $0x13] sm:$0x1] %vm1835, 0.0
    %4941 = vst.msk [vmem:[#allocation4 + $0x17] sm:$0x1] %vm1835, 0.0
    %4942 = vst.msk [vmem:[#allocation4 + $0x1b] sm:$0x1] %vm1835, 0.0
    %4943 = vst.msk [vmem:[#allocation4 + $0x1f] sm:$0x1] %vm1835, 0.0
    %v4952 = vsel %vm2004, %v4880, %v4873
    %v4953 = vsel %vm2004, %v4894, %v4887
    %v4954 = vsel %vm2004, %v4908, %v4901
    %v4955 = vsel %vm2004, %v4922, %v4915
    %s4960 = scalar_lea.vmem [#allocation4], 4
    %4961 = vst.msk [vmem:[%s4960 + $0x1] sm:$0x3] %vm929, %v4952
    %4962 = vst.msk [vmem:[%s4960 + $0x5] sm:$0x3] %vm929, %v4953
    %4963 = vst.msk [vmem:[%s4960 + $0x11] sm:$0x3] %vm929, %v4954
    %4964 = vst.msk [vmem:[%s4960 + $0x15] sm:$0x3] %vm929, %v4955
    %v4965 = vld [vmem:[#allocation4] sm:$0x3]
    %v4966 = vld [vmem:[#allocation4 + $0x4] sm:$0x3]
    %v4967 = vld [vmem:[#allocation4 + $0x10] sm:$0x3]
    %v4968 = vld [vmem:[#allocation4 + $0x14] sm:$0x3]
    %4973 = vst [vmem:[#allocation1] ss:$4 sm:$0xff] %v4965
    %s4974 = scalar_lea.vmem [#allocation1], 1
    %4975 = vst [vmem:[%s4974] ss:$4 sm:$0xff] %v4966
    %s4976 = scalar_lea.vmem [#allocation1], 2
    %4977 = vst [vmem:[%s4976] ss:$4 sm:$0xff] %v4967
    %s4978 = scalar_lea.vmem [#allocation1], 3
    %4979 = vst [vmem:[%s4978] ss:$4 sm:$0xff] %v4968
    %v4980 = vld.sshfl [vmem:[#allocation1] sm:$0xff pattern:$0x73625140]
    %v4982 = vpack.c.bf16 %v4980, %v4980
    %v4983 = vld [vmem:[%s7] sm:$0xf]
    %v4984 = vld [vmem:[%s7 + $0x4] sm:$0xf]
    %v4985 = vld [vmem:[%s7 + $0x8] sm:$0xf]
    %v4986 = vld [vmem:[%s7 + $0xc] sm:$0xf]
    %v4987 = vld [vmem:[%s7 + $0x10] sm:$0xf]
    %v4988 = vld [vmem:[%s7 + $0x14] sm:$0xf]
    %v4989 = vld [vmem:[%s7 + $0x18] sm:$0xf]
    %v4990 = vld [vmem:[%s7 + $0x1c] sm:$0xf]
    %v4991 = vld [vmem:[#allocation4 + $0x1] sm:$0x3]
    %v4992 = vld [vmem:[#allocation4 + $0x5] sm:$0x3]
    %v4993 = vld [vmem:[#allocation4 + $0x11] sm:$0x3]
    %v4994 = vld [vmem:[#allocation4 + $0x15] sm:$0x3]
    %4999 = vst [vmem:[#allocation1] ss:$4 sm:$0xff] %v4991
    %s5000 = scalar_lea.vmem [#allocation1], 1
    %5001 = vst [vmem:[%s5000] ss:$4 sm:$0xff] %v4992
    %s5002 = scalar_lea.vmem [#allocation1], 2
    %5003 = vst [vmem:[%s5002] ss:$4 sm:$0xff] %v4993
    %s5004 = scalar_lea.vmem [#allocation1], 3
    %5005 = vst [vmem:[%s5004] ss:$4 sm:$0xff] %v4994
    %v5006 = vld.sshfl [vmem:[#allocation1] sm:$0xff pattern:$0x73625140]
    %v5008 = vpack.c.bf16 %v5006, %v5006
    %s5009 = scalar_lea.vmem %s7, 32
    %v5010 = vld [vmem:[%s5009] sm:$0xf]
    %v5011 = vld [vmem:[%s5009 + $0x4] sm:$0xf]
    %v5012 = vld [vmem:[%s5009 + $0x8] sm:$0xf]
    %v5013 = vld [vmem:[%s5009 + $0xc] sm:$0xf]
    %v5014 = vld [vmem:[%s5009 + $0x10] sm:$0xf]
    %v5015 = vld [vmem:[%s5009 + $0x14] sm:$0xf]
    %v5016 = vld [vmem:[%s5009 + $0x18] sm:$0xf]
    %v5017 = vld [vmem:[%s5009 + $0x1c] sm:$0xf]
    %v5026 = vunpack.c.l.b16 %v5010
    %v5027 = vunpack.c.l.b16 %v5011
    %v5028 = vunpack.c.l.b16 %v5012
    %v5029 = vunpack.c.l.b16 %v5013
    %v5030 = vunpack.c.l.b16 %v5014
    %v5031 = vunpack.c.l.b16 %v5015
    %v5032 = vunpack.c.l.b16 %v5016
    %v5033 = vunpack.c.l.b16 %v5017
    %v5034 = vpack.c.b16 %v5027, %v5026
    %v5035 = vpack.c.b16 %v5029, %v5028
    %v5036 = vpack.c.b16 %v5031, %v5030
    %v5037 = vpack.c.b16 %v5033, %v5032
    %v5043 = vsel %vm608, %v5008, 0
    %5045 = vmatpush.bf16.msra.mxu0 0
    %5046 = vmatpush.bf16.msra.mxu0 0
    %5047 = vmatpush.bf16.msra.mxu0 0
    %5048 = vmatpush.bf16.msra.mxu0 0
    %5049 = vmatpush.bf16.msra.mxu0 %v5037
    %5050 = vmatpush.bf16.msra.mxu0 %v5036
    %5051 = vmatpush.bf16.msra.mxu0 %v5035
    %5052 = vmatpush.bf16.msra.mxu0 %v5034
    %5053 = vmatmul.bf16.gmra.mxu0 %v5043
    %v5054 = vpop.f32.mrf.mxu0
    %v5055 = vadd.f32 0.0, %v5054
    %v5056 = vpop.f32.mrf.mxu0
    %5057 = vdwg.mxu0
    %v5066 = vunpack.c.l.b16 %v4983
    %v5067 = vunpack.c.l.b16 %v4984
    %v5068 = vunpack.c.l.b16 %v4985
    %v5069 = vunpack.c.l.b16 %v4986
    %v5070 = vunpack.c.l.b16 %v4987
    %v5071 = vunpack.c.l.b16 %v4988
    %v5072 = vunpack.c.l.b16 %v4989
    %v5073 = vunpack.c.l.b16 %v4990
    %v5074 = vpack.c.b16 %v5067, %v5066
    %v5075 = vpack.c.b16 %v5069, %v5068
    %v5076 = vpack.c.b16 %v5071, %v5070
    %v5077 = vpack.c.b16 %v5073, %v5072
    %v5083 = vsel %vm608, %v4982, 0
    %5085 = vmatpush.bf16.msra.mxu0 0
    %5086 = vmatpush.bf16.msra.mxu0 0
    %5087 = vmatpush.bf16.msra.mxu0 0
    %5088 = vmatpush.bf16.msra.mxu0 0
    %5089 = vmatpush.bf16.msra.mxu0 %v5077
    %5090 = vmatpush.bf16.msra.mxu0 %v5076
    %5091 = vmatpush.bf16.msra.mxu0 %v5075
    %5092 = vmatpush.bf16.msra.mxu0 %v5074
    %5093 = vmatmul.bf16.gmra.mxu0 %v5083
    %v5094 = vpop.f32.mrf.mxu0
    %v5095 = vadd.f32 %v5055, %v5094
    %v5096 = vpop.f32.mrf.mxu0
    %5097 = vdwg.mxu0
    %v5098 = vld [vmem:[#allocation4 + $0x2] sm:$0x3]
    %v5099 = vld [vmem:[#allocation4 + $0x6] sm:$0x3]
    %v5100 = vld [vmem:[#allocation4 + $0x12] sm:$0x3]
    %v5101 = vld [vmem:[#allocation4 + $0x16] sm:$0x3]
    %5106 = vst [vmem:[#allocation1] ss:$4 sm:$0xff] %v5098
    %s5107 = scalar_lea.vmem [#allocation1], 1
    %5108 = vst [vmem:[%s5107] ss:$4 sm:$0xff] %v5099
    %s5109 = scalar_lea.vmem [#allocation1], 2
    %5110 = vst [vmem:[%s5109] ss:$4 sm:$0xff] %v5100
    %s5111 = scalar_lea.vmem [#allocation1], 3
    %5112 = vst [vmem:[%s5111] ss:$4 sm:$0xff] %v5101
    %v5113 = vld.sshfl [vmem:[#allocation1] sm:$0xff pattern:$0x73625140]
    %v5115 = vpack.c.bf16 %v5113, %v5113
    %s5116 = scalar_lea.vmem %s7, 64
    %v5117 = vld [vmem:[%s5116] sm:$0xf]
    %v5118 = vld [vmem:[%s5116 + $0x4] sm:$0xf]
    %v5119 = vld [vmem:[%s5116 + $0x8] sm:$0xf]
    %v5120 = vld [vmem:[%s5116 + $0xc] sm:$0xf]
    %v5121 = vld [vmem:[%s5116 + $0x10] sm:$0xf]
    %v5122 = vld [vmem:[%s5116 + $0x14] sm:$0xf]
    %v5123 = vld [vmem:[%s5116 + $0x18] sm:$0xf]
    %v5124 = vld [vmem:[%s5116 + $0x1c] sm:$0xf]
    %v5133 = vunpack.c.l.b16 %v5117
    %v5134 = vunpack.c.l.b16 %v5118
    %v5135 = vunpack.c.l.b16 %v5119
    %v5136 = vunpack.c.l.b16 %v5120
    %v5137 = vunpack.c.l.b16 %v5121
    %v5138 = vunpack.c.l.b16 %v5122
    %v5139 = vunpack.c.l.b16 %v5123
    %v5140 = vunpack.c.l.b16 %v5124
    %v5141 = vpack.c.b16 %v5134, %v5133
    %v5142 = vpack.c.b16 %v5136, %v5135
    %v5143 = vpack.c.b16 %v5138, %v5137
    %v5144 = vpack.c.b16 %v5140, %v5139
    %v5150 = vsel %vm608, %v5115, 0
    %5152 = vmatpush.bf16.msra.mxu0 0
    %5153 = vmatpush.bf16.msra.mxu0 0
    %5154 = vmatpush.bf16.msra.mxu0 0
    %5155 = vmatpush.bf16.msra.mxu0 0
    %5156 = vmatpush.bf16.msra.mxu0 %v5144
    %5157 = vmatpush.bf16.msra.mxu0 %v5143
    %5158 = vmatpush.bf16.msra.mxu0 %v5142
    %5159 = vmatpush.bf16.msra.mxu0 %v5141
    %5160 = vmatmul.bf16.gmra.mxu0 %v5150
    %v5161 = vpop.f32.mrf.mxu0
    %v5162 = vadd.f32 0.0, %v5161
    %v5163 = vpop.f32.mrf.mxu0
    %5164 = vdwg.mxu0
    %v5165 = vadd.f32 %v5095, %v5162
    %v5166 = vld [vmem:[%s4960] sm:$0x3]
    %v5167 = vld [vmem:[%s4960 + $0x4] sm:$0x3]
    %v5168 = vld [vmem:[%s4960 + $0x10] sm:$0x3]
    %v5169 = vld [vmem:[%s4960 + $0x14] sm:$0x3]
    %5174 = vst [vmem:[#allocation1] ss:$4 sm:$0xff] %v5166
    %s5175 = scalar_lea.vmem [#allocation1], 1
    %5176 = vst [vmem:[%s5175] ss:$4 sm:$0xff] %v5167
    %s5177 = scalar_lea.vmem [#allocation1], 2
    %5178 = vst [vmem:[%s5177] ss:$4 sm:$0xff] %v5168
    %s5179 = scalar_lea.vmem [#allocation1], 3
    %5180 = vst [vmem:[%s5179] ss:$4 sm:$0xff] %v5169
    %v5181 = vld.sshfl [vmem:[#allocation1] sm:$0xff pattern:$0x73625140]
    %v5183 = vpack.c.bf16 %v5181, %v5181
    %s5184 = scalar_lea.vmem %s7, 96
    %v5185 = vld [vmem:[%s5184] sm:$0xf]
    %v5186 = vld [vmem:[%s5184 + $0x4] sm:$0xf]
    %v5187 = vld [vmem:[%s5184 + $0x8] sm:$0xf]
    %v5188 = vld [vmem:[%s5184 + $0xc] sm:$0xf]
    %v5189 = vld [vmem:[%s5184 + $0x10] sm:$0xf]
    %v5190 = vld [vmem:[%s5184 + $0x14] sm:$0xf]
    %v5191 = vld [vmem:[%s5184 + $0x18] sm:$0xf]
    %v5192 = vld [vmem:[%s5184 + $0x1c] sm:$0xf]
    %v5201 = vunpack.c.l.b16 %v5185
    %v5202 = vunpack.c.l.b16 %v5186
    %v5203 = vunpack.c.l.b16 %v5187
    %v5204 = vunpack.c.l.b16 %v5188
    %v5205 = vunpack.c.l.b16 %v5189
    %v5206 = vunpack.c.l.b16 %v5190
    %v5207 = vunpack.c.l.b16 %v5191
    %v5208 = vunpack.c.l.b16 %v5192
    %v5209 = vpack.c.b16 %v5202, %v5201
    %v5210 = vpack.c.b16 %v5204, %v5203
    %v5211 = vpack.c.b16 %v5206, %v5205
    %v5212 = vpack.c.b16 %v5208, %v5207
    %v5218 = vsel %vm608, %v5183, 0
    %5220 = vmatpush.bf16.msra.mxu0 0
    %5221 = vmatpush.bf16.msra.mxu0 0
    %5222 = vmatpush.bf16.msra.mxu0 0
    %5223 = vmatpush.bf16.msra.mxu0 0
    %5224 = vmatpush.bf16.msra.mxu0 %v5212
    %5225 = vmatpush.bf16.msra.mxu0 %v5211
    %5226 = vmatpush.bf16.msra.mxu0 %v5210
    %5227 = vmatpush.bf16.msra.mxu0 %v5209
    %5228 = vmatmul.bf16.gmra.mxu0 %v5218
    %v5229 = vpop.f32.mrf.mxu0
    %v5230 = vadd.f32 0.0, %v5229
    %v5231 = vpop.f32.mrf.mxu0
    %5232 = vdwg.mxu0
    %v5233 = vadd.f32 %v5165, %v5230
    %v5234 = vld [vmem:[%s4960 + $0x1] sm:$0x3]
    %v5235 = vld [vmem:[%s4960 + $0x5] sm:$0x3]
    %v5236 = vld [vmem:[%s4960 + $0x11] sm:$0x3]
    %v5237 = vld [vmem:[%s4960 + $0x15] sm:$0x3]
    %5242 = vst [vmem:[#allocation1] ss:$4 sm:$0xff] %v5234
    %s5243 = scalar_lea.vmem [#allocation1], 1
    %5244 = vst [vmem:[%s5243] ss:$4 sm:$0xff] %v5235
    %s5245 = scalar_lea.vmem [#allocation1], 2
    %5246 = vst [vmem:[%s5245] ss:$4 sm:$0xff] %v5236
    %s5247 = scalar_lea.vmem [#allocation1], 3
    %5248 = vst [vmem:[%s5247] ss:$4 sm:$0xff] %v5237
    %v5249 = vld.sshfl [vmem:[#allocation1] sm:$0xff pattern:$0x73625140]
    %v5251 = vpack.c.bf16 %v5249, %v5249
    %s5252 = scalar_lea.vmem %s7, 128
    %v5253 = vld [vmem:[%s5252] sm:$0xf]
    %v5254 = vld [vmem:[%s5252 + $0x4] sm:$0xf]
    %v5255 = vld [vmem:[%s5252 + $0x8] sm:$0xf]
    %v5256 = vld [vmem:[%s5252 + $0xc] sm:$0xf]
    %v5257 = vld [vmem:[%s5252 + $0x10] sm:$0xf]
    %v5258 = vld [vmem:[%s5252 + $0x14] sm:$0xf]
    %v5259 = vld [vmem:[%s5252 + $0x18] sm:$0xf]
    %v5260 = vld [vmem:[%s5252 + $0x1c] sm:$0xf]
    %v5269 = vunpack.c.l.b16 %v5253
    %v5270 = vunpack.c.l.b16 %v5254
    %v5271 = vunpack.c.l.b16 %v5255
    %v5272 = vunpack.c.l.b16 %v5256
    %v5273 = vunpack.c.l.b16 %v5257
    %v5274 = vunpack.c.l.b16 %v5258
    %v5275 = vunpack.c.l.b16 %v5259
    %v5276 = vunpack.c.l.b16 %v5260
    %v5277 = vpack.c.b16 %v5270, %v5269
    %v5278 = vpack.c.b16 %v5272, %v5271
    %v5279 = vpack.c.b16 %v5274, %v5273
    %v5280 = vpack.c.b16 %v5276, %v5275
    %v5286 = vsel %vm608, %v5251, 0
    %5288 = vmatpush.bf16.msra.mxu0 0
    %5289 = vmatpush.bf16.msra.mxu0 0
    %5290 = vmatpush.bf16.msra.mxu0 0
    %5291 = vmatpush.bf16.msra.mxu0 0
    %5292 = vmatpush.bf16.msra.mxu0 %v5280
    %5293 = vmatpush.bf16.msra.mxu0 %v5279
    %5294 = vmatpush.bf16.msra.mxu0 %v5278
    %5295 = vmatpush.bf16.msra.mxu0 %v5277
    %5296 = vmatmul.bf16.gmra.mxu0 %v5286
    %v5297 = vpop.f32.mrf.mxu0
    %v5298 = vadd.f32 0.0, %v5297
    %v5299 = vpop.f32.mrf.mxu0
    %5300 = vdwg.mxu0
    %v5301 = vadd.f32 %v5233, %v5298
    %v5302 = vld [vmem:[%s4960 + $0x2] sm:$0x3]
    %v5303 = vld [vmem:[%s4960 + $0x6] sm:$0x3]
    %v5304 = vld [vmem:[%s4960 + $0x12] sm:$0x3]
    %v5305 = vld [vmem:[%s4960 + $0x16] sm:$0x3]
    %5310 = vst [vmem:[#allocation1] ss:$4 sm:$0xff] %v5302
    %s5311 = scalar_lea.vmem [#allocation1], 1
    %5312 = vst [vmem:[%s5311] ss:$4 sm:$0xff] %v5303
    %s5313 = scalar_lea.vmem [#allocation1], 2
    %5314 = vst [vmem:[%s5313] ss:$4 sm:$0xff] %v5304
    %s5315 = scalar_lea.vmem [#allocation1], 3
    %5316 = vst [vmem:[%s5315] ss:$4 sm:$0xff] %v5305
    %v5317 = vld.sshfl [vmem:[#allocation1] sm:$0xff pattern:$0x73625140]
    %v5319 = vpack.c.bf16 %v5317, %v5317
    %s5320 = scalar_lea.vmem %s7, 160
    %v5321 = vld [vmem:[%s5320] sm:$0xf]
    %v5322 = vld [vmem:[%s5320 + $0x4] sm:$0xf]
    %v5323 = vld [vmem:[%s5320 + $0x8] sm:$0xf]
    %v5324 = vld [vmem:[%s5320 + $0xc] sm:$0xf]
    %v5325 = vld [vmem:[%s5320 + $0x10] sm:$0xf]
    %v5326 = vld [vmem:[%s5320 + $0x14] sm:$0xf]
    %v5327 = vld [vmem:[%s5320 + $0x18] sm:$0xf]
    %v5328 = vld [vmem:[%s5320 + $0x1c] sm:$0xf]
    %v5337 = vunpack.c.l.b16 %v5321
    %v5338 = vunpack.c.l.b16 %v5322
    %v5339 = vunpack.c.l.b16 %v5323
    %v5340 = vunpack.c.l.b16 %v5324
    %v5341 = vunpack.c.l.b16 %v5325
    %v5342 = vunpack.c.l.b16 %v5326
    %v5343 = vunpack.c.l.b16 %v5327
    %v5344 = vunpack.c.l.b16 %v5328
    %v5345 = vpack.c.b16 %v5338, %v5337
    %v5346 = vpack.c.b16 %v5340, %v5339
    %v5347 = vpack.c.b16 %v5342, %v5341
    %v5348 = vpack.c.b16 %v5344, %v5343
    %v5354 = vsel %vm608, %v5319, 0
    %5356 = vmatpush.bf16.msra.mxu0 0
    %5357 = vmatpush.bf16.msra.mxu0 0
    %5358 = vmatpush.bf16.msra.mxu0 0
    %5359 = vmatpush.bf16.msra.mxu0 0
    %5360 = vmatpush.bf16.msra.mxu0 %v5348
    %5361 = vmatpush.bf16.msra.mxu0 %v5347
    %5362 = vmatpush.bf16.msra.mxu0 %v5346
    %5363 = vmatpush.bf16.msra.mxu0 %v5345
    %5364 = vmatmul.bf16.gmra.mxu0 %v5354
    %v5365 = vpop.f32.mrf.mxu0
    %v5366 = vadd.f32 0.0, %v5365
    %v5367 = vpop.f32.mrf.mxu0
    %5368 = vdwg.mxu0
    %v5369 = vadd.f32 %v5301, %v5366
    %s5370 = scalar_lea.vmem [#allocation4], 8
    %v5371 = vld [vmem:[%s5370] sm:$0x3]
    %v5372 = vld [vmem:[%s5370 + $0x4] sm:$0x3]
    %v5373 = vld [vmem:[%s5370 + $0x10] sm:$0x3]
    %v5374 = vld [vmem:[%s5370 + $0x14] sm:$0x3]
    %5379 = vst [vmem:[#allocation1] ss:$4 sm:$0xff] %v5371
    %s5380 = scalar_lea.vmem [#allocation1], 1
    %5381 = vst [vmem:[%s5380] ss:$4 sm:$0xff] %v5372
    %s5382 = scalar_lea.vmem [#allocation1], 2
    %5383 = vst [vmem:[%s5382] ss:$4 sm:$0xff] %v5373
    %s5384 = scalar_lea.vmem [#allocation1], 3
    %5385 = vst [vmem:[%s5384] ss:$4 sm:$0xff] %v5374
    %v5386 = vld.sshfl [vmem:[#allocation1] sm:$0xff pattern:$0x73625140]
    %v5388 = vpack.c.bf16 %v5386, %v5386
    %s5389 = scalar_lea.vmem %s7, 192
    %v5390 = vld [vmem:[%s5389] sm:$0xf]
    %v5391 = vld [vmem:[%s5389 + $0x4] sm:$0xf]
    %v5392 = vld [vmem:[%s5389 + $0x8] sm:$0xf]
    %v5393 = vld [vmem:[%s5389 + $0xc] sm:$0xf]
    %v5394 = vld [vmem:[%s5389 + $0x10] sm:$0xf]
    %v5395 = vld [vmem:[%s5389 + $0x14] sm:$0xf]
    %v5396 = vld [vmem:[%s5389 + $0x18] sm:$0xf]
    %v5397 = vld [vmem:[%s5389 + $0x1c] sm:$0xf]
    %v5406 = vunpack.c.l.b16 %v5390
    %v5407 = vunpack.c.l.b16 %v5391
    %v5408 = vunpack.c.l.b16 %v5392
    %v5409 = vunpack.c.l.b16 %v5393
    %v5410 = vunpack.c.l.b16 %v5394
    %v5411 = vunpack.c.l.b16 %v5395
    %v5412 = vunpack.c.l.b16 %v5396
    %v5413 = vunpack.c.l.b16 %v5397
    %v5414 = vpack.c.b16 %v5407, %v5406
    %v5415 = vpack.c.b16 %v5409, %v5408
    %v5416 = vpack.c.b16 %v5411, %v5410
    %v5417 = vpack.c.b16 %v5413, %v5412
    %v5423 = vsel %vm608, %v5388, 0
    %5425 = vmatpush.bf16.msra.mxu0 0
    %5426 = vmatpush.bf16.msra.mxu0 0
    %5427 = vmatpush.bf16.msra.mxu0 0
    %5428 = vmatpush.bf16.msra.mxu0 0
    %5429 = vmatpush.bf16.msra.mxu0 %v5417
    %5430 = vmatpush.bf16.msra.mxu0 %v5416
    %5431 = vmatpush.bf16.msra.mxu0 %v5415
    %5432 = vmatpush.bf16.msra.mxu0 %v5414
    %5433 = vmatmul.bf16.gmra.mxu0 %v5423
    %v5434 = vpop.f32.mrf.mxu0
    %v5435 = vadd.f32 0.0, %v5434
    %v5436 = vpop.f32.mrf.mxu0
    %5437 = vdwg.mxu0
    %v5438 = vadd.f32 %v5369, %v5435
    %v5439 = vld [vmem:[%s5370 + $0x1] sm:$0x3]
    %v5440 = vld [vmem:[%s5370 + $0x5] sm:$0x3]
    %v5441 = vld [vmem:[%s5370 + $0x11] sm:$0x3]
    %v5442 = vld [vmem:[%s5370 + $0x15] sm:$0x3]
    %5447 = vst [vmem:[#allocation1] ss:$4 sm:$0xff] %v5439
    %s5448 = scalar_lea.vmem [#allocation1], 1
    %5449 = vst [vmem:[%s5448] ss:$4 sm:$0xff] %v5440
    %s5450 = scalar_lea.vmem [#allocation1], 2
    %5451 = vst [vmem:[%s5450] ss:$4 sm:$0xff] %v5441
    %s5452 = scalar_lea.vmem [#allocation1], 3
    %5453 = vst [vmem:[%s5452] ss:$4 sm:$0xff] %v5442
    %v5454 = vld.sshfl [vmem:[#allocation1] sm:$0xff pattern:$0x73625140]
    %v5456 = vpack.c.bf16 %v5454, %v5454
    %s5457 = scalar_lea.vmem %s7, 224
    %v5458 = vld [vmem:[%s5457] sm:$0xf]
    %v5459 = vld [vmem:[%s5457 + $0x4] sm:$0xf]
    %v5460 = vld [vmem:[%s5457 + $0x8] sm:$0xf]
    %v5461 = vld [vmem:[%s5457 + $0xc] sm:$0xf]
    %v5462 = vld [vmem:[%s5457 + $0x10] sm:$0xf]
    %v5463 = vld [vmem:[%s5457 + $0x14] sm:$0xf]
    %v5464 = vld [vmem:[%s5457 + $0x18] sm:$0xf]
    %v5465 = vld [vmem:[%s5457 + $0x1c] sm:$0xf]
    %v5474 = vunpack.c.l.b16 %v5458
    %v5475 = vunpack.c.l.b16 %v5459
    %v5476 = vunpack.c.l.b16 %v5460
    %v5477 = vunpack.c.l.b16 %v5461
    %v5478 = vunpack.c.l.b16 %v5462
    %v5479 = vunpack.c.l.b16 %v5463
    %v5480 = vunpack.c.l.b16 %v5464
    %v5481 = vunpack.c.l.b16 %v5465
    %v5482 = vpack.c.b16 %v5475, %v5474
    %v5483 = vpack.c.b16 %v5477, %v5476
    %v5484 = vpack.c.b16 %v5479, %v5478
    %v5485 = vpack.c.b16 %v5481, %v5480
    %v5491 = vsel %vm608, %v5456, 0
    %5493 = vmatpush.bf16.msra.mxu0 0
    %5494 = vmatpush.bf16.msra.mxu0 0
    %5495 = vmatpush.bf16.msra.mxu0 0
    %5496 = vmatpush.bf16.msra.mxu0 0
    %5497 = vmatpush.bf16.msra.mxu0 %v5485
    %5498 = vmatpush.bf16.msra.mxu0 %v5484
    %5499 = vmatpush.bf16.msra.mxu0 %v5483
    %5500 = vmatpush.bf16.msra.mxu0 %v5482
    %5501 = vmatmul.bf16.gmra.mxu0 %v5491
    %v5502 = vpop.f32.mrf.mxu0
    %v5503 = vadd.f32 0.0, %v5502
    %v5504 = vpop.f32.mrf.mxu0
    %5505 = vdwg.mxu0
    %v5506 = vadd.f32 %v5438, %v5503
    %v5507 = vld [vmem:[%s5370 + $0x2] sm:$0x3]
    %v5508 = vld [vmem:[%s5370 + $0x6] sm:$0x3]
    %v5509 = vld [vmem:[%s5370 + $0x12] sm:$0x3]
    %v5510 = vld [vmem:[%s5370 + $0x16] sm:$0x3]
    %5515 = vst [vmem:[#allocation1] ss:$4 sm:$0xff] %v5507
    %s5516 = scalar_lea.vmem [#allocation1], 1
    %5517 = vst [vmem:[%s5516] ss:$4 sm:$0xff] %v5508
    %s5518 = scalar_lea.vmem [#allocation1], 2
    %5519 = vst [vmem:[%s5518] ss:$4 sm:$0xff] %v5509
    %s5520 = scalar_lea.vmem [#allocation1], 3
    %5521 = vst [vmem:[%s5520] ss:$4 sm:$0xff] %v5510
    %v5522 = vld.sshfl [vmem:[#allocation1] sm:$0xff pattern:$0x73625140]
    %v5524 = vpack.c.bf16 %v5522, %v5522
    %s5525 = scalar_lea.vmem %s7, 256
    %v5526 = vld [vmem:[%s5525] sm:$0xf]
    %v5527 = vld [vmem:[%s5525 + $0x4] sm:$0xf]
    %v5528 = vld [vmem:[%s5525 + $0x8] sm:$0xf]
    %v5529 = vld [vmem:[%s5525 + $0xc] sm:$0xf]
    %v5530 = vld [vmem:[%s5525 + $0x10] sm:$0xf]
    %v5531 = vld [vmem:[%s5525 + $0x14] sm:$0xf]
    %v5532 = vld [vmem:[%s5525 + $0x18] sm:$0xf]
    %v5533 = vld [vmem:[%s5525 + $0x1c] sm:$0xf]
    %v5542 = vunpack.c.l.b16 %v5526
    %v5543 = vunpack.c.l.b16 %v5527
    %v5544 = vunpack.c.l.b16 %v5528
    %v5545 = vunpack.c.l.b16 %v5529
    %v5546 = vunpack.c.l.b16 %v5530
    %v5547 = vunpack.c.l.b16 %v5531
    %v5548 = vunpack.c.l.b16 %v5532
    %v5549 = vunpack.c.l.b16 %v5533
    %v5550 = vpack.c.b16 %v5543, %v5542
    %v5551 = vpack.c.b16 %v5545, %v5544
    %v5552 = vpack.c.b16 %v5547, %v5546
    %v5553 = vpack.c.b16 %v5549, %v5548
    %v5559 = vsel %vm608, %v5524, 0
    %5561 = vmatpush.bf16.msra.mxu0 0
    %5562 = vmatpush.bf16.msra.mxu0 0
    %5563 = vmatpush.bf16.msra.mxu0 0
    %5564 = vmatpush.bf16.msra.mxu0 0
    %5565 = vmatpush.bf16.msra.mxu0 %v5553
    %5566 = vmatpush.bf16.msra.mxu0 %v5552
    %5567 = vmatpush.bf16.msra.mxu0 %v5551
    %5568 = vmatpush.bf16.msra.mxu0 %v5550
    %5569 = vmatmul.bf16.gmra.mxu0 %v5559
    %v5570 = vpop.f32.mrf.mxu0
    %v5571 = vadd.f32 0.0, %v5570
    %v5572 = vpop.f32.mrf.mxu0
    %5573 = vdwg.mxu0
    %v5574 = vadd.f32 %v5506, %v5571
    %v5575 = vld [vmem:[%s8] sm:$0x1]
    %v5577 = vperm.slane %v5575, 0
    %v5579 = vadd.f32 %v5574, %v5577
    %v5580 = vmax.f32 %v5579, 0.0
    %v5582 = vrot.slane %v5580, 2
    %v5583 = vrot.slane %v5580, 4
    %v5584 = vrot.slane %v5580, 6
    %v5588 = vsel %vm929, %v5580, -inf
    %v5589 = vsel %vm929, %v5582, -inf
    %v5590 = vmax.f32 %v5588, %v5589
    %v5591 = vsel %vm929, %v5583, -inf
    %v5592 = vsel %vm929, %v5584, -inf
    %v5593 = vmax.f32 %v5591, %v5592
    %v5594 = vsel %vm929, %v5590, -inf
    %v5595 = vrot.slane %v5594, 4
    %v5596 = vmax.f32 %v5594, %v5595
    %v5597 = vrot.slane %v5596, 2
    %v5598 = vmax.f32 %v5596, %v5597
    %v5599 = vrot.slane %v5598, 1
    %v5600 = vmax.f32 %v5598, %v5599
    %v5601 = vsel %vm929, %v5593, -inf
    %v5602 = vrot.slane %v5601, 4
    %v5603 = vmax.f32 %v5601, %v5602
    %v5604 = vrot.slane %v5603, 2
    %v5605 = vmax.f32 %v5603, %v5604
    %v5606 = vrot.slane %v5605, 1
    %v5607 = vmax.f32 %v5605, %v5606
    %5608 = vst.msk [vmem:[#allocation5] sm:$0x1] %vm1835, %v5600
    %5609 = vst.msk [vmem:[#allocation5 + $0x1] sm:$0x1] %vm1835, %v5607
    // Predicated region
    $region38: #{convnet_forward.1} parent=1 // pred_check
      _
    $region39: #{convnet_forward.1} parent=1 // pred_check_branch
      %5611 = sbr.rel (0) target = $region41
    $region40: #{convnet_forward.1} parent=1 // pred_region
      %5613 = vsyncadd [#allocation6], 0
      %s5614 = sshll.u32 [#allocation5], 4
      %s5615 = int_to_ptr.vmem [resolvable:$true] %s5614
      %s5616 = sshll.u32 %s9, 4
      %s5617 = int_to_ptr.hbm [resolvable:$true] %s5616
      %5622 = dma.vmem_to_hbm [thread:$0]  %s5615, 32, %s5617, [#allocation6], 16, 16, 1
    $region41: #{convnet_forward.1} parent=1 // pred_fallthru
      _
    // Predicated region
    $region42: #{convnet_forward.1} parent=1 // pred_check
      _
    $region43: #{convnet_forward.1} parent=1 // pred_check_branch
      %5624 = sbr.rel (0) target = $region45
    $region44: #{convnet_forward.1} parent=1 // pred_region
      %5626 = dma.done [#allocation6], 32
    $region45: #{convnet_forward.1} parent=1 // pred_fallthru
      _
    %5627 = vsyncpa [#allocation6], 1

</llo_original>
